<compile_context>
chip_gen: v6e
topology: v6e:2x2x1
jax: 0.10.0
libtpu: 0.0.40
codegen_flags: <defaults>
</compile_context>

<pallas_src>
import jax
import jax.numpy as jnp
import numpy as np
from jax.experimental import pallas as pl
from jax.experimental.pallas import tpu as pltpu


# ---------------------------------------------------------------------------
# Fused ASPP kernel
# ---------------------------------------------------------------------------

def make_aspp_kernel(H, W, Cin, Cout, rates, maxr, band_h):
    """Per-(image, row-band) fused ASPP kernel.

    Ref shapes (batch squeezed by BlockSpecs):
      x_ref  : (H, W, Cin)        bf16 unpadded image
      w_refs : w1x1 (Cin, Cout); w3_r{d} (9*Cin, Cout) tap-major   (BN-scale folded, bf16)
      wp_ref : (NB*Cout, Cout)    projection weight (BN-scale folded, bf16)
      sh_ref : (NB+1, Cout) f32   folded-BN shifts (rows: branches..., project)
      o_ref  : (band_h, W, Cout)  output block
      xpad   : (Hp, Wp, Cin) bf16 VMEM scratch (padded image, rebuilt per step)
    """
    NB = 1 + len(rates)
    Hp, Wp = H + 2 * maxr, W + 2 * maxr
    M = band_h * W

    def kernel(x_ref, *refs):
        w_refs = refs[:NB]
        wp_ref = refs[NB]
        sh_ref = refs[NB + 1]
        o_ref = refs[NB + 2]
        xpad = refs[NB + 3]

        r = pl.program_id(1)
        row0 = pl.multiple_of(r * band_h, band_h)

        # ---- build the zero halo in VMEM (no HBM pad round trip) ----------
        # Scratch is fully (re)written every grid step (halo strips zeroed +
        # interior overwritten), so correctness never depends on scratch
        # persistence or on which TensorCore ran the previous grid step.
        z_row = jnp.zeros((maxr, Wp, Cin), dtype=xpad.dtype)
        xpad[pl.ds(0, maxr), :, :] = z_row
        xpad[pl.ds(maxr + H, maxr), :, :] = z_row
        z_col = jnp.zeros((H, maxr, Cin), dtype=xpad.dtype)
        xpad[pl.ds(maxr, H), pl.ds(0, maxr), :] = z_col
        xpad[pl.ds(maxr, H), pl.ds(maxr + W, maxr), :] = z_col
        xpad[pl.ds(maxr, H), pl.ds(maxr, W), :] = x_ref[...]

        shift = sh_ref[...]                     # (NB+1, Cout) f32

        def tap(dy, dx):
            # (band_h, W, Cin) shifted window of this row band, flat (M, Cin).
            return xpad[pl.ds(row0 + (maxr + dy), band_h),
                        pl.ds(maxr + dx, W), :].reshape(M, Cin)

        # ---- branch 0: 1x1 conv -------------------------------------------
        acc = jnp.dot(tap(0, 0), w_refs[0][...],
                      preferred_element_type=jnp.float32)
        b = jnp.maximum(acc + shift[0:1, :], 0.0)      # folded BN shift + ReLU
        # concat + projection fused: accumulate branch @ wproj[row-slice]
        proj = jnp.dot(b.astype(wp_ref.dtype), wp_ref[pl.ds(0, Cout), :],
                       preferred_element_type=jnp.float32)

        # ---- dilated 3x3 branches: per-tap matmuls (no im2col concat) -----
        for bi, d in enumerate(rates, start=1):
            w3 = w_refs[bi]
            offs = [((ky - 1) * d, (kx - 1) * d)
                    for ky in range(3) for kx in range(3)]
            acc = None
            for t0 in range(0, 9, 2):
                if t0 + 1 < 9:
                    # Lane-block concat of two taps (vreg-granular, ~free):
                    # one K=256 MXU push instead of two half-empty K=128 ones.
                    lhs = jnp.concatenate(
                        [tap(*offs[t0]), tap(*offs[t0 + 1])], axis=-1)
                    kk = 2 * Cin
                else:
                    lhs, kk = tap(*offs[t0]), Cin
                part = jnp.dot(lhs, w3[pl.ds(t0 * Cin, kk), :],
                               preferred_element_type=jnp.float32)
                acc = part if acc is None else acc + part
            b = jnp.maximum(acc + shift[bi:bi + 1, :], 0.0)
            proj = proj + jnp.dot(b.astype(wp_ref.dtype),
                                  wp_ref[pl.ds(bi * Cout, Cout), :],
                                  preferred_element_type=jnp.float32)

        # ---- projection shift + ReLU.  Dropout(0.5) = identity in eval ----
        out = jnp.maximum(proj + shift[NB:NB + 1, :], 0.0)
        o_ref[...] = out.reshape(band_h, W, Cout).astype(o_ref.dtype)

    return kernel


def aspp_forward(x, params, *, rates, band_h=8, out_dtype=jnp.float32):
    """x: (B, H, W, Cin) f32 NHWC.  params: BN-folded (see fold_bn_params).
    Returns (B, H, W, Cout) in out_dtype."""
    B, H, W, Cin = x.shape
    Cout = params["shift"].shape[-1]
    maxr = max(rates)
    band_h = min(band_h, H)
    assert H % band_h == 0, "H must be divisible by the row-band height"
    n_bands = H // band_h
    Hp, Wp = H + 2 * maxr, W + 2 * maxr
    cdt = jnp.bfloat16

    xb = x.astype(cdt)               # unpadded: halo is built inside the kernel
    w_list = [params["w1x1"]] + [params[f"w3_r{d}"] for d in rates]
    wp, sh = params["wproj"], params["shift"]

    kernel = make_aspp_kernel(H, W, Cin, Cout, tuple(rates), maxr, band_h)

    in_specs = [pl.BlockSpec((None, H, W, Cin), lambda b, r: (b, 0, 0, 0))]
    for w in w_list + [wp, sh]:
        in_specs.append(pl.BlockSpec(w.shape, lambda b, r: (0, 0)))

    # TODO(synk): at production ASPP sizes (H,W >= 64, Cout = 256) band the
    # *input* block as well (manual halo DMA), set vmem_limit_bytes and drop
    # the block-invariant weight specs to pl.Buffered(1) to fit v7x's 64 MiB.
    return pl.pallas_call(
        kernel,
        out_shape=jax.ShapeDtypeStruct((B, H, W, Cout), out_dtype),
        grid=(B, n_bands),
        in_specs=in_specs,
        out_specs=pl.BlockSpec((None, band_h, W, Cout),
                               lambda b, r: (b, r, 0, 0)),
        scratch_shapes=[pltpu.VMEM((Hp, Wp, Cin), cdt)],
        compiler_params=pltpu.CompilerParams(
            dimension_semantics=("parallel", "parallel")),
    )(xb, *w_list, wp, sh)


# ---------------------------------------------------------------------------
# Parameters (synthetic, deterministic).  BatchNorm is folded (inference).
# ---------------------------------------------------------------------------

def init_aspp_params(key, cin, cout, rates):
    """Raw ASPP parameters: conv weights + inference BN as (scale, shift)."""
    NB = 1 + len(rates)
    keys = jax.random.split(key, 3 + len(rates))
    params = {}
    params["w1x1"] = (jax.random.normal(keys[0], (cin, cout), jnp.float32)
                      / np.sqrt(cin))
    for i, d in enumerate(rates):
        # tap-major 3x3 weight: rows [t*cin, (t+1)*cin) for tap t = ky*3 + kx
        params[f"w3_r{d}"] = (
            jax.random.normal(keys[1 + i], (9 * cin, cout), jnp.float32)
            / np.sqrt(9 * cin))
    params["wproj"] = (
        jax.random.normal(keys[1 + len(rates)], (NB * cout, cout), jnp.float32)
        / np.sqrt(NB * cout))

    kg, kb, km, kv = jax.random.split(keys[2 + len(rates)], 4)
    gamma = jax.random.uniform(kg, (NB + 1, cout), jnp.float32, 0.5, 1.5)
    beta = jax.random.normal(kb, (NB + 1, cout), jnp.float32) * 0.1
    mean = jax.random.normal(km, (NB + 1, cout), jnp.float32) * 0.1
    var = jax.random.uniform(kv, (NB + 1, cout), jnp.float32, 0.5, 1.5)
    eps = 1e-5
    scale = gamma / jnp.sqrt(var + eps)
    params["scale"] = scale
    params["shift"] = beta - mean * scale
    return params


def fold_bn_params(params, rates):
    """One-time static transform: fold the per-branch BN scale into the conv
    weight columns (relu((x@W)*s + t) == relu(x@(W*s) + t)); cast to bf16.
    Only the shifts remain as a per-branch bias for the kernel epilogue."""
    cdt = jnp.bfloat16
    sc = params["scale"]
    NB = 1 + len(rates)
    folded = {"shift": params["shift"]}
    folded["w1x1"] = (params["w1x1"] * sc[0][None, :]).astype(cdt)
    for i, d in enumerate(rates):
        folded[f"w3_r{d}"] = (params[f"w3_r{d}"] * sc[1 + i][None, :]).astype(cdt)
    folded["wproj"] = (params["wproj"] * sc[NB][None, :]).astype(cdt)
    return folded


# ---------------------------------------------------------------------------
# Pure-JAX reference on the same BN-folded bf16 weights / f32 accumulation
# (conv -> +shift -> ReLU per branch, concat, 1x1 project -> +shift -> ReLU;
#  Dropout(0.5) is identity in eval mode).
# ---------------------------------------------------------------------------

def ref_forward(x, params, rates):
    cdt = jnp.bfloat16
    B, H, W, Cin = x.shape
    Cout = params["shift"].shape[-1]
    NB = 1 + len(rates)
    sh = params["shift"]
    xb = x.astype(cdt)
    dn = ("NHWC", "HWIO", "NHWC")

    def shift_relu(y, i):
        return jnp.maximum(y + sh[i][None, None, None, :], 0.0)

    branches = []
    y0 = jax.lax.conv_general_dilated(
        xb, params["w1x1"].reshape(1, 1, Cin, Cout), (1, 1), "VALID",
        dimension_numbers=dn, preferred_element_type=jnp.float32)
    branches.append(shift_relu(y0, 0))
    for i, d in enumerate(rates, start=1):
        w = params[f"w3_r{d}"].reshape(3, 3, Cin, Cout)
        y = jax.lax.conv_general_dilated(
            xb, w, (1, 1), ((d, d), (d, d)), rhs_dilation=(d, d),
            dimension_numbers=dn, preferred_element_type=jnp.float32)
        branches.append(shift_relu(y, i))

    res = jnp.concatenate([b.astype(cdt) for b in branches], axis=-1)
    yp = jax.lax.conv_general_dilated(
        res, params["wproj"].reshape(1, 1, NB * Cout, Cout), (1, 1), "VALID",
        dimension_numbers=dn, preferred_element_type=jnp.float32)
    return shift_relu(yp, NB)


# ---------------------------------------------------------------------------

if __name__ == "__main__":
    key = jax.random.PRNGKey(0)
    B, H, W = 2, 16, 16
    in_channels, out_channels = 128, 128   # lane-aligned small channel counts
    atrous_rates = (2, 4)

    kx, kp = jax.random.split(key)
    x = jax.random.normal(kx, (B, H, W, in_channels), jnp.float32)
    raw = init_aspp_params(kp, in_channels, out_channels, atrous_rates)
    params = fold_bn_params(raw, atrous_rates)   # one-time host-side transform

    fwd = jax.jit(aspp_forward,
                  static_argnames=("rates", "band_h", "out_dtype"))
    out = fwd(x, params, rates=atrous_rates)
    out = jax.block_until_ready(out)

    ref = ref_forward(x, params, atrous_rates)
    np.testing.assert_allclose(np.asarray(out), np.asarray(ref),
                               rtol=1e-2, atol=1e-2)
    print("KERNEL_OK")
</pallas_src>

<mosaic_0001>
module attributes {stable_mosaic.version = 11 : i64} {
  func.func @kernel(%arg0: i32, %arg1: i32, %arg2: memref<1x16x16x128xbf16, #tpu.memory_space<vmem>>, %arg3: memref<128x128xbf16, #tpu.memory_space<vmem>>, %arg4: memref<1152x128xbf16, #tpu.memory_space<vmem>>, %arg5: memref<1152x128xbf16, #tpu.memory_space<vmem>>, %arg6: memref<384x128xbf16, #tpu.memory_space<vmem>>, %arg7: memref<4x128xf32, #tpu.memory_space<vmem>>, %arg8: memref<1x8x16x128xf32, #tpu.memory_space<vmem>>, %arg9: memref<24x24x128xbf16, #tpu.memory_space<vmem>>) attributes {dimension_semantics = [#tpu.dimension_semantics<parallel>, #tpu.dimension_semantics<parallel>], iteration_bounds = array<i64: 2, 2>, scalar_prefetch = 0 : i64, scratch_operands = 1 : i64, tpu.core_type = #tpu.core_type<tc>, window_params = [{transform_indices = @transform_0, window_bounds = array<i64: 1, 16, 16, 128>}, {pipeline_mode = #tpu.pipeline_mode<synchronous>, transform_indices = @transform_1, window_bounds = array<i64: 128, 128>}, {pipeline_mode = #tpu.pipeline_mode<synchronous>, transform_indices = @transform_2, window_bounds = array<i64: 1152, 128>}, {pipeline_mode = #tpu.pipeline_mode<synchronous>, transform_indices = @transform_3, window_bounds = array<i64: 1152, 128>}, {pipeline_mode = #tpu.pipeline_mode<synchronous>, transform_indices = @transform_4, window_bounds = array<i64: 384, 128>}, {pipeline_mode = #tpu.pipeline_mode<synchronous>, transform_indices = @transform_5, window_bounds = array<i64: 4, 128>}, {transform_indices = @transform_6, window_bounds = array<i64: 1, 8, 16, 128>}]} {
    %c8_i32 = arith.constant 8 : i32
    %0 = arith.muli %arg1, %c8_i32 : i32
    %1 = tpu.assume_multiple %0, 8 : i32
    %cst = arith.constant 0.000000e+00 : bf16
    %2 = vector.broadcast %cst : bf16 to vector<4x24x128xbf16>
    %c0 = arith.constant 0 : index
    %c0_0 = arith.constant 0 : index
    %c0_1 = arith.constant 0 : index
    %3 = vector.load %arg9[%c0, %c0_0, %c0_1] : memref<24x24x128xbf16, #tpu.memory_space<vmem>>, vector<4x24x128xbf16>
    tpu.vector_store %arg9[%c0, %c0_0, %c0_1], %2 {strides = array<i32>} : memref<24x24x128xbf16, #tpu.memory_space<vmem>>, vector<4x24x128xbf16>,
    %c20 = arith.constant 20 : index
    %c0_2 = arith.constant 0 : index
    %c0_3 = arith.constant 0 : index
    %4 = vector.load %arg9[%c20, %c0_2, %c0_3] : memref<24x24x128xbf16, #tpu.memory_space<vmem>>, vector<4x24x128xbf16>
    tpu.vector_store %arg9[%c20, %c0_2, %c0_3], %2 {strides = array<i32>} : memref<24x24x128xbf16, #tpu.memory_space<vmem>>, vector<4x24x128xbf16>,
    %cst_4 = arith.constant 0.000000e+00 : bf16
    %5 = vector.broadcast %cst_4 : bf16 to vector<16x4x128xbf16>
    %c4 = arith.constant 4 : index
    %c0_5 = arith.constant 0 : index
    %c0_6 = arith.constant 0 : index
    %6 = vector.load %arg9[%c4, %c0_5, %c0_6] : memref<24x24x128xbf16, #tpu.memory_space<vmem>>, vector<16x4x128xbf16>
    tpu.vector_store %arg9[%c4, %c0_5, %c0_6], %5 {strides = array<i32>} : memref<24x24x128xbf16, #tpu.memory_space<vmem>>, vector<16x4x128xbf16>,
    %c4_7 = arith.constant 4 : index
    %c20_8 = arith.constant 20 : index
    %c0_9 = arith.constant 0 : index
    %7 = vector.load %arg9[%c4_7, %c20_8, %c0_9] : memref<24x24x128xbf16, #tpu.memory_space<vmem>>, vector<16x4x128xbf16>
    tpu.vector_store %arg9[%c4_7, %c20_8, %c0_9], %5 {strides = array<i32>} : memref<24x24x128xbf16, #tpu.memory_space<vmem>>, vector<16x4x128xbf16>,
    %c0_10 = arith.constant 0 : index
    %c0_11 = arith.constant 0 : index
    %c0_12 = arith.constant 0 : index
    %c0_13 = arith.constant 0 : index
    %8 = vector.load %arg2[%c0_10, %c0_11, %c0_12, %c0_13] : memref<1x16x16x128xbf16, #tpu.memory_space<vmem>>, vector<1x16x16x128xbf16>
    %9 = vector.shape_cast %8 : vector<1x16x16x128xbf16> to vector<16x16x128xbf16>
    %c4_14 = arith.constant 4 : index
    %c4_15 = arith.constant 4 : index
    %c0_16 = arith.constant 0 : index
    %10 = vector.load %arg9[%c4_14, %c4_15, %c0_16] : memref<24x24x128xbf16, #tpu.memory_space<vmem>>, vector<16x16x128xbf16>
    tpu.vector_store %arg9[%c4_14, %c4_15, %c0_16], %9 {strides = array<i32>} : memref<24x24x128xbf16, #tpu.memory_space<vmem>>, vector<16x16x128xbf16>,
    %c0_17 = arith.constant 0 : index
    %c0_18 = arith.constant 0 : index
    %11 = vector.load %arg7[%c0_17, %c0_18] : memref<4x128xf32, #tpu.memory_space<vmem>>, vector<4x128xf32>
    %c4_i32 = arith.constant 4 : i32
    %12 = arith.addi %1, %c4_i32 : i32
    %13 = arith.index_cast %12 : i32 to index
    %c4_19 = arith.constant 4 : index
    %c0_20 = arith.constant 0 : index
    %14 = vector.load %arg9[%13, %c4_19, %c0_20] : memref<24x24x128xbf16, #tpu.memory_space<vmem>>, vector<8x16x128xbf16>
    %15 = vector.shape_cast %14 : vector<8x16x128xbf16> to vector<128x128xbf16>
    %c0_21 = arith.constant 0 : index
    %c0_22 = arith.constant 0 : index
    %16 = vector.load %arg3[%c0_21, %c0_22] : memref<128x128xbf16, #tpu.memory_space<vmem>>, vector<128x128xbf16>
    %cst_23 = arith.constant dense<0.000000e+00> : vector<128x128xf32>
    %17 = tpu.matmul %15, %16, %cst_23 {dimension_numbers = #tpu.dot_dimension_numbers<[1], [0], [0], [1], [0, 0, 1, 1], [], []>} : vector<128x128xbf16>, vector<128x128xbf16>, vector<128x128xf32> -> vector<128x128xf32>
    %18 = vector.extract_strided_slice %11 {offsets = [0, 0], sizes = [1, 128], strides = [1, 1]} : vector<4x128xf32> to vector<1x128xf32>
    %19 = vector.broadcast %18 : vector<1x128xf32> to vector<128x128xf32>
    %20 = arith.addf %17, %19 : vector<128x128xf32>
    %cst_24 = arith.constant 0.000000e+00 : f32
    %21 = vector.broadcast %cst_24 : f32 to vector<128x128xf32>
    %22 = arith.maximumf %20, %21 : vector<128x128xf32>
    %23 = arith.truncf %22 : vector<128x128xf32> to vector<128x128xbf16>
    %c0_25 = arith.constant 0 : index
    %c0_26 = arith.constant 0 : index
    %24 = vector.load %arg6[%c0_25, %c0_26] : memref<384x128xbf16, #tpu.memory_space<vmem>>, vector<128x128xbf16>
    %cst_27 = arith.constant dense<0.000000e+00> : vector<128x128xf32>
    %25 = tpu.matmul %23, %24, %cst_27 {dimension_numbers = #tpu.dot_dimension_numbers<[1], [0], [0], [1], [0, 0, 1, 1], [], []>} : vector<128x128xbf16>, vector<128x128xbf16>, vector<128x128xf32> -> vector<128x128xf32>
    %c2_i32 = arith.constant 2 : i32
    %26 = arith.addi %1, %c2_i32 : i32
    %27 = arith.index_cast %26 : i32 to index
    %c2 = arith.constant 2 : index
    %c0_28 = arith.constant 0 : index
    %28 = vector.load %arg9[%27, %c2, %c0_28] : memref<24x24x128xbf16, #tpu.memory_space<vmem>>, vector<8x16x128xbf16>
    %29 = vector.shape_cast %28 : vector<8x16x128xbf16> to vector<128x128xbf16>
    %c2_i32_29 = arith.constant 2 : i32
    %30 = arith.addi %1, %c2_i32_29 : i32
    %31 = arith.index_cast %30 : i32 to index
    %c4_30 = arith.constant 4 : index
    %c0_31 = arith.constant 0 : index
    %32 = vector.load %arg9[%31, %c4_30, %c0_31] : memref<24x24x128xbf16, #tpu.memory_space<vmem>>, vector<8x16x128xbf16>
    %33 = vector.shape_cast %32 : vector<8x16x128xbf16> to vector<128x128xbf16>
    %34 = tpu.concatenate %29, %33 in 1 : vector<128x128xbf16>, vector<128x128xbf16> -> vector<128x256xbf16>
    %c0_32 = arith.constant 0 : index
    %c0_33 = arith.constant 0 : index
    %35 = vector.load %arg4[%c0_32, %c0_33] : memref<1152x128xbf16, #tpu.memory_space<vmem>>, vector<256x128xbf16>
    %cst_34 = arith.constant dense<0.000000e+00> : vector<128x128xf32>
    %36 = tpu.matmul %34, %35, %cst_34 {dimension_numbers = #tpu.dot_dimension_numbers<[1], [0], [0], [1], [0, 0, 1, 1], [], []>} : vector<128x256xbf16>, vector<256x128xbf16>, vector<128x128xf32> -> vector<128x128xf32>
    %c2_i32_35 = arith.constant 2 : i32
    %37 = arith.addi %1, %c2_i32_35 : i32
    %38 = arith.index_cast %37 : i32 to index
    %c6 = arith.constant 6 : index
    %c0_36 = arith.constant 0 : index
    %39 = vector.load %arg9[%38, %c6, %c0_36] : memref<24x24x128xbf16, #tpu.memory_space<vmem>>, vector<8x16x128xbf16>
    %40 = vector.shape_cast %39 : vector<8x16x128xbf16> to vector<128x128xbf16>
    %c4_i32_37 = arith.constant 4 : i32
    %41 = arith.addi %1, %c4_i32_37 : i32
    %42 = arith.index_cast %41 : i32 to index
    %c2_38 = arith.constant 2 : index
    %c0_39 = arith.constant 0 : index
    %43 = vector.load %arg9[%42, %c2_38, %c0_39] : memref<24x24x128xbf16, #tpu.memory_space<vmem>>, vector<8x16x128xbf16>
    %44 = vector.shape_cast %43 : vector<8x16x128xbf16> to vector<128x128xbf16>
    %45 = tpu.concatenate %40, %44 in 1 : vector<128x128xbf16>, vector<128x128xbf16> -> vector<128x256xbf16>
    %c256 = arith.constant 256 : index
    %c0_40 = arith.constant 0 : index
    %46 = vector.load %arg4[%c256, %c0_40] : memref<1152x128xbf16, #tpu.memory_space<vmem>>, vector<256x128xbf16>
    %cst_41 = arith.constant dense<0.000000e+00> : vector<128x128xf32>
    %47 = tpu.matmul %45, %46, %cst_41 {dimension_numbers = #tpu.dot_dimension_numbers<[1], [0], [0], [1], [0, 0, 1, 1], [], []>} : vector<128x256xbf16>, vector<256x128xbf16>, vector<128x128xf32> -> vector<128x128xf32>
    %48 = arith.addf %36, %47 : vector<128x128xf32>
    %c4_i32_42 = arith.constant 4 : i32
    %49 = arith.addi %1, %c4_i32_42 : i32
    %50 = arith.index_cast %49 : i32 to index
    %c4_43 = arith.constant 4 : index
    %c0_44 = arith.constant 0 : index
    %51 = vector.load %arg9[%50, %c4_43, %c0_44] : memref<24x24x128xbf16, #tpu.memory_space<vmem>>, vector<8x16x128xbf16>
    %52 = vector.shape_cast %51 : vector<8x16x128xbf16> to vector<128x128xbf16>
    %c4_i32_45 = arith.constant 4 : i32
    %53 = arith.addi %1, %c4_i32_45 : i32
    %54 = arith.index_cast %53 : i32 to index
    %c6_46 = arith.constant 6 : index
    %c0_47 = arith.constant 0 : index
    %55 = vector.load %arg9[%54, %c6_46, %c0_47] : memref<24x24x128xbf16, #tpu.memory_space<vmem>>, vector<8x16x128xbf16>
    %56 = vector.shape_cast %55 : vector<8x16x128xbf16> to vector<128x128xbf16>
    %57 = tpu.concatenate %52, %56 in 1 : vector<128x128xbf16>, vector<128x128xbf16> -> vector<128x256xbf16>
    %c512 = arith.constant 512 : index
    %c0_48 = arith.constant 0 : index
    %58 = vector.load %arg4[%c512, %c0_48] : memref<1152x128xbf16, #tpu.memory_space<vmem>>, vector<256x128xbf16>
    %cst_49 = arith.constant dense<0.000000e+00> : vector<128x128xf32>
    %59 = tpu.matmul %57, %58, %cst_49 {dimension_numbers = #tpu.dot_dimension_numbers<[1], [0], [0], [1], [0, 0, 1, 1], [], []>} : vector<128x256xbf16>, vector<256x128xbf16>, vector<128x128xf32> -> vector<128x128xf32>
    %60 = arith.addf %48, %59 : vector<128x128xf32>
    %c6_i32 = arith.constant 6 : i32
    %61 = arith.addi %1, %c6_i32 : i32
    %62 = arith.index_cast %61 : i32 to index
    %c2_50 = arith.constant 2 : index
    %c0_51 = arith.constant 0 : index
    %63 = vector.load %arg9[%62, %c2_50, %c0_51] : memref<24x24x128xbf16, #tpu.memory_space<vmem>>, vector<8x16x128xbf16>
    %64 = vector.shape_cast %63 : vector<8x16x128xbf16> to vector<128x128xbf16>
    %c6_i32_52 = arith.constant 6 : i32
    %65 = arith.addi %1, %c6_i32_52 : i32
    %66 = arith.index_cast %65 : i32 to index
    %c4_53 = arith.constant 4 : index
    %c0_54 = arith.constant 0 : index
    %67 = vector.load %arg9[%66, %c4_53, %c0_54] : memref<24x24x128xbf16, #tpu.memory_space<vmem>>, vector<8x16x128xbf16>
    %68 = vector.shape_cast %67 : vector<8x16x128xbf16> to vector<128x128xbf16>
    %69 = tpu.concatenate %64, %68 in 1 : vector<128x128xbf16>, vector<128x128xbf16> -> vector<128x256xbf16>
    %c768 = arith.constant 768 : index
    %c0_55 = arith.constant 0 : index
    %70 = vector.load %arg4[%c768, %c0_55] : memref<1152x128xbf16, #tpu.memory_space<vmem>>, vector<256x128xbf16>
    %cst_56 = arith.constant dense<0.000000e+00> : vector<128x128xf32>
    %71 = tpu.matmul %69, %70, %cst_56 {dimension_numbers = #tpu.dot_dimension_numbers<[1], [0], [0], [1], [0, 0, 1, 1], [], []>} : vector<128x256xbf16>, vector<256x128xbf16>, vector<128x128xf32> -> vector<128x128xf32>
    %72 = arith.addf %60, %71 : vector<128x128xf32>
    %c6_i32_57 = arith.constant 6 : i32
    %73 = arith.addi %1, %c6_i32_57 : i32
    %74 = arith.index_cast %73 : i32 to index
    %c6_58 = arith.constant 6 : index
    %c0_59 = arith.constant 0 : index
    %75 = vector.load %arg9[%74, %c6_58, %c0_59] : memref<24x24x128xbf16, #tpu.memory_space<vmem>>, vector<8x16x128xbf16>
    %76 = vector.shape_cast %75 : vector<8x16x128xbf16> to vector<128x128xbf16>
    %c1024 = arith.constant 1024 : index
    %c0_60 = arith.constant 0 : index
    %77 = vector.load %arg4[%c1024, %c0_60] : memref<1152x128xbf16, #tpu.memory_space<vmem>>, vector<128x128xbf16>
    %cst_61 = arith.constant dense<0.000000e+00> : vector<128x128xf32>
    %78 = tpu.matmul %76, %77, %cst_61 {dimension_numbers = #tpu.dot_dimension_numbers<[1], [0], [0], [1], [0, 0, 1, 1], [], []>} : vector<128x128xbf16>, vector<128x128xbf16>, vector<128x128xf32> -> vector<128x128xf32>
    %79 = arith.addf %72, %78 : vector<128x128xf32>
    %80 = vector.extract_strided_slice %11 {offsets = [1, 0], sizes = [1, 128], strides = [1, 1]} : vector<4x128xf32> to vector<1x128xf32>
    %81 = vector.broadcast %80 : vector<1x128xf32> to vector<128x128xf32>
    %82 = arith.addf %79, %81 : vector<128x128xf32>
    %cst_62 = arith.constant 0.000000e+00 : f32
    %83 = vector.broadcast %cst_62 : f32 to vector<128x128xf32>
    %84 = arith.maximumf %82, %83 : vector<128x128xf32>
    %85 = arith.truncf %84 : vector<128x128xf32> to vector<128x128xbf16>
    %c128 = arith.constant 128 : index
    %c0_63 = arith.constant 0 : index
    %86 = vector.load %arg6[%c128, %c0_63] : memref<384x128xbf16, #tpu.memory_space<vmem>>, vector<128x128xbf16>
    %cst_64 = arith.constant dense<0.000000e+00> : vector<128x128xf32>
    %87 = tpu.matmul %85, %86, %cst_64 {dimension_numbers = #tpu.dot_dimension_numbers<[1], [0], [0], [1], [0, 0, 1, 1], [], []>} : vector<128x128xbf16>, vector<128x128xbf16>, vector<128x128xf32> -> vector<128x128xf32>
    %88 = arith.addf %25, %87 : vector<128x128xf32>
    %c0_i32 = arith.constant 0 : i32
    %89 = arith.addi %1, %c0_i32 : i32
    %90 = arith.index_cast %89 : i32 to index
    %c0_65 = arith.constant 0 : index
    %c0_66 = arith.constant 0 : index
    %91 = vector.load %arg9[%90, %c0_65, %c0_66] : memref<24x24x128xbf16, #tpu.memory_space<vmem>>, vector<8x16x128xbf16>
    %92 = vector.shape_cast %91 : vector<8x16x128xbf16> to vector<128x128xbf16>
    %c0_i32_67 = arith.constant 0 : i32
    %93 = arith.addi %1, %c0_i32_67 : i32
    %94 = arith.index_cast %93 : i32 to index
    %c4_68 = arith.constant 4 : index
    %c0_69 = arith.constant 0 : index
    %95 = vector.load %arg9[%94, %c4_68, %c0_69] : memref<24x24x128xbf16, #tpu.memory_space<vmem>>, vector<8x16x128xbf16>
    %96 = vector.shape_cast %95 : vector<8x16x128xbf16> to vector<128x128xbf16>
    %97 = tpu.concatenate %92, %96 in 1 : vector<128x128xbf16>, vector<128x128xbf16> -> vector<128x256xbf16>
    %c0_70 = arith.constant 0 : index
    %c0_71 = arith.constant 0 : index
    %98 = vector.load %arg5[%c0_70, %c0_71] : memref<1152x128xbf16, #tpu.memory_space<vmem>>, vector<256x128xbf16>
    %cst_72 = arith.constant dense<0.000000e+00> : vector<128x128xf32>
    %99 = tpu.matmul %97, %98, %cst_72 {dimension_numbers = #tpu.dot_dimension_numbers<[1], [0], [0], [1], [0, 0, 1, 1], [], []>} : vector<128x256xbf16>, vector<256x128xbf16>, vector<128x128xf32> -> vector<128x128xf32>
    %c0_i32_73 = arith.constant 0 : i32
    %100 = arith.addi %1, %c0_i32_73 : i32
    %101 = arith.index_cast %100 : i32 to index
    %c8 = arith.constant 8 : index
    %c0_74 = arith.constant 0 : index
    %102 = vector.load %arg9[%101, %c8, %c0_74] : memref<24x24x128xbf16, #tpu.memory_space<vmem>>, vector<8x16x128xbf16>
    %103 = vector.shape_cast %102 : vector<8x16x128xbf16> to vector<128x128xbf16>
    %c4_i32_75 = arith.constant 4 : i32
    %104 = arith.addi %1, %c4_i32_75 : i32
    %105 = arith.index_cast %104 : i32 to index
    %c0_76 = arith.constant 0 : index
    %c0_77 = arith.constant 0 : index
    %106 = vector.load %arg9[%105, %c0_76, %c0_77] : memref<24x24x128xbf16, #tpu.memory_space<vmem>>, vector<8x16x128xbf16>
    %107 = vector.shape_cast %106 : vector<8x16x128xbf16> to vector<128x128xbf16>
    %108 = tpu.concatenate %103, %107 in 1 : vector<128x128xbf16>, vector<128x128xbf16> -> vector<128x256xbf16>
    %c256_78 = arith.constant 256 : index
    %c0_79 = arith.constant 0 : index
    %109 = vector.load %arg5[%c256_78, %c0_79] : memref<1152x128xbf16, #tpu.memory_space<vmem>>, vector<256x128xbf16>
    %cst_80 = arith.constant dense<0.000000e+00> : vector<128x128xf32>
    %110 = tpu.matmul %108, %109, %cst_80 {dimension_numbers = #tpu.dot_dimension_numbers<[1], [0], [0], [1], [0, 0, 1, 1], [], []>} : vector<128x256xbf16>, vector<256x128xbf16>, vector<128x128xf32> -> vector<128x128xf32>
    %111 = arith.addf %99, %110 : vector<128x128xf32>
    %c4_i32_81 = arith.constant 4 : i32
    %112 = arith.addi %1, %c4_i32_81 : i32
    %113 = arith.index_cast %112 : i32 to index
    %c4_82 = arith.constant 4 : index
    %c0_83 = arith.constant 0 : index
    %114 = vector.load %arg9[%113, %c4_82, %c0_83] : memref<24x24x128xbf16, #tpu.memory_space<vmem>>, vector<8x16x128xbf16>
    %115 = vector.shape_cast %114 : vector<8x16x128xbf16> to vector<128x128xbf16>
    %c4_i32_84 = arith.constant 4 : i32
    %116 = arith.addi %1, %c4_i32_84 : i32
    %117 = arith.index_cast %116 : i32 to index
    %c8_85 = arith.constant 8 : index
    %c0_86 = arith.constant 0 : index
    %118 = vector.load %arg9[%117, %c8_85, %c0_86] : memref<24x24x128xbf16, #tpu.memory_space<vmem>>, vector<8x16x128xbf16>
    %119 = vector.shape_cast %118 : vector<8x16x128xbf16> to vector<128x128xbf16>
    %120 = tpu.concatenate %115, %119 in 1 : vector<128x128xbf16>, vector<128x128xbf16> -> vector<128x256xbf16>
    %c512_87 = arith.constant 512 : index
    %c0_88 = arith.constant 0 : index
    %121 = vector.load %arg5[%c512_87, %c0_88] : memref<1152x128xbf16, #tpu.memory_space<vmem>>, vector<256x128xbf16>
    %cst_89 = arith.constant dense<0.000000e+00> : vector<128x128xf32>
    %122 = tpu.matmul %120, %121, %cst_89 {dimension_numbers = #tpu.dot_dimension_numbers<[1], [0], [0], [1], [0, 0, 1, 1], [], []>} : vector<128x256xbf16>, vector<256x128xbf16>, vector<128x128xf32> -> vector<128x128xf32>
    %123 = arith.addf %111, %122 : vector<128x128xf32>
    %c8_i32_90 = arith.constant 8 : i32
    %124 = arith.addi %1, %c8_i32_90 : i32
    %125 = arith.index_cast %124 : i32 to index
    %c0_91 = arith.constant 0 : index
    %c0_92 = arith.constant 0 : index
    %126 = vector.load %arg9[%125, %c0_91, %c0_92] : memref<24x24x128xbf16, #tpu.memory_space<vmem>>, vector<8x16x128xbf16>
    %127 = vector.shape_cast %126 : vector<8x16x128xbf16> to vector<128x128xbf16>
    %c8_i32_93 = arith.constant 8 : i32
    %128 = arith.addi %1, %c8_i32_93 : i32
    %129 = arith.index_cast %128 : i32 to index
    %c4_94 = arith.constant 4 : index
    %c0_95 = arith.constant 0 : index
    %130 = vector.load %arg9[%129, %c4_94, %c0_95] : memref<24x24x128xbf16, #tpu.memory_space<vmem>>, vector<8x16x128xbf16>
    %131 = vector.shape_cast %130 : vector<8x16x128xbf16> to vector<128x128xbf16>
    %132 = tpu.concatenate %127, %131 in 1 : vector<128x128xbf16>, vector<128x128xbf16> -> vector<128x256xbf16>
    %c768_96 = arith.constant 768 : index
    %c0_97 = arith.constant 0 : index
    %133 = vector.load %arg5[%c768_96, %c0_97] : memref<1152x128xbf16, #tpu.memory_space<vmem>>, vector<256x128xbf16>
    %cst_98 = arith.constant dense<0.000000e+00> : vector<128x128xf32>
    %134 = tpu.matmul %132, %133, %cst_98 {dimension_numbers = #tpu.dot_dimension_numbers<[1], [0], [0], [1], [0, 0, 1, 1], [], []>} : vector<128x256xbf16>, vector<256x128xbf16>, vector<128x128xf32> -> vector<128x128xf32>
    %135 = arith.addf %123, %134 : vector<128x128xf32>
    %c8_i32_99 = arith.constant 8 : i32
    %136 = arith.addi %1, %c8_i32_99 : i32
    %137 = arith.index_cast %136 : i32 to index
    %c8_100 = arith.constant 8 : index
    %c0_101 = arith.constant 0 : index
    %138 = vector.load %arg9[%137, %c8_100, %c0_101] : memref<24x24x128xbf16, #tpu.memory_space<vmem>>, vector<8x16x128xbf16>
    %139 = vector.shape_cast %138 : vector<8x16x128xbf16> to vector<128x128xbf16>
    %c1024_102 = arith.constant 1024 : index
    %c0_103 = arith.constant 0 : index
    %140 = vector.load %arg5[%c1024_102, %c0_103] : memref<1152x128xbf16, #tpu.memory_space<vmem>>, vector<128x128xbf16>
    %cst_104 = arith.constant dense<0.000000e+00> : vector<128x128xf32>
    %141 = tpu.matmul %139, %140, %cst_104 {dimension_numbers = #tpu.dot_dimension_numbers<[1], [0], [0], [1], [0, 0, 1, 1], [], []>} : vector<128x128xbf16>, vector<128x128xbf16>, vector<128x128xf32> -> vector<128x128xf32>
    %142 = arith.addf %135, %141 : vector<128x128xf32>
    %143 = vector.extract_strided_slice %11 {offsets = [2, 0], sizes = [1, 128], strides = [1, 1]} : vector<4x128xf32> to vector<1x128xf32>
    %144 = vector.broadcast %143 : vector<1x128xf32> to vector<128x128xf32>
    %145 = arith.addf %142, %144 : vector<128x128xf32>
    %cst_105 = arith.constant 0.000000e+00 : f32
    %146 = vector.broadcast %cst_105 : f32 to vector<128x128xf32>
    %147 = arith.maximumf %145, %146 : vector<128x128xf32>
    %148 = arith.truncf %147 : vector<128x128xf32> to vector<128x128xbf16>
    %c256_106 = arith.constant 256 : index
    %c0_107 = arith.constant 0 : index
    %149 = vector.load %arg6[%c256_106, %c0_107] : memref<384x128xbf16, #tpu.memory_space<vmem>>, vector<128x128xbf16>
    %cst_108 = arith.constant dense<0.000000e+00> : vector<128x128xf32>
    %150 = tpu.matmul %148, %149, %cst_108 {dimension_numbers = #tpu.dot_dimension_numbers<[1], [0], [0], [1], [0, 0, 1, 1], [], []>} : vector<128x128xbf16>, vector<128x128xbf16>, vector<128x128xf32> -> vector<128x128xf32>
    %151 = arith.addf %88, %150 : vector<128x128xf32>
    %152 = vector.extract_strided_slice %11 {offsets = [3, 0], sizes = [1, 128], strides = [1, 1]} : vector<4x128xf32> to vector<1x128xf32>
    %153 = vector.broadcast %152 : vector<1x128xf32> to vector<128x128xf32>
    %154 = arith.addf %151, %153 : vector<128x128xf32>
    %cst_109 = arith.constant 0.000000e+00 : f32
    %155 = vector.broadcast %cst_109 : f32 to vector<128x128xf32>
    %156 = arith.maximumf %154, %155 : vector<128x128xf32>
    %157 = vector.shape_cast %156 : vector<128x128xf32> to vector<8x16x128xf32>
    %c0_110 = arith.constant 0 : index
    %c0_111 = arith.constant 0 : index
    %c0_112 = arith.constant 0 : index
    %c0_113 = arith.constant 0 : index
    %158 = vector.load %arg8[%c0_110, %c0_111, %c0_112, %c0_113] : memref<1x8x16x128xf32, #tpu.memory_space<vmem>>, vector<1x8x16x128xf32>
    %159 = vector.shape_cast %158 : vector<1x8x16x128xf32> to vector<8x16x128xf32>
    %160 = vector.shape_cast %157 : vector<8x16x128xf32> to vector<1x8x16x128xf32>
    tpu.vector_store %arg8[%c0_110, %c0_111, %c0_112, %c0_113], %160 {strides = array<i32>} : memref<1x8x16x128xf32, #tpu.memory_space<vmem>>, vector<1x8x16x128xf32>,
    return
  }
  func.func @transform_0(%arg0: i32, %arg1: i32) -> (i32, i32, i32, i32) {
    %c0_i32 = arith.constant 0 : i32
    %c0_i32_0 = arith.constant 0 : i32
    %c0_i32_1 = arith.constant 0 : i32
    %c0_i32_2 = arith.constant 0 : i32
    return %arg0, %c0_i32, %c0_i32_0, %c0_i32_1 : i32, i32, i32, i32
  }
  func.func @transform_1(%arg0: i32, %arg1: i32) -> (i32, i32) {
    %c0_i32 = arith.constant 0 : i32
    %c0_i32_0 = arith.constant 0 : i32
    %c0_i32_1 = arith.constant 0 : i32
    return %c0_i32, %c0_i32_0 : i32, i32
  }
  func.func @transform_2(%arg0: i32, %arg1: i32) -> (i32, i32) {
    %c0_i32 = arith.constant 0 : i32
    %c0_i32_0 = arith.constant 0 : i32
    %c0_i32_1 = arith.constant 0 : i32
    return %c0_i32, %c0_i32_0 : i32, i32
  }
  func.func @transform_3(%arg0: i32, %arg1: i32) -> (i32, i32) {
    %c0_i32 = arith.constant 0 : i32
    %c0_i32_0 = arith.constant 0 : i32
    %c0_i32_1 = arith.constant 0 : i32
    return %c0_i32, %c0_i32_0 : i32, i32
  }
  func.func @transform_4(%arg0: i32, %arg1: i32) -> (i32, i32) {
    %c0_i32 = arith.constant 0 : i32
    %c0_i32_0 = arith.constant 0 : i32
    %c0_i32_1 = arith.constant 0 : i32
    return %c0_i32, %c0_i32_0 : i32, i32
  }
  func.func @transform_5(%arg0: i32, %arg1: i32) -> (i32, i32) {
    %c0_i32 = arith.constant 0 : i32
    %c0_i32_0 = arith.constant 0 : i32
    %c0_i32_1 = arith.constant 0 : i32
    return %c0_i32, %c0_i32_0 : i32, i32
  }
  func.func @transform_6(%arg0: i32, %arg1: i32) -> (i32, i32, i32, i32) {
    %c0_i32 = arith.constant 0 : i32
    %c0_i32_0 = arith.constant 0 : i32
    %c0_i32_1 = arith.constant 0 : i32
    return %arg0, %arg1, %c0_i32, %c0_i32_0 : i32, i32, i32, i32
  }
}

</mosaic_0001>

<llo_original>
// kernel: aspp_forward.1
$region0: #{aspp_forward.1}
  #allocation0 [shape = 'u32[]', space=smem, size = 0x4, offset = 0x4, fixed_abs, tag = 'smem constant byte address 0x4 - core index']
  #allocation1 [shape = 'u32[144,128]{1,0:T(1,128)}', space=vmem, size = 0x12000, scoped, tag = 'internal scratch']
  #allocation2 [shape = 'bf16[24,24,128]{2,1,0:T(8,128)(2,1)}', space=vmem, size = 0x24000, scoped, tag = 'scratch operand']
  %s0 = inlined_call_operand.vmem [shape: bf16[2,16,16,128], index: 0, kind: input, shape index: {}]
  %s1 = inlined_call_operand.hbm [shape: bf16[128,128], index: 1, kind: input, shape index: {}]
  %s2 = inlined_call_operand.vmem [shape: bf16[1152,128], index: 2, kind: input, shape index: {}]
  %s3 = inlined_call_operand.hbm [shape: bf16[1152,128], index: 3, kind: input, shape index: {}]
  %s4 = inlined_call_operand.vmem [shape: bf16[384,128], index: 4, kind: input, shape index: {}]
  %s5 = inlined_call_operand.vmem [shape: f32[4,128], index: 5, kind: input, shape index: {}]
  %s6 = inlined_call_operand.hbm [shape: f32[2,16,16,128], index: 6, kind: output, shape index: {}]
  %s7 = sld [smem:[#allocation0]]
  $region65: #{aspp_forward.1} parent=0
    _
  %s9 = ssub.s32 1, %s7
  %s10 = scalar_select 0, %s9, %s7
  $region1: #{aspp_forward.1} parent=0
    #allocation3 [shape = 'u8[32768]{0}', space=vmem, size = 0x8000, scoped, tag = 'input window, operand 1, single buffered']
    #allocation4 [shape = 's32[2]{0}', space=sflag, size = 0x8, scoped, tag = 'scoped memory for aspp_forward.1']
    #allocation5 [shape = 's32[2]{0}', space=sflag, size = 0x8, scoped, tag = 'scoped memory for aspp_forward.1']
    #allocation6 [shape = 'u8[294912]{0}', space=vmem, size = 0x48000, scoped, tag = 'input window, operand 3, single buffered']
    #allocation7 [shape = 's32[1]{0}', space=sflag, size = 0x4, scoped, tag = 'scoped memory for aspp_forward.1']
    #allocation8 [shape = 'u8[131072]{0}', space=vmem, size = 0x20000, scoped, tag = 'output window, operand 0']
    %11 = vsyncpa [#allocation4], 0
    %12 = vsyncpa [#allocation7], 0
    %13 = vsyncpa [#allocation5], 0
    %s14 = scalar_lea.sflag [#allocation5], 1
    %15 = vsyncpa %s14, 0
    loop: start=0, step=1, limit=6
    $region2: #{aspp_forward.1} parent=1 // loop_pre_header
      _
    $region3: #{aspp_forward.1} parent=1 // loop_header
      %s17 = sphi 0, %s21
      %p18 = scmp.ge.s32.totalorder %s17, 6
      %s24 = sphi 0, %s36
      %s25 = sphi 0, %s32
      %s26 = sphi 0, %s24
      %s27 = sphi 0, %s25
      %s28 = sphi 0, %s26
      %s29 = sphi 0, %s27
      %s39 = sphi 0, %s41
      %s42 = sphi 0, %s39
      %s43 = sphi 0, %s42
      %s59 = sphi 0, %s43
      %s63 = sphi 0, %s63
      %s65 = sphi 0, %s63
      %s66 = sphi 0, %s65
      %s80 = sphi 0, %s66
      %s84 = sphi 0, %s84
      %s86 = sphi 0, %s84
      %s87 = sphi 0, %s86
      %s101 = sphi 0, %s87
      %s105 = sphi 0, %s105
      %s107 = sphi 0, %s105
      %s108 = sphi 0, %s107
      %s122 = sphi 0, %s108
      %s126 = sphi 0, %s126
      %s128 = sphi 0, %s126
      %s129 = sphi 0, %s128
      %s143 = sphi 0, %s129
      %s147 = sphi 0, %s147
      %s149 = sphi 0, %s147
      %s150 = sphi 0, %s149
      %s164 = sphi 0, %s150
      %s172 = sphi 0, %s174
      %s175 = sphi 0, %s172
      %s176 = sphi 0, %s175
      %s192 = sphi 0, %s176
    $region4: #{aspp_forward.1} parent=1 // loop_header_branch
      %20 = sbr.rel (%p18) target = $region8
    $region5: #{aspp_forward.1} parent=1 // loop_body
      %s22 = ssub.s32 %s17, 1
      %s23 = ssub.s32 %s17, 2
      %s30 = sadd.s32 1, %s25
      %p31 = scmp.ge.s32.totalorder %s30, 2
      %s32 = scalar_select %p31, 0, %s30
      %s33 = sadd.s32 1, %s24
      %s34 = scalar_select %p31, %s33, %s24
      %p35 = scmp.ge.s32.totalorder %s34, 2
      %s36 = scalar_select %p35, 0, %s34
      %s37 = ssub.s32 %s24, %s36
      %p38 = scmp.eq.s32.totalorder %s37, 0
      %s40 = sadd.s32 %s39, 1
      %s41 = scalar_select %p38, %s39, %s40
      %p44 = pneg %p38
      %p45 = scmp.eq.s32.totalorder %s17, 3
      %p46 = por %p44, %p45
      %p47 = scmp.ne.s32.totalorder %s39, %s42
      %p48 = scmp.eq.s32.totalorder %s17, 0
      %p49 = por %p47, %p48
      %p50 = scmp.ne.s32.totalorder %s39, %s42
      %p51 = scmp.eq.s32.totalorder %s22, 3
      %p52 = por %p50, %p51
      %p53 = scmp.ne.s32.totalorder %s42, %s43
      %p54 = scmp.eq.s32.totalorder %s22, 0
      %p55 = por %p53, %p54
      %p56 = scmp.ne.s32.totalorder %s42, %s43
      %p57 = scmp.eq.s32.totalorder %s23, 3
      %p58 = por %p56, %p57
      %p60 = scmp.ne.s32.totalorder %s43, %s59
      %p61 = scmp.eq.s32.totalorder %s23, 0
      %p62 = por %p60, %p61
      %s64 = sadd.s32 %s63, 1
      %p67 = scmp.eq.s32.totalorder %s17, 3
      %p68 = scmp.ne.s32.totalorder %s63, %s65
      %p69 = scmp.eq.s32.totalorder %s17, 0
      %p70 = por %p68, %p69
      %p71 = scmp.ne.s32.totalorder %s63, %s65
      %p72 = scmp.eq.s32.totalorder %s22, 3
      %p73 = por %p71, %p72
      %p74 = scmp.ne.s32.totalorder %s65, %s66
      %p75 = scmp.eq.s32.totalorder %s22, 0
      %p76 = por %p74, %p75
      %p77 = scmp.ne.s32.totalorder %s65, %s66
      %p78 = scmp.eq.s32.totalorder %s23, 3
      %p79 = por %p77, %p78
      %p81 = scmp.ne.s32.totalorder %s66, %s80
      %p82 = scmp.eq.s32.totalorder %s23, 0
      %p83 = por %p81, %p82
      %s85 = sadd.s32 %s84, 1
      %p88 = scmp.eq.s32.totalorder %s17, 3
      %p89 = scmp.ne.s32.totalorder %s84, %s86
      %p90 = scmp.eq.s32.totalorder %s17, 0
      %p91 = por %p89, %p90
      %p92 = scmp.ne.s32.totalorder %s84, %s86
      %p93 = scmp.eq.s32.totalorder %s22, 3
      %p94 = por %p92, %p93
      %p95 = scmp.ne.s32.totalorder %s86, %s87
      %p96 = scmp.eq.s32.totalorder %s22, 0
      %p97 = por %p95, %p96
      %p98 = scmp.ne.s32.totalorder %s86, %s87
      %p99 = scmp.eq.s32.totalorder %s23, 3
      %p100 = por %p98, %p99
      %p102 = scmp.ne.s32.totalorder %s87, %s101
      %p103 = scmp.eq.s32.totalorder %s23, 0
      %p104 = por %p102, %p103
      %s106 = sadd.s32 %s105, 1
      %p109 = scmp.eq.s32.totalorder %s17, 3
      %p110 = scmp.ne.s32.totalorder %s105, %s107
      %p111 = scmp.eq.s32.totalorder %s17, 0
      %p112 = por %p110, %p111
      %p113 = scmp.ne.s32.totalorder %s105, %s107
      %p114 = scmp.eq.s32.totalorder %s22, 3
      %p115 = por %p113, %p114
      %p116 = scmp.ne.s32.totalorder %s107, %s108
      %p117 = scmp.eq.s32.totalorder %s22, 0
      %p118 = por %p116, %p117
      %p119 = scmp.ne.s32.totalorder %s107, %s108
      %p120 = scmp.eq.s32.totalorder %s23, 3
      %p121 = por %p119, %p120
      %p123 = scmp.ne.s32.totalorder %s108, %s122
      %p124 = scmp.eq.s32.totalorder %s23, 0
      %p125 = por %p123, %p124
      %s127 = sadd.s32 %s126, 1
      %p130 = scmp.eq.s32.totalorder %s17, 3
      %p131 = scmp.ne.s32.totalorder %s126, %s128
      %p132 = scmp.eq.s32.totalorder %s17, 0
      %p133 = por %p131, %p132
      %p134 = scmp.ne.s32.totalorder %s126, %s128
      %p135 = scmp.eq.s32.totalorder %s22, 3
      %p136 = por %p134, %p135
      %p137 = scmp.ne.s32.totalorder %s128, %s129
      %p138 = scmp.eq.s32.totalorder %s22, 0
      %p139 = por %p137, %p138
      %p140 = scmp.ne.s32.totalorder %s128, %s129
      %p141 = scmp.eq.s32.totalorder %s23, 3
      %p142 = por %p140, %p141
      %p144 = scmp.ne.s32.totalorder %s129, %s143
      %p145 = scmp.eq.s32.totalorder %s23, 0
      %p146 = por %p144, %p145
      %s148 = sadd.s32 %s147, 1
      %p151 = scmp.eq.s32.totalorder %s17, 3
      %p152 = scmp.ne.s32.totalorder %s147, %s149
      %p153 = scmp.eq.s32.totalorder %s17, 0
      %p154 = por %p152, %p153
      %p155 = scmp.ne.s32.totalorder %s147, %s149
      %p156 = scmp.eq.s32.totalorder %s22, 3
      %p157 = por %p155, %p156
      %p158 = scmp.ne.s32.totalorder %s149, %s150
      %p159 = scmp.eq.s32.totalorder %s22, 0
      %p160 = por %p158, %p159
      %p161 = scmp.ne.s32.totalorder %s149, %s150
      %p162 = scmp.eq.s32.totalorder %s23, 3
      %p163 = por %p161, %p162
      %p165 = scmp.ne.s32.totalorder %s150, %s164
      %p166 = scmp.eq.s32.totalorder %s23, 0
      %p167 = por %p165, %p166
      %s168 = ssub.s32 %s24, %s36
      %s169 = ssub.s32 %s25, %s32
      %s170 = sor.u32 %s168, %s169
      %p171 = scmp.eq.s32.totalorder %s170, 0
      %s173 = sadd.s32 %s172, 1
      %s174 = scalar_select %p171, %s172, %s173
      %p177 = pneg %p171
      %p178 = scmp.eq.s32.totalorder %s17, 3
      %p179 = por %p177, %p178
      %p180 = scmp.ne.s32.totalorder %s172, %s175
      %p181 = scmp.eq.s32.totalorder %s17, 0
      %p182 = por %p180, %p181
      %p183 = scmp.ne.s32.totalorder %s172, %s175
      %p184 = scmp.eq.s32.totalorder %s22, 3
      %p185 = por %p183, %p184
      %p186 = scmp.ne.s32.totalorder %s175, %s176
      %p187 = scmp.eq.s32.totalorder %s22, 0
      %p188 = por %p186, %p187
      %p189 = scmp.ne.s32.totalorder %s175, %s176
      %p190 = scmp.eq.s32.totalorder %s23, 3
      %p191 = por %p189, %p190
      %p193 = scmp.ne.s32.totalorder %s176, %s192
      %p194 = scmp.eq.s32.totalorder %s23, 0
      %p195 = por %p193, %p194
      %p196 = scmp.le.s32.totalorder 1, %s17
      %p197 = scmp.lt.s32.totalorder %s17, 5
      %p198 = pnand %p196, %p197
      %p199 = pneg %p198
      // Predicated region
      $region9: #{aspp_forward.1} parent=5 // pred_check
        _
      $region10: #{aspp_forward.1} parent=5 // pred_check_branch
        %201 = sbr.rel (%p198) target = $region12
      $region11: #{aspp_forward.1} parent=5 // pred_region
        %s202 = ssub.s32 %s17, 1
        // Predicated region
        $region13: #{aspp_forward.1} parent=11 // pred_check
          %p203 = pneg %p76
        $region14: #{aspp_forward.1} parent=11 // pred_check_branch
          %205 = sbr.rel (%p203) target = $region16
        $region15: #{aspp_forward.1} parent=11 // pred_region
          %s207 = ssub.s32 1024, 1024
          %208 = vsyncadd [#allocation4], %s207
          %s209 = sshll.u32 [#allocation3], 4
          %s210 = int_to_ptr.vmem [resolvable:$true] %s209
          %215 = dma.hbm_to_vmem [thread:$0]  %s1, 1024, %s210, [#allocation4], 64, 64, 4
        $region16: #{aspp_forward.1} parent=11 // pred_fallthru
          _
        // Predicated region
        $region17: #{aspp_forward.1} parent=11 // pred_check
          %p216 = pneg %p97
        $region18: #{aspp_forward.1} parent=11 // pred_check_branch
          %218 = sbr.rel (%p216) target = $region20
        $region19: #{aspp_forward.1} parent=11 // pred_region
          _
        $region20: #{aspp_forward.1} parent=11 // pred_fallthru
          _
        // Predicated region
        $region21: #{aspp_forward.1} parent=11 // pred_check
          %p219 = pneg %p118
        $region22: #{aspp_forward.1} parent=11 // pred_check_branch
          %221 = sbr.rel (%p219) target = $region24
        $region23: #{aspp_forward.1} parent=11 // pred_region
          %s223 = ssub.s32 9216, 9216
          %224 = vsyncadd [#allocation7], %s223
          %s225 = sshll.u32 [#allocation6], 4
          %s226 = int_to_ptr.vmem [resolvable:$true] %s225
          %231 = dma.hbm_to_vmem [thread:$0]  %s3, 9216, %s226, [#allocation7], 64, 64, 4
        $region24: #{aspp_forward.1} parent=11 // pred_fallthru
          _
        // Predicated region
        $region25: #{aspp_forward.1} parent=11 // pred_check
          %p232 = pneg %p139
        $region26: #{aspp_forward.1} parent=11 // pred_check_branch
          %234 = sbr.rel (%p232) target = $region28
        $region27: #{aspp_forward.1} parent=11 // pred_region
          _
        $region28: #{aspp_forward.1} parent=11 // pred_fallthru
          _
        // Predicated region
        $region29: #{aspp_forward.1} parent=11 // pred_check
          %p235 = pneg %p160
        $region30: #{aspp_forward.1} parent=11 // pred_check_branch
          %237 = sbr.rel (%p235) target = $region32
        $region31: #{aspp_forward.1} parent=11 // pred_region
          _
        $region32: #{aspp_forward.1} parent=11 // pred_fallthru
          _
      $region12: #{aspp_forward.1} parent=5 // pred_fallthru
        _
      %p238 = scmp.lt.s32.totalorder %s17, 4
      // Predicated region
      $region33: #{aspp_forward.1} parent=5 // pred_check
        %p239 = pneg %p238
      $region34: #{aspp_forward.1} parent=5 // pred_check_branch
        %241 = sbr.rel (%p239) target = $region36
      $region35: #{aspp_forward.1} parent=5 // pred_region
        // Predicated region
        $region37: #{aspp_forward.1} parent=35 // pred_check
          %p242 = pneg %p49
        $region38: #{aspp_forward.1} parent=35 // pred_check_branch
          %244 = sbr.rel (%p242) target = $region40
        $region39: #{aspp_forward.1} parent=35 // pred_region
          %p245 = scmp.lt.s32.totalorder %s24, 1
          %s246 = scalar_select %p245, %s24, 1
          %s247 = smul.addr %s246, 32
          %s248 = smul.addr %s247, 4
          %s249 = scalar_lea.vmem %s0, %s248
        $region40: #{aspp_forward.1} parent=35 // pred_fallthru
          _
      $region36: #{aspp_forward.1} parent=5 // pred_fallthru
        _
      %p250 = scmp.le.s32.totalorder 1, %s17
      %p251 = scmp.lt.s32.totalorder %s17, 5
      %p252 = pnand %p250, %p251
      %p253 = pneg %p252
      // Predicated region
      $region41: #{aspp_forward.1} parent=5 // pred_check
        _
      $region42: #{aspp_forward.1} parent=5 // pred_check_branch
        %255 = sbr.rel (%p252) target = $region44
      $region43: #{aspp_forward.1} parent=5 // pred_region
        %s256 = ssub.s32 %s17, 1
        // Predicated region
        $region45: #{aspp_forward.1} parent=43 // pred_check
          %p257 = pneg %p76
        $region46: #{aspp_forward.1} parent=43 // pred_check_branch
          %259 = sbr.rel (%p257) target = $region48
        $region47: #{aspp_forward.1} parent=43 // pred_region
          %260 = dma.done [#allocation4], 1024
        $region48: #{aspp_forward.1} parent=43 // pred_fallthru
          _
        // Predicated region
        $region49: #{aspp_forward.1} parent=43 // pred_check
          %p261 = pneg %p118
        $region50: #{aspp_forward.1} parent=43 // pred_check_branch
          %263 = sbr.rel (%p261) target = $region52
        $region51: #{aspp_forward.1} parent=43 // pred_region
          %264 = dma.done [#allocation7], 9216
        $region52: #{aspp_forward.1} parent=43 // pred_fallthru
          _
        %p265 = scmp.lt.s32.totalorder %s26, 1
        %s266 = scalar_select %p265, %s26, 1
        %s267 = smul.addr %s266, 32
        %s268 = smul.addr %s267, 4
        %s269 = scalar_lea.vmem %s0, %s268
        %p270 = pneg %p55
        %p271 = pneg %p52
        %p272 = pneg %p76
        %p273 = pneg %p73
        %p274 = pneg %p97
        %p275 = pneg %p94
        %p276 = pneg %p118
        %p277 = pneg %p115
        %p278 = pneg %p139
        %p279 = pneg %p136
        %p280 = pneg %p160
        %p281 = pneg %p157
        %p282 = pneg %p188
        %p283 = pneg %p185
        %s284 = sand.u32 %s175, 1
        %s285 = scalar_lea.sflag [#allocation5], %s284
        %s286 = sand.u32 %s175, 1
        %s287 = smul.addr %s286, 128
        %s288 = scalar_lea.vmem [#allocation8], %s287
        %p289 = scmp.lt.s32.totalorder %s26, 1
        %s290 = scalar_select %p289, %s26, 1
        %s291 = smul.addr %s290, 32
        %s292 = smul.addr %s291, 4
        %s293 = scalar_lea.vmem %s0, %s292
        %s294 = smul.u32 8, %s27
        %s296 = smul.u32 %s27, 8
        %297 = vst [vmem:[#allocation2] sm:$0xf] 0
        %298 = vst [vmem:[#allocation2 + $0x4] sm:$0xf] 0
        %299 = vst [vmem:[#allocation2 + $0x8] sm:$0xf] 0
        %300 = vst [vmem:[#allocation2 + $0xc] sm:$0xf] 0
        %301 = vst [vmem:[#allocation2 + $0x10] sm:$0xf] 0
        %302 = vst [vmem:[#allocation2 + $0x14] sm:$0xf] 0
        %303 = vst [vmem:[#allocation2 + $0x18] sm:$0xf] 0
        %304 = vst [vmem:[#allocation2 + $0x1c] sm:$0xf] 0
        %305 = vst [vmem:[#allocation2 + $0x20] sm:$0xf] 0
        %306 = vst [vmem:[#allocation2 + $0x24] sm:$0xf] 0
        %307 = vst [vmem:[#allocation2 + $0x28] sm:$0xf] 0
        %308 = vst [vmem:[#allocation2 + $0x2c] sm:$0xf] 0
        %s309 = scalar_lea.vmem [#allocation2], 240
        %310 = vst [vmem:[%s309] sm:$0xf] 0
        %311 = vst [vmem:[%s309 + $0x4] sm:$0xf] 0
        %312 = vst [vmem:[%s309 + $0x8] sm:$0xf] 0
        %313 = vst [vmem:[%s309 + $0xc] sm:$0xf] 0
        %314 = vst [vmem:[%s309 + $0x10] sm:$0xf] 0
        %315 = vst [vmem:[%s309 + $0x14] sm:$0xf] 0
        %316 = vst [vmem:[%s309 + $0x18] sm:$0xf] 0
        %317 = vst [vmem:[%s309 + $0x1c] sm:$0xf] 0
        %318 = vst [vmem:[%s309 + $0x20] sm:$0xf] 0
        %319 = vst [vmem:[%s309 + $0x24] sm:$0xf] 0
        %320 = vst [vmem:[%s309 + $0x28] sm:$0xf] 0
        %321 = vst [vmem:[%s309 + $0x2c] sm:$0xf] 0
        %s322 = scalar_lea.vmem [#allocation2], 48
        %323 = vst [vmem:[%s322] sm:$0x3] 0
        %324 = vst [vmem:[%s322 + $0xc] sm:$0x3] 0
        %325 = vst [vmem:[%s322 + $0x18] sm:$0x3] 0
        %326 = vst [vmem:[%s322 + $0x24] sm:$0x3] 0
        %327 = vst [vmem:[%s322 + $0x30] sm:$0x3] 0
        %328 = vst [vmem:[%s322 + $0x3c] sm:$0x3] 0
        %329 = vst [vmem:[%s322 + $0x48] sm:$0x3] 0
        %330 = vst [vmem:[%s322 + $0x54] sm:$0x3] 0
        %331 = vst [vmem:[%s322 + $0x60] sm:$0x3] 0
        %332 = vst [vmem:[%s322 + $0x6c] sm:$0x3] 0
        %333 = vst [vmem:[%s322 + $0x78] sm:$0x3] 0
        %334 = vst [vmem:[%s322 + $0x84] sm:$0x3] 0
        %335 = vst [vmem:[%s322 + $0x90] sm:$0x3] 0
        %336 = vst [vmem:[%s322 + $0x9c] sm:$0x3] 0
        %337 = vst [vmem:[%s322 + $0xa8] sm:$0x3] 0
        %338 = vst [vmem:[%s322 + $0xb4] sm:$0x3] 0
        %339 = vst [vmem:[%s322 + $0x8] sm:$0xc] 0
        %340 = vst [vmem:[%s322 + $0x14] sm:$0xc] 0
        %341 = vst [vmem:[%s322 + $0x20] sm:$0xc] 0
        %342 = vst [vmem:[%s322 + $0x2c] sm:$0xc] 0
        %343 = vst [vmem:[%s322 + $0x38] sm:$0xc] 0
        %344 = vst [vmem:[%s322 + $0x44] sm:$0xc] 0
        %345 = vst [vmem:[%s322 + $0x50] sm:$0xc] 0
        %346 = vst [vmem:[%s322 + $0x5c] sm:$0xc] 0
        %347 = vst [vmem:[%s322 + $0x68] sm:$0xc] 0
        %348 = vst [vmem:[%s322 + $0x74] sm:$0xc] 0
        %349 = vst [vmem:[%s322 + $0x80] sm:$0xc] 0
        %350 = vst [vmem:[%s322 + $0x8c] sm:$0xc] 0
        %351 = vst [vmem:[%s322 + $0x98] sm:$0xc] 0
        %352 = vst [vmem:[%s322 + $0xa4] sm:$0xc] 0
        %353 = vst [vmem:[%s322 + $0xb0] sm:$0xc] 0
        %354 = vst [vmem:[%s322 + $0xbc] sm:$0xc] 0
        %v355 = vld [vmem:[%s293] sm:$0xf]
        %v356 = vld [vmem:[%s293 + $0x4] sm:$0xf]
        %v357 = vld [vmem:[%s293 + $0x8] sm:$0xf]
        %v358 = vld [vmem:[%s293 + $0xc] sm:$0xf]
        %v359 = vld [vmem:[%s293 + $0x10] sm:$0xf]
        %v360 = vld [vmem:[%s293 + $0x14] sm:$0xf]
        %v361 = vld [vmem:[%s293 + $0x18] sm:$0xf]
        %v362 = vld [vmem:[%s293 + $0x1c] sm:$0xf]
        %v363 = vld [vmem:[%s293 + $0x20] sm:$0xf]
        %v364 = vld [vmem:[%s293 + $0x24] sm:$0xf]
        %v365 = vld [vmem:[%s293 + $0x28] sm:$0xf]
        %v366 = vld [vmem:[%s293 + $0x2c] sm:$0xf]
        %v367 = vld [vmem:[%s293 + $0x30] sm:$0xf]
        %v368 = vld [vmem:[%s293 + $0x34] sm:$0xf]
        %v369 = vld [vmem:[%s293 + $0x38] sm:$0xf]
        %v370 = vld [vmem:[%s293 + $0x3c] sm:$0xf]
        %v371 = vld [vmem:[%s293 + $0x40] sm:$0xf]
        %v372 = vld [vmem:[%s293 + $0x44] sm:$0xf]
        %v373 = vld [vmem:[%s293 + $0x48] sm:$0xf]
        %v374 = vld [vmem:[%s293 + $0x4c] sm:$0xf]
        %v375 = vld [vmem:[%s293 + $0x50] sm:$0xf]
        %v376 = vld [vmem:[%s293 + $0x54] sm:$0xf]
        %v377 = vld [vmem:[%s293 + $0x58] sm:$0xf]
        %v378 = vld [vmem:[%s293 + $0x5c] sm:$0xf]
        %v379 = vld [vmem:[%s293 + $0x60] sm:$0xf]
        %v380 = vld [vmem:[%s293 + $0x64] sm:$0xf]
        %v381 = vld [vmem:[%s293 + $0x68] sm:$0xf]
        %v382 = vld [vmem:[%s293 + $0x6c] sm:$0xf]
        %v383 = vld [vmem:[%s293 + $0x70] sm:$0xf]
        %v384 = vld [vmem:[%s293 + $0x74] sm:$0xf]
        %v385 = vld [vmem:[%s293 + $0x78] sm:$0xf]
        %v386 = vld [vmem:[%s293 + $0x7c] sm:$0xf]
        %vm419 = vcmask 1041408
        %vm420 = vcmask 1045508
        %vm421 = vmor %vm419, %vm420
        %v422 = vrot.slane %v355, 6
        %v423 = vrot.slane %v422, 4
        %v424 = vrot.slane %v356, 6
        %v425 = vsel %vm421, %v423, %v424
        %v426 = vrot.slane %v424, 4
        %v427 = vrot.slane %v357, 6
        %v428 = vrot.slane %v427, 4
        %v429 = vrot.slane %v358, 6
        %v430 = vsel %vm421, %v428, %v429
        %v431 = vrot.slane %v429, 4
        %v432 = vrot.slane %v359, 6
        %v433 = vrot.slane %v432, 4
        %v434 = vrot.slane %v360, 6
        %v435 = vsel %vm421, %v433, %v434
        %v436 = vrot.slane %v434, 4
        %v437 = vrot.slane %v361, 6
        %v438 = vrot.slane %v437, 4
        %v439 = vrot.slane %v362, 6
        %v440 = vsel %vm421, %v438, %v439
        %v441 = vrot.slane %v439, 4
        %v442 = vrot.slane %v363, 6
        %v443 = vrot.slane %v442, 4
        %v444 = vrot.slane %v364, 6
        %v445 = vsel %vm421, %v443, %v444
        %v446 = vrot.slane %v444, 4
        %v447 = vrot.slane %v365, 6
        %v448 = vrot.slane %v447, 4
        %v449 = vrot.slane %v366, 6
        %v450 = vsel %vm421, %v448, %v449
        %v451 = vrot.slane %v449, 4
        %v452 = vrot.slane %v367, 6
        %v453 = vrot.slane %v452, 4
        %v454 = vrot.slane %v368, 6
        %v455 = vsel %vm421, %v453, %v454
        %v456 = vrot.slane %v454, 4
        %v457 = vrot.slane %v369, 6
        %v458 = vrot.slane %v457, 4
        %v459 = vrot.slane %v370, 6
        %v460 = vsel %vm421, %v458, %v459
        %v461 = vrot.slane %v459, 4
        %v462 = vrot.slane %v371, 6
        %v463 = vrot.slane %v462, 4
        %v464 = vrot.slane %v372, 6
        %v465 = vsel %vm421, %v463, %v464
        %v466 = vrot.slane %v464, 4
        %v467 = vrot.slane %v373, 6
        %v468 = vrot.slane %v467, 4
        %v469 = vrot.slane %v374, 6
        %v470 = vsel %vm421, %v468, %v469
        %v471 = vrot.slane %v469, 4
        %v472 = vrot.slane %v375, 6
        %v473 = vrot.slane %v472, 4
        %v474 = vrot.slane %v376, 6
        %v475 = vsel %vm421, %v473, %v474
        %v476 = vrot.slane %v474, 4
        %v477 = vrot.slane %v377, 6
        %v478 = vrot.slane %v477, 4
        %v479 = vrot.slane %v378, 6
        %v480 = vsel %vm421, %v478, %v479
        %v481 = vrot.slane %v479, 4
        %v482 = vrot.slane %v379, 6
        %v483 = vrot.slane %v482, 4
        %v484 = vrot.slane %v380, 6
        %v485 = vsel %vm421, %v483, %v484
        %v486 = vrot.slane %v484, 4
        %v487 = vrot.slane %v381, 6
        %v488 = vrot.slane %v487, 4
        %v489 = vrot.slane %v382, 6
        %v490 = vsel %vm421, %v488, %v489
        %v491 = vrot.slane %v489, 4
        %v492 = vrot.slane %v383, 6
        %v493 = vrot.slane %v492, 4
        %v494 = vrot.slane %v384, 6
        %v495 = vsel %vm421, %v493, %v494
        %v496 = vrot.slane %v494, 4
        %v497 = vrot.slane %v385, 6
        %v498 = vrot.slane %v497, 4
        %v499 = vrot.slane %v386, 6
        %v500 = vsel %vm421, %v498, %v499
        %v501 = vrot.slane %v499, 4
        %550 = vst [vmem:[%s322] sm:$0xc] %v422
        %551 = vst [vmem:[%s322 + $0x4] sm:$0xf] %v425
        %552 = vst [vmem:[%s322 + $0x8] sm:$0x3] %v426
        %553 = vst [vmem:[%s322 + $0xc] sm:$0xc] %v427
        %554 = vst [vmem:[%s322 + $0x10] sm:$0xf] %v430
        %555 = vst [vmem:[%s322 + $0x14] sm:$0x3] %v431
        %556 = vst [vmem:[%s322 + $0x18] sm:$0xc] %v432
        %557 = vst [vmem:[%s322 + $0x1c] sm:$0xf] %v435
        %558 = vst [vmem:[%s322 + $0x20] sm:$0x3] %v436
        %559 = vst [vmem:[%s322 + $0x24] sm:$0xc] %v437
        %560 = vst [vmem:[%s322 + $0x28] sm:$0xf] %v440
        %561 = vst [vmem:[%s322 + $0x2c] sm:$0x3] %v441
        %562 = vst [vmem:[%s322 + $0x30] sm:$0xc] %v442
        %563 = vst [vmem:[%s322 + $0x34] sm:$0xf] %v445
        %564 = vst [vmem:[%s322 + $0x38] sm:$0x3] %v446
        %565 = vst [vmem:[%s322 + $0x3c] sm:$0xc] %v447
        %566 = vst [vmem:[%s322 + $0x40] sm:$0xf] %v450
        %567 = vst [vmem:[%s322 + $0x44] sm:$0x3] %v451
        %568 = vst [vmem:[%s322 + $0x48] sm:$0xc] %v452
        %569 = vst [vmem:[%s322 + $0x4c] sm:$0xf] %v455
        %570 = vst [vmem:[%s322 + $0x50] sm:$0x3] %v456
        %571 = vst [vmem:[%s322 + $0x54] sm:$0xc] %v457
        %572 = vst [vmem:[%s322 + $0x58] sm:$0xf] %v460
        %573 = vst [vmem:[%s322 + $0x5c] sm:$0x3] %v461
        %574 = vst [vmem:[%s322 + $0x60] sm:$0xc] %v462
        %575 = vst [vmem:[%s322 + $0x64] sm:$0xf] %v465
        %576 = vst [vmem:[%s322 + $0x68] sm:$0x3] %v466
        %577 = vst [vmem:[%s322 + $0x6c] sm:$0xc] %v467
        %578 = vst [vmem:[%s322 + $0x70] sm:$0xf] %v470
        %579 = vst [vmem:[%s322 + $0x74] sm:$0x3] %v471
        %580 = vst [vmem:[%s322 + $0x78] sm:$0xc] %v472
        %581 = vst [vmem:[%s322 + $0x7c] sm:$0xf] %v475
        %582 = vst [vmem:[%s322 + $0x80] sm:$0x3] %v476
        %583 = vst [vmem:[%s322 + $0x84] sm:$0xc] %v477
        %584 = vst [vmem:[%s322 + $0x88] sm:$0xf] %v480
        %585 = vst [vmem:[%s322 + $0x8c] sm:$0x3] %v481
        %586 = vst [vmem:[%s322 + $0x90] sm:$0xc] %v482
        %587 = vst [vmem:[%s322 + $0x94] sm:$0xf] %v485
        %588 = vst [vmem:[%s322 + $0x98] sm:$0x3] %v486
        %589 = vst [vmem:[%s322 + $0x9c] sm:$0xc] %v487
        %590 = vst [vmem:[%s322 + $0xa0] sm:$0xf] %v490
        %591 = vst [vmem:[%s322 + $0xa4] sm:$0x3] %v491
        %592 = vst [vmem:[%s322 + $0xa8] sm:$0xc] %v492
        %593 = vst [vmem:[%s322 + $0xac] sm:$0xf] %v495
        %594 = vst [vmem:[%s322 + $0xb0] sm:$0x3] %v496
        %595 = vst [vmem:[%s322 + $0xb4] sm:$0xc] %v497
        %596 = vst [vmem:[%s322 + $0xb8] sm:$0xf] %v500
        %597 = vst [vmem:[%s322 + $0xbc] sm:$0x3] %v501
        %v598 = vld [vmem:[%s5] sm:$0xf]
        %s599 = sadd.s32 %s296, 4
        %s600 = smul.u32 %s599, 3
        %s601 = smul.addr %s600, 4
        %s602 = scalar_lea.vmem [#allocation2], %s601
        %v603 = vld [vmem:[%s602] sm:$0xc]
        %v604 = vld [vmem:[%s602 + $0x4] sm:$0xf]
        %v605 = vld [vmem:[%s602 + $0x8] sm:$0x3]
        %v606 = vld [vmem:[%s602 + $0xc] sm:$0xc]
        %v607 = vld [vmem:[%s602 + $0x10] sm:$0xf]
        %v608 = vld [vmem:[%s602 + $0x14] sm:$0x3]
        %v609 = vld [vmem:[%s602 + $0x18] sm:$0xc]
        %v610 = vld [vmem:[%s602 + $0x1c] sm:$0xf]
        %v611 = vld [vmem:[%s602 + $0x20] sm:$0x3]
        %v612 = vld [vmem:[%s602 + $0x24] sm:$0xc]
        %v613 = vld [vmem:[%s602 + $0x28] sm:$0xf]
        %v614 = vld [vmem:[%s602 + $0x2c] sm:$0x3]
        %v615 = vld [vmem:[%s602 + $0x30] sm:$0xc]
        %v616 = vld [vmem:[%s602 + $0x34] sm:$0xf]
        %v617 = vld [vmem:[%s602 + $0x38] sm:$0x3]
        %v618 = vld [vmem:[%s602 + $0x3c] sm:$0xc]
        %v619 = vld [vmem:[%s602 + $0x40] sm:$0xf]
        %v620 = vld [vmem:[%s602 + $0x44] sm:$0x3]
        %v621 = vld [vmem:[%s602 + $0x48] sm:$0xc]
        %v622 = vld [vmem:[%s602 + $0x4c] sm:$0xf]
        %v623 = vld [vmem:[%s602 + $0x50] sm:$0x3]
        %v624 = vld [vmem:[%s602 + $0x54] sm:$0xc]
        %v625 = vld [vmem:[%s602 + $0x58] sm:$0xf]
        %v626 = vld [vmem:[%s602 + $0x5c] sm:$0x3]
        %v651 = vrot.slane %v603, 6
        %v652 = vrot.slane %v651, 4
        %v653 = vrot.slane %v604, 6
        %v654 = vsel %vm421, %v652, %v653
        %v655 = vrot.slane %v653, 4
        %v656 = vrot.slane %v605, 6
        %v657 = vsel %vm421, %v655, %v656
        %v658 = vrot.slane %v606, 6
        %v659 = vrot.slane %v658, 4
        %v660 = vrot.slane %v607, 6
        %v661 = vsel %vm421, %v659, %v660
        %v662 = vrot.slane %v660, 4
        %v663 = vrot.slane %v608, 6
        %v664 = vsel %vm421, %v662, %v663
        %v665 = vrot.slane %v609, 6
        %v666 = vrot.slane %v665, 4
        %v667 = vrot.slane %v610, 6
        %v668 = vsel %vm421, %v666, %v667
        %v669 = vrot.slane %v667, 4
        %v670 = vrot.slane %v611, 6
        %v671 = vsel %vm421, %v669, %v670
        %v672 = vrot.slane %v612, 6
        %v673 = vrot.slane %v672, 4
        %v674 = vrot.slane %v613, 6
        %v675 = vsel %vm421, %v673, %v674
        %v676 = vrot.slane %v674, 4
        %v677 = vrot.slane %v614, 6
        %v678 = vsel %vm421, %v676, %v677
        %v679 = vrot.slane %v615, 6
        %v680 = vrot.slane %v679, 4
        %v681 = vrot.slane %v616, 6
        %v682 = vsel %vm421, %v680, %v681
        %v683 = vrot.slane %v681, 4
        %v684 = vrot.slane %v617, 6
        %v685 = vsel %vm421, %v683, %v684
        %v686 = vrot.slane %v618, 6
        %v687 = vrot.slane %v686, 4
        %v688 = vrot.slane %v619, 6
        %v689 = vsel %vm421, %v687, %v688
        %v690 = vrot.slane %v688, 4
        %v691 = vrot.slane %v620, 6
        %v692 = vsel %vm421, %v690, %v691
        %v693 = vrot.slane %v621, 6
        %v694 = vrot.slane %v693, 4
        %v695 = vrot.slane %v622, 6
        %v696 = vsel %vm421, %v694, %v695
        %v697 = vrot.slane %v695, 4
        %v698 = vrot.slane %v623, 6
        %v699 = vsel %vm421, %v697, %v698
        %v700 = vrot.slane %v624, 6
        %v701 = vrot.slane %v700, 4
        %v702 = vrot.slane %v625, 6
        %v703 = vsel %vm421, %v701, %v702
        %v704 = vrot.slane %v702, 4
        %v705 = vrot.slane %v626, 6
        %v706 = vsel %vm421, %v704, %v705
        %v707 = vld [vmem:[#allocation3] sm:$0xf]
        %v708 = vld [vmem:[#allocation3 + $0x4] sm:$0xf]
        %v709 = vld [vmem:[#allocation3 + $0x8] sm:$0xf]
        %v710 = vld [vmem:[#allocation3 + $0xc] sm:$0xf]
        %v711 = vld [vmem:[#allocation3 + $0x10] sm:$0xf]
        %v712 = vld [vmem:[#allocation3 + $0x14] sm:$0xf]
        %v713 = vld [vmem:[#allocation3 + $0x18] sm:$0xf]
        %v714 = vld [vmem:[#allocation3 + $0x1c] sm:$0xf]
        %v715 = vld [vmem:[#allocation3 + $0x20] sm:$0xf]
        %v716 = vld [vmem:[#allocation3 + $0x24] sm:$0xf]
        %v717 = vld [vmem:[#allocation3 + $0x28] sm:$0xf]
        %v718 = vld [vmem:[#allocation3 + $0x2c] sm:$0xf]
        %v719 = vld [vmem:[#allocation3 + $0x30] sm:$0xf]
        %v720 = vld [vmem:[#allocation3 + $0x34] sm:$0xf]
        %v721 = vld [vmem:[#allocation3 + $0x38] sm:$0xf]
        %v722 = vld [vmem:[#allocation3 + $0x3c] sm:$0xf]
        %v723 = vlaneseq
        %v724 = vshrl.u32 %v723, 7
        %v725 = vsub.s32 0, %v724
        %v726 = vrot.slane %v598, %v725
        %v727 = vunpack.c.l.b16 %v654
        %v728 = vunpack.c.l.b16 %v657
        %v729 = vunpack.c.l.b16 %v661
        %v730 = vunpack.c.l.b16 %v664
        %v731 = vunpack.c.l.b16 %v668
        %v732 = vunpack.c.l.b16 %v671
        %v733 = vunpack.c.l.b16 %v675
        %v734 = vunpack.c.l.b16 %v678
        %v735 = vunpack.c.l.b16 %v682
        %v736 = vunpack.c.l.b16 %v685
        %v737 = vunpack.c.l.b16 %v689
        %v738 = vunpack.c.l.b16 %v692
        %v739 = vunpack.c.l.b16 %v696
        %v740 = vunpack.c.l.b16 %v699
        %v741 = vunpack.c.l.b16 %v703
        %v742 = vunpack.c.l.b16 %v706
        %v743 = vpack.c.b16 %v728, %v727
        %v744 = vpack.c.b16 %v730, %v729
        %v745 = vpack.c.b16 %v732, %v731
        %v746 = vpack.c.b16 %v734, %v733
        %v747 = vpack.c.b16 %v736, %v735
        %v748 = vpack.c.b16 %v738, %v737
        %v749 = vpack.c.b16 %v740, %v739
        %v750 = vpack.c.b16 %v742, %v741
        %v775 = vunpack.c.l.b16 %v707
        %v776 = vunpack.c.l.b16 %v708
        %v777 = vunpack.c.l.b16 %v709
        %v778 = vunpack.c.l.b16 %v710
        %v779 = vunpack.c.l.b16 %v711
        %v780 = vunpack.c.l.b16 %v712
        %v781 = vunpack.c.l.b16 %v713
        %v782 = vunpack.c.l.b16 %v714
        %v783 = vunpack.c.l.b16 %v715
        %v784 = vunpack.c.l.b16 %v716
        %v785 = vunpack.c.l.b16 %v717
        %v786 = vunpack.c.l.b16 %v718
        %v787 = vunpack.c.l.b16 %v719
        %v788 = vunpack.c.l.b16 %v720
        %v789 = vunpack.c.l.b16 %v721
        %v790 = vunpack.c.l.b16 %v722
        %v791 = vpack.c.b16 %v776, %v775
        %v792 = vpack.c.b16 %v778, %v777
        %v793 = vpack.c.b16 %v780, %v779
        %v794 = vpack.c.b16 %v782, %v781
        %v795 = vpack.c.b16 %v784, %v783
        %v796 = vpack.c.b16 %v786, %v785
        %v797 = vpack.c.b16 %v788, %v787
        %v798 = vpack.c.b16 %v790, %v789
        %807 = vmatprep.subr.bf16.mxu0 0
        %808 = vmatpush1.bf16.msra.mxu0 %v798
        %809 = vmatprep.subr.bf16.mxu0 0
        %810 = vmatpush1.bf16.msra.mxu0 %v797
        %811 = vmatprep.subr.bf16.mxu0 0
        %812 = vmatpush1.bf16.msra.mxu0 %v796
        %813 = vmatprep.subr.bf16.mxu0 0
        %814 = vmatpush1.bf16.msra.mxu0 %v795
        %815 = vmatprep.subr.bf16.mxu0 0
        %816 = vmatpush1.bf16.msra.mxu0 %v794
        %817 = vmatprep.subr.bf16.mxu0 0
        %818 = vmatpush1.bf16.msra.mxu0 %v793
        %819 = vmatprep.subr.bf16.mxu0 0
        %820 = vmatpush1.bf16.msra.mxu0 %v792
        %821 = vmatprep.subr.bf16.mxu0 0
        %822 = vmatpush1.bf16.msra.mxu0 %v791
        %823 = vmatprep.subr.bf16.mxu0 0
        %824 = vmatpush2.bf16.msra.mxu0 0
        %825 = vmatprep.subr.bf16.mxu0 0
        %826 = vmatpush2.bf16.msra.mxu0 0
        %827 = vmatprep.subr.bf16.mxu0 0
        %828 = vmatpush2.bf16.msra.mxu0 0
        %829 = vmatprep.subr.bf16.mxu0 0
        %830 = vmatpush2.bf16.msra.mxu0 0
        %831 = vmatprep.subr.bf16.mxu0 0
        %832 = vmatpush2.bf16.msra.mxu0 0
        %833 = vmatprep.subr.bf16.mxu0 0
        %834 = vmatpush2.bf16.msra.mxu0 0
        %835 = vmatprep.subr.bf16.mxu0 0
        %836 = vmatpush2.bf16.msra.mxu0 0
        %837 = vmatprep.subr.bf16.mxu0 0
        %838 = vmatpush2.bf16.msra.mxu0 0
        %839 = vmatprep.mubr.bf16.mxu0 0
        %840 = vmatmul.mubr.bf16.gmra.mxu0 %v743
        %v841 = vpop.f32.mrf.mxu0
        %v842 = vadd.f32 %v726, %v841
        %v843 = vpop.f32.mrf.mxu0
        %v844 = vpop.f32.mrf.mxu0
        %v845 = vadd.f32 %v726, %v844
        %v846 = vpop.f32.mrf.mxu0
        %847 = vmatprep.mubr.bf16.mxu0 0
        %848 = vmatmul.mubr.bf16.gmra.mxu0 %v744
        %v849 = vpop.f32.mrf.mxu0
        %v850 = vadd.f32 %v726, %v849
        %v851 = vpop.f32.mrf.mxu0
        %v852 = vpop.f32.mrf.mxu0
        %v853 = vadd.f32 %v726, %v852
        %v854 = vpop.f32.mrf.mxu0
        %855 = vmatprep.mubr.bf16.mxu0 0
        %856 = vmatmul.mubr.bf16.gmra.mxu0 %v745
        %v857 = vpop.f32.mrf.mxu0
        %v858 = vadd.f32 %v726, %v857
        %v859 = vpop.f32.mrf.mxu0
        %v860 = vpop.f32.mrf.mxu0
        %v861 = vadd.f32 %v726, %v860
        %v862 = vpop.f32.mrf.mxu0
        %863 = vmatprep.mubr.bf16.mxu0 0
        %864 = vmatmul.mubr.bf16.gmra.mxu0 %v746
        %v865 = vpop.f32.mrf.mxu0
        %v866 = vadd.f32 %v726, %v865
        %v867 = vpop.f32.mrf.mxu0
        %v868 = vpop.f32.mrf.mxu0
        %v869 = vadd.f32 %v726, %v868
        %v870 = vpop.f32.mrf.mxu0
        %871 = vmatprep.mubr.bf16.mxu0 0
        %872 = vmatmul.mubr.bf16.gmra.mxu0 %v747
        %v873 = vpop.f32.mrf.mxu0
        %v874 = vadd.f32 %v726, %v873
        %v875 = vpop.f32.mrf.mxu0
        %v876 = vpop.f32.mrf.mxu0
        %v877 = vadd.f32 %v726, %v876
        %v878 = vpop.f32.mrf.mxu0
        %879 = vmatprep.mubr.bf16.mxu0 0
        %880 = vmatmul.mubr.bf16.gmra.mxu0 %v748
        %v881 = vpop.f32.mrf.mxu0
        %v882 = vadd.f32 %v726, %v881
        %v883 = vpop.f32.mrf.mxu0
        %v884 = vpop.f32.mrf.mxu0
        %v885 = vadd.f32 %v726, %v884
        %v886 = vpop.f32.mrf.mxu0
        %887 = vmatprep.mubr.bf16.mxu0 0
        %888 = vmatmul.mubr.bf16.gmra.mxu0 %v749
        %v889 = vpop.f32.mrf.mxu0
        %v890 = vadd.f32 %v726, %v889
        %v891 = vpop.f32.mrf.mxu0
        %v892 = vpop.f32.mrf.mxu0
        %v893 = vadd.f32 %v726, %v892
        %v894 = vpop.f32.mrf.mxu0
        %895 = vmatprep.mubr.bf16.mxu0 0
        %896 = vmatmul.mubr.bf16.gmra.mxu0 %v750
        %v897 = vpop.f32.mrf.mxu0
        %v898 = vadd.f32 %v726, %v897
        %v899 = vpop.f32.mrf.mxu0
        %v900 = vpop.f32.mrf.mxu0
        %v901 = vadd.f32 %v726, %v900
        %v902 = vpop.f32.mrf.mxu0
        %903 = vdwg.mxu0
        %v904 = vmax.f32 %v842, 0.0
        %v905 = vmax.f32 %v845, 0.0
        %v906 = vmax.f32 %v850, 0.0
        %v907 = vmax.f32 %v853, 0.0
        %v908 = vmax.f32 %v858, 0.0
        %v909 = vmax.f32 %v861, 0.0
        %v910 = vmax.f32 %v866, 0.0
        %v911 = vmax.f32 %v869, 0.0
        %v912 = vmax.f32 %v874, 0.0
        %v913 = vmax.f32 %v877, 0.0
        %v914 = vmax.f32 %v882, 0.0
        %v915 = vmax.f32 %v885, 0.0
        %v916 = vmax.f32 %v890, 0.0
        %v917 = vmax.f32 %v893, 0.0
        %v918 = vmax.f32 %v898, 0.0
        %v919 = vmax.f32 %v901, 0.0
        %v920 = vpack.c.bf16 %v905, %v904
        %v921 = vpack.c.bf16 %v907, %v906
        %v922 = vpack.c.bf16 %v909, %v908
        %v923 = vpack.c.bf16 %v911, %v910
        %v924 = vpack.c.bf16 %v913, %v912
        %v925 = vpack.c.bf16 %v915, %v914
        %v926 = vpack.c.bf16 %v917, %v916
        %v927 = vpack.c.bf16 %v919, %v918
        %v928 = vld [vmem:[%s4] sm:$0xf]
        %v929 = vld [vmem:[%s4 + $0x4] sm:$0xf]
        %v930 = vld [vmem:[%s4 + $0x8] sm:$0xf]
        %v931 = vld [vmem:[%s4 + $0xc] sm:$0xf]
        %v932 = vld [vmem:[%s4 + $0x10] sm:$0xf]
        %v933 = vld [vmem:[%s4 + $0x14] sm:$0xf]
        %v934 = vld [vmem:[%s4 + $0x18] sm:$0xf]
        %v935 = vld [vmem:[%s4 + $0x1c] sm:$0xf]
        %v936 = vld [vmem:[%s4 + $0x20] sm:$0xf]
        %v937 = vld [vmem:[%s4 + $0x24] sm:$0xf]
        %v938 = vld [vmem:[%s4 + $0x28] sm:$0xf]
        %v939 = vld [vmem:[%s4 + $0x2c] sm:$0xf]
        %v940 = vld [vmem:[%s4 + $0x30] sm:$0xf]
        %v941 = vld [vmem:[%s4 + $0x34] sm:$0xf]
        %v942 = vld [vmem:[%s4 + $0x38] sm:$0xf]
        %v943 = vld [vmem:[%s4 + $0x3c] sm:$0xf]
        %s944 = sadd.s32 %s296, 2
        %s945 = smul.u32 %s944, 3
        %s946 = smul.addr %s945, 4
        %s947 = scalar_lea.vmem [#allocation2], %s946
        %v948 = vld [vmem:[%s947] sm:$0xe]
        %v949 = vld [vmem:[%s947 + $0x4] sm:$0xf]
        %v950 = vld [vmem:[%s947 + $0x8] sm:$0x1]
        %v951 = vld [vmem:[%s947 + $0xc] sm:$0xe]
        %v952 = vld [vmem:[%s947 + $0x10] sm:$0xf]
        %v953 = vld [vmem:[%s947 + $0x14] sm:$0x1]
        %v954 = vld [vmem:[%s947 + $0x18] sm:$0xe]
        %v955 = vld [vmem:[%s947 + $0x1c] sm:$0xf]
        %v956 = vld [vmem:[%s947 + $0x20] sm:$0x1]
        %v957 = vld [vmem:[%s947 + $0x24] sm:$0xe]
        %v958 = vld [vmem:[%s947 + $0x28] sm:$0xf]
        %v959 = vld [vmem:[%s947 + $0x2c] sm:$0x1]
        %v960 = vld [vmem:[%s947 + $0x30] sm:$0xe]
        %v961 = vld [vmem:[%s947 + $0x34] sm:$0xf]
        %v962 = vld [vmem:[%s947 + $0x38] sm:$0x1]
        %v963 = vld [vmem:[%s947 + $0x3c] sm:$0xe]
        %v964 = vld [vmem:[%s947 + $0x40] sm:$0xf]
        %v965 = vld [vmem:[%s947 + $0x44] sm:$0x1]
        %v966 = vld [vmem:[%s947 + $0x48] sm:$0xe]
        %v967 = vld [vmem:[%s947 + $0x4c] sm:$0xf]
        %v968 = vld [vmem:[%s947 + $0x50] sm:$0x1]
        %v969 = vld [vmem:[%s947 + $0x54] sm:$0xe]
        %v970 = vld [vmem:[%s947 + $0x58] sm:$0xf]
        %v971 = vld [vmem:[%s947 + $0x5c] sm:$0x1]
        %vm996 = vcmask 1042432
        %vm997 = vcmask 1046532
        %vm998 = vmor %vm996, %vm997
        %v999 = vrot.slane %v948, 5
        %v1000 = vrot.slane %v999, 4
        %v1001 = vrot.slane %v949, 5
        %v1002 = vsel %vm998, %v1000, %v1001
        %v1003 = vrot.slane %v1001, 4
        %v1004 = vrot.slane %v950, 5
        %v1005 = vsel %vm998, %v1003, %v1004
        %v1006 = vrot.slane %v951, 5
        %v1007 = vrot.slane %v1006, 4
        %v1008 = vrot.slane %v952, 5
        %v1009 = vsel %vm998, %v1007, %v1008
        %v1010 = vrot.slane %v1008, 4
        %v1011 = vrot.slane %v953, 5
        %v1012 = vsel %vm998, %v1010, %v1011
        %v1013 = vrot.slane %v954, 5
        %v1014 = vrot.slane %v1013, 4
        %v1015 = vrot.slane %v955, 5
        %v1016 = vsel %vm998, %v1014, %v1015
        %v1017 = vrot.slane %v1015, 4
        %v1018 = vrot.slane %v956, 5
        %v1019 = vsel %vm998, %v1017, %v1018
        %v1020 = vrot.slane %v957, 5
        %v1021 = vrot.slane %v1020, 4
        %v1022 = vrot.slane %v958, 5
        %v1023 = vsel %vm998, %v1021, %v1022
        %v1024 = vrot.slane %v1022, 4
        %v1025 = vrot.slane %v959, 5
        %v1026 = vsel %vm998, %v1024, %v1025
        %v1027 = vrot.slane %v960, 5
        %v1028 = vrot.slane %v1027, 4
        %v1029 = vrot.slane %v961, 5
        %v1030 = vsel %vm998, %v1028, %v1029
        %v1031 = vrot.slane %v1029, 4
        %v1032 = vrot.slane %v962, 5
        %v1033 = vsel %vm998, %v1031, %v1032
        %v1034 = vrot.slane %v963, 5
        %v1035 = vrot.slane %v1034, 4
        %v1036 = vrot.slane %v964, 5
        %v1037 = vsel %vm998, %v1035, %v1036
        %v1038 = vrot.slane %v1036, 4
        %v1039 = vrot.slane %v965, 5
        %v1040 = vsel %vm998, %v1038, %v1039
        %v1041 = vrot.slane %v966, 5
        %v1042 = vrot.slane %v1041, 4
        %v1043 = vrot.slane %v967, 5
        %v1044 = vsel %vm998, %v1042, %v1043
        %v1045 = vrot.slane %v1043, 4
        %v1046 = vrot.slane %v968, 5
        %v1047 = vsel %vm998, %v1045, %v1046
        %v1048 = vrot.slane %v969, 5
        %v1049 = vrot.slane %v1048, 4
        %v1050 = vrot.slane %v970, 5
        %v1051 = vsel %vm998, %v1049, %v1050
        %v1052 = vrot.slane %v1050, 4
        %v1053 = vrot.slane %v971, 5
        %v1054 = vsel %vm998, %v1052, %v1053
        %v1055 = vld [vmem:[%s947] sm:$0xc]
        %v1056 = vld [vmem:[%s947 + $0x8] sm:$0x3]
        %v1057 = vld [vmem:[%s947 + $0xc] sm:$0xc]
        %v1058 = vld [vmem:[%s947 + $0x14] sm:$0x3]
        %v1059 = vld [vmem:[%s947 + $0x18] sm:$0xc]
        %v1060 = vld [vmem:[%s947 + $0x20] sm:$0x3]
        %v1061 = vld [vmem:[%s947 + $0x24] sm:$0xc]
        %v1062 = vld [vmem:[%s947 + $0x2c] sm:$0x3]
        %v1063 = vld [vmem:[%s947 + $0x30] sm:$0xc]
        %v1064 = vld [vmem:[%s947 + $0x38] sm:$0x3]
        %v1065 = vld [vmem:[%s947 + $0x3c] sm:$0xc]
        %v1066 = vld [vmem:[%s947 + $0x44] sm:$0x3]
        %v1067 = vld [vmem:[%s947 + $0x48] sm:$0xc]
        %v1068 = vld [vmem:[%s947 + $0x50] sm:$0x3]
        %v1069 = vld [vmem:[%s947 + $0x54] sm:$0xc]
        %v1070 = vld [vmem:[%s947 + $0x5c] sm:$0x3]
        %v1087 = vrot.slane %v1055, 6
        %v1088 = vrot.slane %v1087, 4
        %v1089 = vrot.slane %v949, 6
        %v1090 = vsel %vm421, %v1088, %v1089
        %v1091 = vrot.slane %v1089, 4
        %v1092 = vrot.slane %v1056, 6
        %v1093 = vsel %vm421, %v1091, %v1092
        %v1094 = vrot.slane %v1057, 6
        %v1095 = vrot.slane %v1094, 4
        %v1096 = vrot.slane %v952, 6
        %v1097 = vsel %vm421, %v1095, %v1096
        %v1098 = vrot.slane %v1096, 4
        %v1099 = vrot.slane %v1058, 6
        %v1100 = vsel %vm421, %v1098, %v1099
        %v1101 = vrot.slane %v1059, 6
        %v1102 = vrot.slane %v1101, 4
        %v1103 = vrot.slane %v955, 6
        %v1104 = vsel %vm421, %v1102, %v1103
        %v1105 = vrot.slane %v1103, 4
        %v1106 = vrot.slane %v1060, 6
        %v1107 = vsel %vm421, %v1105, %v1106
        %v1108 = vrot.slane %v1061, 6
        %v1109 = vrot.slane %v1108, 4
        %v1110 = vrot.slane %v958, 6
        %v1111 = vsel %vm421, %v1109, %v1110
        %v1112 = vrot.slane %v1110, 4
        %v1113 = vrot.slane %v1062, 6
        %v1114 = vsel %vm421, %v1112, %v1113
        %v1115 = vrot.slane %v1063, 6
        %v1116 = vrot.slane %v1115, 4
        %v1117 = vrot.slane %v961, 6
        %v1118 = vsel %vm421, %v1116, %v1117
        %v1119 = vrot.slane %v1117, 4
        %v1120 = vrot.slane %v1064, 6
        %v1121 = vsel %vm421, %v1119, %v1120
        %v1122 = vrot.slane %v1065, 6
        %v1123 = vrot.slane %v1122, 4
        %v1124 = vrot.slane %v964, 6
        %v1125 = vsel %vm421, %v1123, %v1124
        %v1126 = vrot.slane %v1124, 4
        %v1127 = vrot.slane %v1066, 6
        %v1128 = vsel %vm421, %v1126, %v1127
        %v1129 = vrot.slane %v1067, 6
        %v1130 = vrot.slane %v1129, 4
        %v1131 = vrot.slane %v967, 6
        %v1132 = vsel %vm421, %v1130, %v1131
        %v1133 = vrot.slane %v1131, 4
        %v1134 = vrot.slane %v1068, 6
        %v1135 = vsel %vm421, %v1133, %v1134
        %v1136 = vrot.slane %v1069, 6
        %v1137 = vrot.slane %v1136, 4
        %v1138 = vrot.slane %v970, 6
        %v1139 = vsel %vm421, %v1137, %v1138
        %v1140 = vrot.slane %v1138, 4
        %v1141 = vrot.slane %v1070, 6
        %v1142 = vsel %vm421, %v1140, %v1141
        %v1143 = vunpack.c.l.b16 %v1002
        %v1144 = vunpack.c.l.b16 %v1005
        %v1145 = vunpack.c.l.b16 %v1009
        %v1146 = vunpack.c.l.b16 %v1012
        %v1147 = vunpack.c.l.b16 %v1016
        %v1148 = vunpack.c.l.b16 %v1019
        %v1149 = vunpack.c.l.b16 %v1023
        %v1150 = vunpack.c.l.b16 %v1026
        %v1151 = vunpack.c.l.b16 %v1030
        %v1152 = vunpack.c.l.b16 %v1033
        %v1153 = vunpack.c.l.b16 %v1037
        %v1154 = vunpack.c.l.b16 %v1040
        %v1155 = vunpack.c.l.b16 %v1044
        %v1156 = vunpack.c.l.b16 %v1047
        %v1157 = vunpack.c.l.b16 %v1051
        %v1158 = vunpack.c.l.b16 %v1054
        %v1159 = vpack.c.b16 %v1144, %v1143
        %v1160 = vpack.c.b16 %v1146, %v1145
        %v1161 = vpack.c.b16 %v1148, %v1147
        %v1162 = vpack.c.b16 %v1150, %v1149
        %v1163 = vpack.c.b16 %v1152, %v1151
        %v1164 = vpack.c.b16 %v1154, %v1153
        %v1165 = vpack.c.b16 %v1156, %v1155
        %v1166 = vpack.c.b16 %v1158, %v1157
        %v1175 = vunpack.c.l.b16 %v1090
        %v1176 = vunpack.c.l.b16 %v1093
        %v1177 = vunpack.c.l.b16 %v1097
        %v1178 = vunpack.c.l.b16 %v1100
        %v1179 = vunpack.c.l.b16 %v1104
        %v1180 = vunpack.c.l.b16 %v1107
        %v1181 = vunpack.c.l.b16 %v1111
        %v1182 = vunpack.c.l.b16 %v1114
        %v1183 = vunpack.c.l.b16 %v1118
        %v1184 = vunpack.c.l.b16 %v1121
        %v1185 = vunpack.c.l.b16 %v1125
        %v1186 = vunpack.c.l.b16 %v1128
        %v1187 = vunpack.c.l.b16 %v1132
        %v1188 = vunpack.c.l.b16 %v1135
        %v1189 = vunpack.c.l.b16 %v1139
        %v1190 = vunpack.c.l.b16 %v1142
        %v1191 = vpack.c.b16 %v1176, %v1175
        %v1192 = vpack.c.b16 %v1178, %v1177
        %v1193 = vpack.c.b16 %v1180, %v1179
        %v1194 = vpack.c.b16 %v1182, %v1181
        %v1195 = vpack.c.b16 %v1184, %v1183
        %v1196 = vpack.c.b16 %v1186, %v1185
        %v1197 = vpack.c.b16 %v1188, %v1187
        %v1198 = vpack.c.b16 %v1190, %v1189
        %v1207 = vld [vmem:[%s2] sm:$0xf]
        %v1208 = vld [vmem:[%s2 + $0x4] sm:$0xf]
        %v1209 = vld [vmem:[%s2 + $0x8] sm:$0xf]
        %v1210 = vld [vmem:[%s2 + $0xc] sm:$0xf]
        %v1211 = vld [vmem:[%s2 + $0x10] sm:$0xf]
        %v1212 = vld [vmem:[%s2 + $0x14] sm:$0xf]
        %v1213 = vld [vmem:[%s2 + $0x18] sm:$0xf]
        %v1214 = vld [vmem:[%s2 + $0x1c] sm:$0xf]
        %v1215 = vld [vmem:[%s2 + $0x20] sm:$0xf]
        %v1216 = vld [vmem:[%s2 + $0x24] sm:$0xf]
        %v1217 = vld [vmem:[%s2 + $0x28] sm:$0xf]
        %v1218 = vld [vmem:[%s2 + $0x2c] sm:$0xf]
        %v1219 = vld [vmem:[%s2 + $0x30] sm:$0xf]
        %v1220 = vld [vmem:[%s2 + $0x34] sm:$0xf]
        %v1221 = vld [vmem:[%s2 + $0x38] sm:$0xf]
        %v1222 = vld [vmem:[%s2 + $0x3c] sm:$0xf]
        %v1223 = vld [vmem:[%s2 + $0x40] sm:$0xf]
        %v1224 = vld [vmem:[%s2 + $0x44] sm:$0xf]
        %v1225 = vld [vmem:[%s2 + $0x48] sm:$0xf]
        %v1226 = vld [vmem:[%s2 + $0x4c] sm:$0xf]
        %v1227 = vld [vmem:[%s2 + $0x50] sm:$0xf]
        %v1228 = vld [vmem:[%s2 + $0x54] sm:$0xf]
        %v1229 = vld [vmem:[%s2 + $0x58] sm:$0xf]
        %v1230 = vld [vmem:[%s2 + $0x5c] sm:$0xf]
        %v1231 = vld [vmem:[%s2 + $0x60] sm:$0xf]
        %v1232 = vld [vmem:[%s2 + $0x64] sm:$0xf]
        %v1233 = vld [vmem:[%s2 + $0x68] sm:$0xf]
        %v1234 = vld [vmem:[%s2 + $0x6c] sm:$0xf]
        %v1235 = vld [vmem:[%s2 + $0x70] sm:$0xf]
        %v1236 = vld [vmem:[%s2 + $0x74] sm:$0xf]
        %v1237 = vld [vmem:[%s2 + $0x78] sm:$0xf]
        %v1238 = vld [vmem:[%s2 + $0x7c] sm:$0xf]
        %v1239 = vld [vmem:[%s947] sm:$0x8]
        %v1240 = vld [vmem:[%s947 + $0x8] sm:$0x7]
        %v1241 = vld [vmem:[%s947 + $0xc] sm:$0x8]
        %v1242 = vld [vmem:[%s947 + $0x14] sm:$0x7]
        %v1243 = vld [vmem:[%s947 + $0x18] sm:$0x8]
        %v1244 = vld [vmem:[%s947 + $0x20] sm:$0x7]
        %v1245 = vld [vmem:[%s947 + $0x24] sm:$0x8]
        %v1246 = vld [vmem:[%s947 + $0x2c] sm:$0x7]
        %v1247 = vld [vmem:[%s947 + $0x30] sm:$0x8]
        %v1248 = vld [vmem:[%s947 + $0x38] sm:$0x7]
        %v1249 = vld [vmem:[%s947 + $0x3c] sm:$0x8]
        %v1250 = vld [vmem:[%s947 + $0x44] sm:$0x7]
        %v1251 = vld [vmem:[%s947 + $0x48] sm:$0x8]
        %v1252 = vld [vmem:[%s947 + $0x50] sm:$0x7]
        %v1253 = vld [vmem:[%s947 + $0x54] sm:$0x8]
        %v1254 = vld [vmem:[%s947 + $0x5c] sm:$0x7]
        %vm1271 = vcmask 1040384
        %vm1272 = vcmask 1044484
        %vm1273 = vmor %vm1271, %vm1272
        %v1274 = vrot.slane %v1239, 7
        %v1275 = vrot.slane %v1274, 4
        %v1276 = vrot.slane %v949, 7
        %v1277 = vsel %vm1273, %v1275, %v1276
        %v1278 = vrot.slane %v1276, 4
        %v1279 = vrot.slane %v1240, 7
        %v1280 = vsel %vm1273, %v1278, %v1279
        %v1281 = vrot.slane %v1241, 7
        %v1282 = vrot.slane %v1281, 4
        %v1283 = vrot.slane %v952, 7
        %v1284 = vsel %vm1273, %v1282, %v1283
        %v1285 = vrot.slane %v1283, 4
        %v1286 = vrot.slane %v1242, 7
        %v1287 = vsel %vm1273, %v1285, %v1286
        %v1288 = vrot.slane %v1243, 7
        %v1289 = vrot.slane %v1288, 4
        %v1290 = vrot.slane %v955, 7
        %v1291 = vsel %vm1273, %v1289, %v1290
        %v1292 = vrot.slane %v1290, 4
        %v1293 = vrot.slane %v1244, 7
        %v1294 = vsel %vm1273, %v1292, %v1293
        %v1295 = vrot.slane %v1245, 7
        %v1296 = vrot.slane %v1295, 4
        %v1297 = vrot.slane %v958, 7
        %v1298 = vsel %vm1273, %v1296, %v1297
        %v1299 = vrot.slane %v1297, 4
        %v1300 = vrot.slane %v1246, 7
        %v1301 = vsel %vm1273, %v1299, %v1300
        %v1302 = vrot.slane %v1247, 7
        %v1303 = vrot.slane %v1302, 4
        %v1304 = vrot.slane %v961, 7
        %v1305 = vsel %vm1273, %v1303, %v1304
        %v1306 = vrot.slane %v1304, 4
        %v1307 = vrot.slane %v1248, 7
        %v1308 = vsel %vm1273, %v1306, %v1307
        %v1309 = vrot.slane %v1249, 7
        %v1310 = vrot.slane %v1309, 4
        %v1311 = vrot.slane %v964, 7
        %v1312 = vsel %vm1273, %v1310, %v1311
        %v1313 = vrot.slane %v1311, 4
        %v1314 = vrot.slane %v1250, 7
        %v1315 = vsel %vm1273, %v1313, %v1314
        %v1316 = vrot.slane %v1251, 7
        %v1317 = vrot.slane %v1316, 4
        %v1318 = vrot.slane %v967, 7
        %v1319 = vsel %vm1273, %v1317, %v1318
        %v1320 = vrot.slane %v1318, 4
        %v1321 = vrot.slane %v1252, 7
        %v1322 = vsel %vm1273, %v1320, %v1321
        %v1323 = vrot.slane %v1253, 7
        %v1324 = vrot.slane %v1323, 4
        %v1325 = vrot.slane %v970, 7
        %v1326 = vsel %vm1273, %v1324, %v1325
        %v1327 = vrot.slane %v1325, 4
        %v1328 = vrot.slane %v1254, 7
        %v1329 = vsel %vm1273, %v1327, %v1328
        %v1330 = vld [vmem:[%s602] sm:$0xe]
        %v1331 = vld [vmem:[%s602 + $0x8] sm:$0x1]
        %v1332 = vld [vmem:[%s602 + $0xc] sm:$0xe]
        %v1333 = vld [vmem:[%s602 + $0x14] sm:$0x1]
        %v1334 = vld [vmem:[%s602 + $0x18] sm:$0xe]
        %v1335 = vld [vmem:[%s602 + $0x20] sm:$0x1]
        %v1336 = vld [vmem:[%s602 + $0x24] sm:$0xe]
        %v1337 = vld [vmem:[%s602 + $0x2c] sm:$0x1]
        %v1338 = vld [vmem:[%s602 + $0x30] sm:$0xe]
        %v1339 = vld [vmem:[%s602 + $0x38] sm:$0x1]
        %v1340 = vld [vmem:[%s602 + $0x3c] sm:$0xe]
        %v1341 = vld [vmem:[%s602 + $0x44] sm:$0x1]
        %v1342 = vld [vmem:[%s602 + $0x48] sm:$0xe]
        %v1343 = vld [vmem:[%s602 + $0x50] sm:$0x1]
        %v1344 = vld [vmem:[%s602 + $0x54] sm:$0xe]
        %v1345 = vld [vmem:[%s602 + $0x5c] sm:$0x1]
        %v1362 = vrot.slane %v1330, 5
        %v1363 = vrot.slane %v1362, 4
        %v1364 = vrot.slane %v604, 5
        %v1365 = vsel %vm998, %v1363, %v1364
        %v1366 = vrot.slane %v1364, 4
        %v1367 = vrot.slane %v1331, 5
        %v1368 = vsel %vm998, %v1366, %v1367
        %v1369 = vrot.slane %v1332, 5
        %v1370 = vrot.slane %v1369, 4
        %v1371 = vrot.slane %v607, 5
        %v1372 = vsel %vm998, %v1370, %v1371
        %v1373 = vrot.slane %v1371, 4
        %v1374 = vrot.slane %v1333, 5
        %v1375 = vsel %vm998, %v1373, %v1374
        %v1376 = vrot.slane %v1334, 5
        %v1377 = vrot.slane %v1376, 4
        %v1378 = vrot.slane %v610, 5
        %v1379 = vsel %vm998, %v1377, %v1378
        %v1380 = vrot.slane %v1378, 4
        %v1381 = vrot.slane %v1335, 5
        %v1382 = vsel %vm998, %v1380, %v1381
        %v1383 = vrot.slane %v1336, 5
        %v1384 = vrot.slane %v1383, 4
        %v1385 = vrot.slane %v613, 5
        %v1386 = vsel %vm998, %v1384, %v1385
        %v1387 = vrot.slane %v1385, 4
        %v1388 = vrot.slane %v1337, 5
        %v1389 = vsel %vm998, %v1387, %v1388
        %v1390 = vrot.slane %v1338, 5
        %v1391 = vrot.slane %v1390, 4
        %v1392 = vrot.slane %v616, 5
        %v1393 = vsel %vm998, %v1391, %v1392
        %v1394 = vrot.slane %v1392, 4
        %v1395 = vrot.slane %v1339, 5
        %v1396 = vsel %vm998, %v1394, %v1395
        %v1397 = vrot.slane %v1340, 5
        %v1398 = vrot.slane %v1397, 4
        %v1399 = vrot.slane %v619, 5
        %v1400 = vsel %vm998, %v1398, %v1399
        %v1401 = vrot.slane %v1399, 4
        %v1402 = vrot.slane %v1341, 5
        %v1403 = vsel %vm998, %v1401, %v1402
        %v1404 = vrot.slane %v1342, 5
        %v1405 = vrot.slane %v1404, 4
        %v1406 = vrot.slane %v622, 5
        %v1407 = vsel %vm998, %v1405, %v1406
        %v1408 = vrot.slane %v1406, 4
        %v1409 = vrot.slane %v1343, 5
        %v1410 = vsel %vm998, %v1408, %v1409
        %v1411 = vrot.slane %v1344, 5
        %v1412 = vrot.slane %v1411, 4
        %v1413 = vrot.slane %v625, 5
        %v1414 = vsel %vm998, %v1412, %v1413
        %v1415 = vrot.slane %v1413, 4
        %v1416 = vrot.slane %v1345, 5
        %v1417 = vsel %vm998, %v1415, %v1416
        %v1418 = vunpack.c.l.b16 %v1277
        %v1419 = vunpack.c.l.b16 %v1280
        %v1420 = vunpack.c.l.b16 %v1284
        %v1421 = vunpack.c.l.b16 %v1287
        %v1422 = vunpack.c.l.b16 %v1291
        %v1423 = vunpack.c.l.b16 %v1294
        %v1424 = vunpack.c.l.b16 %v1298
        %v1425 = vunpack.c.l.b16 %v1301
        %v1426 = vunpack.c.l.b16 %v1305
        %v1427 = vunpack.c.l.b16 %v1308
        %v1428 = vunpack.c.l.b16 %v1312
        %v1429 = vunpack.c.l.b16 %v1315
        %v1430 = vunpack.c.l.b16 %v1319
        %v1431 = vunpack.c.l.b16 %v1322
        %v1432 = vunpack.c.l.b16 %v1326
        %v1433 = vunpack.c.l.b16 %v1329
        %v1434 = vpack.c.b16 %v1419, %v1418
        %v1435 = vpack.c.b16 %v1421, %v1420
        %v1436 = vpack.c.b16 %v1423, %v1422
        %v1437 = vpack.c.b16 %v1425, %v1424
        %v1438 = vpack.c.b16 %v1427, %v1426
        %v1439 = vpack.c.b16 %v1429, %v1428
        %v1440 = vpack.c.b16 %v1431, %v1430
        %v1441 = vpack.c.b16 %v1433, %v1432
        %v1450 = vunpack.c.l.b16 %v1365
        %v1451 = vunpack.c.l.b16 %v1368
        %v1452 = vunpack.c.l.b16 %v1372
        %v1453 = vunpack.c.l.b16 %v1375
        %v1454 = vunpack.c.l.b16 %v1379
        %v1455 = vunpack.c.l.b16 %v1382
        %v1456 = vunpack.c.l.b16 %v1386
        %v1457 = vunpack.c.l.b16 %v1389
        %v1458 = vunpack.c.l.b16 %v1393
        %v1459 = vunpack.c.l.b16 %v1396
        %v1460 = vunpack.c.l.b16 %v1400
        %v1461 = vunpack.c.l.b16 %v1403
        %v1462 = vunpack.c.l.b16 %v1407
        %v1463 = vunpack.c.l.b16 %v1410
        %v1464 = vunpack.c.l.b16 %v1414
        %v1465 = vunpack.c.l.b16 %v1417
        %v1466 = vpack.c.b16 %v1451, %v1450
        %v1467 = vpack.c.b16 %v1453, %v1452
        %v1468 = vpack.c.b16 %v1455, %v1454
        %v1469 = vpack.c.b16 %v1457, %v1456
        %v1470 = vpack.c.b16 %v1459, %v1458
        %v1471 = vpack.c.b16 %v1461, %v1460
        %v1472 = vpack.c.b16 %v1463, %v1462
        %v1473 = vpack.c.b16 %v1465, %v1464
        %v1482 = vld [vmem:[%s2 + $0x80] sm:$0xf]
        %v1483 = vld [vmem:[%s2 + $0x84] sm:$0xf]
        %v1484 = vld [vmem:[%s2 + $0x88] sm:$0xf]
        %v1485 = vld [vmem:[%s2 + $0x8c] sm:$0xf]
        %v1486 = vld [vmem:[%s2 + $0x90] sm:$0xf]
        %v1487 = vld [vmem:[%s2 + $0x94] sm:$0xf]
        %v1488 = vld [vmem:[%s2 + $0x98] sm:$0xf]
        %v1489 = vld [vmem:[%s2 + $0x9c] sm:$0xf]
        %v1490 = vld [vmem:[%s2 + $0xa0] sm:$0xf]
        %v1491 = vld [vmem:[%s2 + $0xa4] sm:$0xf]
        %v1492 = vld [vmem:[%s2 + $0xa8] sm:$0xf]
        %v1493 = vld [vmem:[%s2 + $0xac] sm:$0xf]
        %v1494 = vld [vmem:[%s2 + $0xb0] sm:$0xf]
        %v1495 = vld [vmem:[%s2 + $0xb4] sm:$0xf]
        %v1496 = vld [vmem:[%s2 + $0xb8] sm:$0xf]
        %v1497 = vld [vmem:[%s2 + $0xbc] sm:$0xf]
        %v1498 = vld [vmem:[%s2 + $0xc0] sm:$0xf]
        %v1499 = vld [vmem:[%s2 + $0xc4] sm:$0xf]
        %v1500 = vld [vmem:[%s2 + $0xc8] sm:$0xf]
        %v1501 = vld [vmem:[%s2 + $0xcc] sm:$0xf]
        %v1502 = vld [vmem:[%s2 + $0xd0] sm:$0xf]
        %v1503 = vld [vmem:[%s2 + $0xd4] sm:$0xf]
        %v1504 = vld [vmem:[%s2 + $0xd8] sm:$0xf]
        %v1505 = vld [vmem:[%s2 + $0xdc] sm:$0xf]
        %v1506 = vld [vmem:[%s2 + $0xe0] sm:$0xf]
        %v1507 = vld [vmem:[%s2 + $0xe4] sm:$0xf]
        %v1508 = vld [vmem:[%s2 + $0xe8] sm:$0xf]
        %v1509 = vld [vmem:[%s2 + $0xec] sm:$0xf]
        %v1510 = vld [vmem:[%s2 + $0xf0] sm:$0xf]
        %v1511 = vld [vmem:[%s2 + $0xf4] sm:$0xf]
        %v1512 = vld [vmem:[%s2 + $0xf8] sm:$0xf]
        %v1513 = vld [vmem:[%s2 + $0xfc] sm:$0xf]
        %v1546 = vunpack.c.l.b16 %v1482
        %v1547 = vunpack.c.l.b16 %v1483
        %v1548 = vunpack.c.l.b16 %v1484
        %v1549 = vunpack.c.l.b16 %v1485
        %v1550 = vunpack.c.l.b16 %v1486
        %v1551 = vunpack.c.l.b16 %v1487
        %v1552 = vunpack.c.l.b16 %v1488
        %v1553 = vunpack.c.l.b16 %v1489
        %v1554 = vunpack.c.l.b16 %v1490
        %v1555 = vunpack.c.l.b16 %v1491
        %v1556 = vunpack.c.l.b16 %v1492
        %v1557 = vunpack.c.l.b16 %v1493
        %v1558 = vunpack.c.l.b16 %v1494
        %v1559 = vunpack.c.l.b16 %v1495
        %v1560 = vunpack.c.l.b16 %v1496
        %v1561 = vunpack.c.l.b16 %v1497
        %v1562 = vunpack.c.l.b16 %v1498
        %v1563 = vunpack.c.l.b16 %v1499
        %v1564 = vunpack.c.l.b16 %v1500
        %v1565 = vunpack.c.l.b16 %v1501
        %v1566 = vunpack.c.l.b16 %v1502
        %v1567 = vunpack.c.l.b16 %v1503
        %v1568 = vunpack.c.l.b16 %v1504
        %v1569 = vunpack.c.l.b16 %v1505
        %v1570 = vunpack.c.l.b16 %v1506
        %v1571 = vunpack.c.l.b16 %v1507
        %v1572 = vunpack.c.l.b16 %v1508
        %v1573 = vunpack.c.l.b16 %v1509
        %v1574 = vunpack.c.l.b16 %v1510
        %v1575 = vunpack.c.l.b16 %v1511
        %v1576 = vunpack.c.l.b16 %v1512
        %v1577 = vunpack.c.l.b16 %v1513
        %v1578 = vpack.c.b16 %v1547, %v1546
        %v1579 = vpack.c.b16 %v1549, %v1548
        %v1580 = vpack.c.b16 %v1551, %v1550
        %v1581 = vpack.c.b16 %v1553, %v1552
        %v1582 = vpack.c.b16 %v1555, %v1554
        %v1583 = vpack.c.b16 %v1557, %v1556
        %v1584 = vpack.c.b16 %v1559, %v1558
        %v1585 = vpack.c.b16 %v1561, %v1560
        %v1586 = vpack.c.b16 %v1563, %v1562
        %v1587 = vpack.c.b16 %v1565, %v1564
        %v1588 = vpack.c.b16 %v1567, %v1566
        %v1589 = vpack.c.b16 %v1569, %v1568
        %v1590 = vpack.c.b16 %v1571, %v1570
        %v1591 = vpack.c.b16 %v1573, %v1572
        %v1592 = vpack.c.b16 %v1575, %v1574
        %v1593 = vpack.c.b16 %v1577, %v1576
        %1610 = vmatprep.subr.bf16.mxu0 0
        %1611 = vmatpush1.bf16.msra.mxu0 %v1585
        %1612 = vmatprep.subr.bf16.mxu0 0
        %1613 = vmatpush1.bf16.msra.mxu0 %v1584
        %1614 = vmatprep.subr.bf16.mxu0 0
        %1615 = vmatpush1.bf16.msra.mxu0 %v1583
        %1616 = vmatprep.subr.bf16.mxu0 0
        %1617 = vmatpush1.bf16.msra.mxu0 %v1582
        %1618 = vmatprep.subr.bf16.mxu0 0
        %1619 = vmatpush1.bf16.msra.mxu0 %v1581
        %1620 = vmatprep.subr.bf16.mxu0 0
        %1621 = vmatpush1.bf16.msra.mxu0 %v1580
        %1622 = vmatprep.subr.bf16.mxu0 0
        %1623 = vmatpush1.bf16.msra.mxu0 %v1579
        %1624 = vmatprep.subr.bf16.mxu0 0
        %1625 = vmatpush1.bf16.msra.mxu0 %v1578
        %1626 = vmatprep.subr.bf16.mxu0 0
        %1627 = vmatpush2.bf16.msra.mxu0 %v1593
        %1628 = vmatprep.subr.bf16.mxu0 0
        %1629 = vmatpush2.bf16.msra.mxu0 %v1592
        %1630 = vmatprep.subr.bf16.mxu0 0
        %1631 = vmatpush2.bf16.msra.mxu0 %v1591
        %1632 = vmatprep.subr.bf16.mxu0 0
        %1633 = vmatpush2.bf16.msra.mxu0 %v1590
        %1634 = vmatprep.subr.bf16.mxu0 0
        %1635 = vmatpush2.bf16.msra.mxu0 %v1589
        %1636 = vmatprep.subr.bf16.mxu0 0
        %1637 = vmatpush2.bf16.msra.mxu0 %v1588
        %1638 = vmatprep.subr.bf16.mxu0 0
        %1639 = vmatpush2.bf16.msra.mxu0 %v1587
        %1640 = vmatprep.subr.bf16.mxu0 0
        %1641 = vmatpush2.bf16.msra.mxu0 %v1586
        %1642 = vmatprep.mubr.bf16.mxu0 %v1466
        %1643 = vmatmul.mubr.bf16.gmra.mxu0 %v1434
        %v1644 = vpop.f32.mrf.mxu0
        %v1645 = vadd.f32 0.0, %v1644
        %v1646 = vpop.f32.mrf.mxu0
        %v1647 = vpop.f32.mrf.mxu0
        %v1648 = vadd.f32 0.0, %v1647
        %v1649 = vpop.f32.mrf.mxu0
        %1650 = vmatprep.mubr.bf16.mxu0 %v1467
        %1651 = vmatmul.mubr.bf16.gmra.mxu0 %v1435
        %v1652 = vpop.f32.mrf.mxu0
        %v1653 = vadd.f32 0.0, %v1652
        %v1654 = vpop.f32.mrf.mxu0
        %v1655 = vpop.f32.mrf.mxu0
        %v1656 = vadd.f32 0.0, %v1655
        %v1657 = vpop.f32.mrf.mxu0
        %1658 = vmatprep.mubr.bf16.mxu0 %v1468
        %1659 = vmatmul.mubr.bf16.gmra.mxu0 %v1436
        %v1660 = vpop.f32.mrf.mxu0
        %v1661 = vadd.f32 0.0, %v1660
        %v1662 = vpop.f32.mrf.mxu0
        %v1663 = vpop.f32.mrf.mxu0
        %v1664 = vadd.f32 0.0, %v1663
        %v1665 = vpop.f32.mrf.mxu0
        %1666 = vmatprep.mubr.bf16.mxu0 %v1469
        %1667 = vmatmul.mubr.bf16.gmra.mxu0 %v1437
        %v1668 = vpop.f32.mrf.mxu0
        %v1669 = vadd.f32 0.0, %v1668
        %v1670 = vpop.f32.mrf.mxu0
        %v1671 = vpop.f32.mrf.mxu0
        %v1672 = vadd.f32 0.0, %v1671
        %v1673 = vpop.f32.mrf.mxu0
        %1674 = vmatprep.mubr.bf16.mxu0 %v1470
        %1675 = vmatmul.mubr.bf16.gmra.mxu0 %v1438
        %v1676 = vpop.f32.mrf.mxu0
        %v1677 = vadd.f32 0.0, %v1676
        %v1678 = vpop.f32.mrf.mxu0
        %v1679 = vpop.f32.mrf.mxu0
        %v1680 = vadd.f32 0.0, %v1679
        %v1681 = vpop.f32.mrf.mxu0
        %1682 = vmatprep.mubr.bf16.mxu0 %v1471
        %1683 = vmatmul.mubr.bf16.gmra.mxu0 %v1439
        %v1684 = vpop.f32.mrf.mxu0
        %v1685 = vadd.f32 0.0, %v1684
        %v1686 = vpop.f32.mrf.mxu0
        %v1687 = vpop.f32.mrf.mxu0
        %v1688 = vadd.f32 0.0, %v1687
        %v1689 = vpop.f32.mrf.mxu0
        %1690 = vmatprep.mubr.bf16.mxu0 %v1472
        %1691 = vmatmul.mubr.bf16.gmra.mxu0 %v1440
        %v1692 = vpop.f32.mrf.mxu0
        %v1693 = vadd.f32 0.0, %v1692
        %v1694 = vpop.f32.mrf.mxu0
        %v1695 = vpop.f32.mrf.mxu0
        %v1696 = vadd.f32 0.0, %v1695
        %v1697 = vpop.f32.mrf.mxu0
        %1698 = vmatprep.mubr.bf16.mxu0 %v1473
        %1699 = vmatmul.mubr.bf16.gmra.mxu0 %v1441
        %v1700 = vpop.f32.mrf.mxu0
        %v1701 = vadd.f32 0.0, %v1700
        %v1702 = vpop.f32.mrf.mxu0
        %v1703 = vpop.f32.mrf.mxu0
        %v1704 = vadd.f32 0.0, %v1703
        %v1705 = vpop.f32.mrf.mxu0
        %1706 = vdwg.mxu0
        %v1739 = vunpack.c.l.b16 %v1207
        %v1740 = vunpack.c.l.b16 %v1208
        %v1741 = vunpack.c.l.b16 %v1209
        %v1742 = vunpack.c.l.b16 %v1210
        %v1743 = vunpack.c.l.b16 %v1211
        %v1744 = vunpack.c.l.b16 %v1212
        %v1745 = vunpack.c.l.b16 %v1213
        %v1746 = vunpack.c.l.b16 %v1214
        %v1747 = vunpack.c.l.b16 %v1215
        %v1748 = vunpack.c.l.b16 %v1216
        %v1749 = vunpack.c.l.b16 %v1217
        %v1750 = vunpack.c.l.b16 %v1218
        %v1751 = vunpack.c.l.b16 %v1219
        %v1752 = vunpack.c.l.b16 %v1220
        %v1753 = vunpack.c.l.b16 %v1221
        %v1754 = vunpack.c.l.b16 %v1222
        %v1755 = vunpack.c.l.b16 %v1223
        %v1756 = vunpack.c.l.b16 %v1224
        %v1757 = vunpack.c.l.b16 %v1225
        %v1758 = vunpack.c.l.b16 %v1226
        %v1759 = vunpack.c.l.b16 %v1227
        %v1760 = vunpack.c.l.b16 %v1228
        %v1761 = vunpack.c.l.b16 %v1229
        %v1762 = vunpack.c.l.b16 %v1230
        %v1763 = vunpack.c.l.b16 %v1231
        %v1764 = vunpack.c.l.b16 %v1232
        %v1765 = vunpack.c.l.b16 %v1233
        %v1766 = vunpack.c.l.b16 %v1234
        %v1767 = vunpack.c.l.b16 %v1235
        %v1768 = vunpack.c.l.b16 %v1236
        %v1769 = vunpack.c.l.b16 %v1237
        %v1770 = vunpack.c.l.b16 %v1238
        %v1771 = vpack.c.b16 %v1740, %v1739
        %v1772 = vpack.c.b16 %v1742, %v1741
        %v1773 = vpack.c.b16 %v1744, %v1743
        %v1774 = vpack.c.b16 %v1746, %v1745
        %v1775 = vpack.c.b16 %v1748, %v1747
        %v1776 = vpack.c.b16 %v1750, %v1749
        %v1777 = vpack.c.b16 %v1752, %v1751
        %v1778 = vpack.c.b16 %v1754, %v1753
        %v1779 = vpack.c.b16 %v1756, %v1755
        %v1780 = vpack.c.b16 %v1758, %v1757
        %v1781 = vpack.c.b16 %v1760, %v1759
        %v1782 = vpack.c.b16 %v1762, %v1761
        %v1783 = vpack.c.b16 %v1764, %v1763
        %v1784 = vpack.c.b16 %v1766, %v1765
        %v1785 = vpack.c.b16 %v1768, %v1767
        %v1786 = vpack.c.b16 %v1770, %v1769
        %1803 = vmatprep.subr.bf16.mxu0 0
        %1804 = vmatpush1.bf16.msra.mxu0 %v1778
        %1805 = vmatprep.subr.bf16.mxu0 0
        %1806 = vmatpush1.bf16.msra.mxu0 %v1777
        %1807 = vmatprep.subr.bf16.mxu0 0
        %1808 = vmatpush1.bf16.msra.mxu0 %v1776
        %1809 = vmatprep.subr.bf16.mxu0 0
        %1810 = vmatpush1.bf16.msra.mxu0 %v1775
        %1811 = vmatprep.subr.bf16.mxu0 0
        %1812 = vmatpush1.bf16.msra.mxu0 %v1774
        %1813 = vmatprep.subr.bf16.mxu0 0
        %1814 = vmatpush1.bf16.msra.mxu0 %v1773
        %1815 = vmatprep.subr.bf16.mxu0 0
        %1816 = vmatpush1.bf16.msra.mxu0 %v1772
        %1817 = vmatprep.subr.bf16.mxu0 0
        %1818 = vmatpush1.bf16.msra.mxu0 %v1771
        %1819 = vmatprep.subr.bf16.mxu0 0
        %1820 = vmatpush2.bf16.msra.mxu0 %v1786
        %1821 = vmatprep.subr.bf16.mxu0 0
        %1822 = vmatpush2.bf16.msra.mxu0 %v1785
        %1823 = vmatprep.subr.bf16.mxu0 0
        %1824 = vmatpush2.bf16.msra.mxu0 %v1784
        %1825 = vmatprep.subr.bf16.mxu0 0
        %1826 = vmatpush2.bf16.msra.mxu0 %v1783
        %1827 = vmatprep.subr.bf16.mxu0 0
        %1828 = vmatpush2.bf16.msra.mxu0 %v1782
        %1829 = vmatprep.subr.bf16.mxu0 0
        %1830 = vmatpush2.bf16.msra.mxu0 %v1781
        %1831 = vmatprep.subr.bf16.mxu0 0
        %1832 = vmatpush2.bf16.msra.mxu0 %v1780
        %1833 = vmatprep.subr.bf16.mxu0 0
        %1834 = vmatpush2.bf16.msra.mxu0 %v1779
        %1835 = vmatprep.mubr.bf16.mxu0 %v1191
        %1836 = vmatmul.mubr.bf16.gmra.mxu0 %v1159
        %v1837 = vpop.f32.mrf.mxu0
        %v1838 = vadd.f32 %v1645, %v1837
        %v1839 = vpop.f32.mrf.mxu0
        %v1840 = vpop.f32.mrf.mxu0
        %v1841 = vadd.f32 %v1648, %v1840
        %v1842 = vpop.f32.mrf.mxu0
        %1843 = vmatprep.mubr.bf16.mxu0 %v1192
        %1844 = vmatmul.mubr.bf16.gmra.mxu0 %v1160
        %v1845 = vpop.f32.mrf.mxu0
        %v1846 = vadd.f32 %v1653, %v1845
        %v1847 = vpop.f32.mrf.mxu0
        %v1848 = vpop.f32.mrf.mxu0
        %v1849 = vadd.f32 %v1656, %v1848
        %v1850 = vpop.f32.mrf.mxu0
        %1851 = vmatprep.mubr.bf16.mxu0 %v1193
        %1852 = vmatmul.mubr.bf16.gmra.mxu0 %v1161
        %v1853 = vpop.f32.mrf.mxu0
        %v1854 = vadd.f32 %v1661, %v1853
        %v1855 = vpop.f32.mrf.mxu0
        %v1856 = vpop.f32.mrf.mxu0
        %v1857 = vadd.f32 %v1664, %v1856
        %v1858 = vpop.f32.mrf.mxu0
        %1859 = vmatprep.mubr.bf16.mxu0 %v1194
        %1860 = vmatmul.mubr.bf16.gmra.mxu0 %v1162
        %v1861 = vpop.f32.mrf.mxu0
        %v1862 = vadd.f32 %v1669, %v1861
        %v1863 = vpop.f32.mrf.mxu0
        %v1864 = vpop.f32.mrf.mxu0
        %v1865 = vadd.f32 %v1672, %v1864
        %v1866 = vpop.f32.mrf.mxu0
        %1867 = vmatprep.mubr.bf16.mxu0 %v1195
        %1868 = vmatmul.mubr.bf16.gmra.mxu0 %v1163
        %v1869 = vpop.f32.mrf.mxu0
        %v1870 = vadd.f32 %v1677, %v1869
        %v1871 = vpop.f32.mrf.mxu0
        %v1872 = vpop.f32.mrf.mxu0
        %v1873 = vadd.f32 %v1680, %v1872
        %v1874 = vpop.f32.mrf.mxu0
        %1875 = vmatprep.mubr.bf16.mxu0 %v1196
        %1876 = vmatmul.mubr.bf16.gmra.mxu0 %v1164
        %v1877 = vpop.f32.mrf.mxu0
        %v1878 = vadd.f32 %v1685, %v1877
        %v1879 = vpop.f32.mrf.mxu0
        %v1880 = vpop.f32.mrf.mxu0
        %v1881 = vadd.f32 %v1688, %v1880
        %v1882 = vpop.f32.mrf.mxu0
        %1883 = vmatprep.mubr.bf16.mxu0 %v1197
        %1884 = vmatmul.mubr.bf16.gmra.mxu0 %v1165
        %v1885 = vpop.f32.mrf.mxu0
        %v1886 = vadd.f32 %v1693, %v1885
        %v1887 = vpop.f32.mrf.mxu0
        %v1888 = vpop.f32.mrf.mxu0
        %v1889 = vadd.f32 %v1696, %v1888
        %v1890 = vpop.f32.mrf.mxu0
        %1891 = vmatprep.mubr.bf16.mxu0 %v1198
        %1892 = vmatmul.mubr.bf16.gmra.mxu0 %v1166
        %v1893 = vpop.f32.mrf.mxu0
        %v1894 = vadd.f32 %v1701, %v1893
        %v1895 = vpop.f32.mrf.mxu0
        %v1896 = vpop.f32.mrf.mxu0
        %v1897 = vadd.f32 %v1704, %v1896
        %v1898 = vpop.f32.mrf.mxu0
        %1899 = vdwg.mxu0
        %v1900 = vld [vmem:[%s602] sm:$0x8]
        %v1901 = vld [vmem:[%s602 + $0x8] sm:$0x7]
        %v1902 = vld [vmem:[%s602 + $0xc] sm:$0x8]
        %v1903 = vld [vmem:[%s602 + $0x14] sm:$0x7]
        %v1904 = vld [vmem:[%s602 + $0x18] sm:$0x8]
        %v1905 = vld [vmem:[%s602 + $0x20] sm:$0x7]
        %v1906 = vld [vmem:[%s602 + $0x24] sm:$0x8]
        %v1907 = vld [vmem:[%s602 + $0x2c] sm:$0x7]
        %v1908 = vld [vmem:[%s602 + $0x30] sm:$0x8]
        %v1909 = vld [vmem:[%s602 + $0x38] sm:$0x7]
        %v1910 = vld [vmem:[%s602 + $0x3c] sm:$0x8]
        %v1911 = vld [vmem:[%s602 + $0x44] sm:$0x7]
        %v1912 = vld [vmem:[%s602 + $0x48] sm:$0x8]
        %v1913 = vld [vmem:[%s602 + $0x50] sm:$0x7]
        %v1914 = vld [vmem:[%s602 + $0x54] sm:$0x8]
        %v1915 = vld [vmem:[%s602 + $0x5c] sm:$0x7]
        %v1932 = vrot.slane %v1900, 7
        %v1933 = vrot.slane %v1932, 4
        %v1934 = vrot.slane %v604, 7
        %v1935 = vsel %vm1273, %v1933, %v1934
        %v1936 = vrot.slane %v1934, 4
        %v1937 = vrot.slane %v1901, 7
        %v1938 = vsel %vm1273, %v1936, %v1937
        %v1939 = vrot.slane %v1902, 7
        %v1940 = vrot.slane %v1939, 4
        %v1941 = vrot.slane %v607, 7
        %v1942 = vsel %vm1273, %v1940, %v1941
        %v1943 = vrot.slane %v1941, 4
        %v1944 = vrot.slane %v1903, 7
        %v1945 = vsel %vm1273, %v1943, %v1944
        %v1946 = vrot.slane %v1904, 7
        %v1947 = vrot.slane %v1946, 4
        %v1948 = vrot.slane %v610, 7
        %v1949 = vsel %vm1273, %v1947, %v1948
        %v1950 = vrot.slane %v1948, 4
        %v1951 = vrot.slane %v1905, 7
        %v1952 = vsel %vm1273, %v1950, %v1951
        %v1953 = vrot.slane %v1906, 7
        %v1954 = vrot.slane %v1953, 4
        %v1955 = vrot.slane %v613, 7
        %v1956 = vsel %vm1273, %v1954, %v1955
        %v1957 = vrot.slane %v1955, 4
        %v1958 = vrot.slane %v1907, 7
        %v1959 = vsel %vm1273, %v1957, %v1958
        %v1960 = vrot.slane %v1908, 7
        %v1961 = vrot.slane %v1960, 4
        %v1962 = vrot.slane %v616, 7
        %v1963 = vsel %vm1273, %v1961, %v1962
        %v1964 = vrot.slane %v1962, 4
        %v1965 = vrot.slane %v1909, 7
        %v1966 = vsel %vm1273, %v1964, %v1965
        %v1967 = vrot.slane %v1910, 7
        %v1968 = vrot.slane %v1967, 4
        %v1969 = vrot.slane %v619, 7
        %v1970 = vsel %vm1273, %v1968, %v1969
        %v1971 = vrot.slane %v1969, 4
        %v1972 = vrot.slane %v1911, 7
        %v1973 = vsel %vm1273, %v1971, %v1972
        %v1974 = vrot.slane %v1912, 7
        %v1975 = vrot.slane %v1974, 4
        %v1976 = vrot.slane %v622, 7
        %v1977 = vsel %vm1273, %v1975, %v1976
        %v1978 = vrot.slane %v1976, 4
        %v1979 = vrot.slane %v1913, 7
        %v1980 = vsel %vm1273, %v1978, %v1979
        %v1981 = vrot.slane %v1914, 7
        %v1982 = vrot.slane %v1981, 4
        %v1983 = vrot.slane %v625, 7
        %v1984 = vsel %vm1273, %v1982, %v1983
        %v1985 = vrot.slane %v1983, 4
        %v1986 = vrot.slane %v1915, 7
        %v1987 = vsel %vm1273, %v1985, %v1986
        %v1988 = vunpack.c.l.b16 %v1935
        %v1989 = vunpack.c.l.b16 %v1938
        %v1990 = vunpack.c.l.b16 %v1942
        %v1991 = vunpack.c.l.b16 %v1945
        %v1992 = vunpack.c.l.b16 %v1949
        %v1993 = vunpack.c.l.b16 %v1952
        %v1994 = vunpack.c.l.b16 %v1956
        %v1995 = vunpack.c.l.b16 %v1959
        %v1996 = vunpack.c.l.b16 %v1963
        %v1997 = vunpack.c.l.b16 %v1966
        %v1998 = vunpack.c.l.b16 %v1970
        %v1999 = vunpack.c.l.b16 %v1973
        %v2000 = vunpack.c.l.b16 %v1977
        %v2001 = vunpack.c.l.b16 %v1980
        %v2002 = vunpack.c.l.b16 %v1984
        %v2003 = vunpack.c.l.b16 %v1987
        %v2004 = vpack.c.b16 %v1989, %v1988
        %v2005 = vpack.c.b16 %v1991, %v1990
        %v2006 = vpack.c.b16 %v1993, %v1992
        %v2007 = vpack.c.b16 %v1995, %v1994
        %v2008 = vpack.c.b16 %v1997, %v1996
        %v2009 = vpack.c.b16 %v1999, %v1998
        %v2010 = vpack.c.b16 %v2001, %v2000
        %v2011 = vpack.c.b16 %v2003, %v2002
        %v2020 = vld [vmem:[%s2 + $0x100] sm:$0xf]
        %v2021 = vld [vmem:[%s2 + $0x104] sm:$0xf]
        %v2022 = vld [vmem:[%s2 + $0x108] sm:$0xf]
        %v2023 = vld [vmem:[%s2 + $0x10c] sm:$0xf]
        %v2024 = vld [vmem:[%s2 + $0x110] sm:$0xf]
        %v2025 = vld [vmem:[%s2 + $0x114] sm:$0xf]
        %v2026 = vld [vmem:[%s2 + $0x118] sm:$0xf]
        %v2027 = vld [vmem:[%s2 + $0x11c] sm:$0xf]
        %v2028 = vld [vmem:[%s2 + $0x120] sm:$0xf]
        %v2029 = vld [vmem:[%s2 + $0x124] sm:$0xf]
        %v2030 = vld [vmem:[%s2 + $0x128] sm:$0xf]
        %v2031 = vld [vmem:[%s2 + $0x12c] sm:$0xf]
        %v2032 = vld [vmem:[%s2 + $0x130] sm:$0xf]
        %v2033 = vld [vmem:[%s2 + $0x134] sm:$0xf]
        %v2034 = vld [vmem:[%s2 + $0x138] sm:$0xf]
        %v2035 = vld [vmem:[%s2 + $0x13c] sm:$0xf]
        %v2036 = vld [vmem:[%s2 + $0x140] sm:$0xf]
        %v2037 = vld [vmem:[%s2 + $0x144] sm:$0xf]
        %v2038 = vld [vmem:[%s2 + $0x148] sm:$0xf]
        %v2039 = vld [vmem:[%s2 + $0x14c] sm:$0xf]
        %v2040 = vld [vmem:[%s2 + $0x150] sm:$0xf]
        %v2041 = vld [vmem:[%s2 + $0x154] sm:$0xf]
        %v2042 = vld [vmem:[%s2 + $0x158] sm:$0xf]
        %v2043 = vld [vmem:[%s2 + $0x15c] sm:$0xf]
        %v2044 = vld [vmem:[%s2 + $0x160] sm:$0xf]
        %v2045 = vld [vmem:[%s2 + $0x164] sm:$0xf]
        %v2046 = vld [vmem:[%s2 + $0x168] sm:$0xf]
        %v2047 = vld [vmem:[%s2 + $0x16c] sm:$0xf]
        %v2048 = vld [vmem:[%s2 + $0x170] sm:$0xf]
        %v2049 = vld [vmem:[%s2 + $0x174] sm:$0xf]
        %v2050 = vld [vmem:[%s2 + $0x178] sm:$0xf]
        %v2051 = vld [vmem:[%s2 + $0x17c] sm:$0xf]
        %v2084 = vunpack.c.l.b16 %v2020
        %v2085 = vunpack.c.l.b16 %v2021
        %v2086 = vunpack.c.l.b16 %v2022
        %v2087 = vunpack.c.l.b16 %v2023
        %v2088 = vunpack.c.l.b16 %v2024
        %v2089 = vunpack.c.l.b16 %v2025
        %v2090 = vunpack.c.l.b16 %v2026
        %v2091 = vunpack.c.l.b16 %v2027
        %v2092 = vunpack.c.l.b16 %v2028
        %v2093 = vunpack.c.l.b16 %v2029
        %v2094 = vunpack.c.l.b16 %v2030
        %v2095 = vunpack.c.l.b16 %v2031
        %v2096 = vunpack.c.l.b16 %v2032
        %v2097 = vunpack.c.l.b16 %v2033
        %v2098 = vunpack.c.l.b16 %v2034
        %v2099 = vunpack.c.l.b16 %v2035
        %v2100 = vunpack.c.l.b16 %v2036
        %v2101 = vunpack.c.l.b16 %v2037
        %v2102 = vunpack.c.l.b16 %v2038
        %v2103 = vunpack.c.l.b16 %v2039
        %v2104 = vunpack.c.l.b16 %v2040
        %v2105 = vunpack.c.l.b16 %v2041
        %v2106 = vunpack.c.l.b16 %v2042
        %v2107 = vunpack.c.l.b16 %v2043
        %v2108 = vunpack.c.l.b16 %v2044
        %v2109 = vunpack.c.l.b16 %v2045
        %v2110 = vunpack.c.l.b16 %v2046
        %v2111 = vunpack.c.l.b16 %v2047
        %v2112 = vunpack.c.l.b16 %v2048
        %v2113 = vunpack.c.l.b16 %v2049
        %v2114 = vunpack.c.l.b16 %v2050
        %v2115 = vunpack.c.l.b16 %v2051
        %v2116 = vpack.c.b16 %v2085, %v2084
        %v2117 = vpack.c.b16 %v2087, %v2086
        %v2118 = vpack.c.b16 %v2089, %v2088
        %v2119 = vpack.c.b16 %v2091, %v2090
        %v2120 = vpack.c.b16 %v2093, %v2092
        %v2121 = vpack.c.b16 %v2095, %v2094
        %v2122 = vpack.c.b16 %v2097, %v2096
        %v2123 = vpack.c.b16 %v2099, %v2098
        %v2124 = vpack.c.b16 %v2101, %v2100
        %v2125 = vpack.c.b16 %v2103, %v2102
        %v2126 = vpack.c.b16 %v2105, %v2104
        %v2127 = vpack.c.b16 %v2107, %v2106
        %v2128 = vpack.c.b16 %v2109, %v2108
        %v2129 = vpack.c.b16 %v2111, %v2110
        %v2130 = vpack.c.b16 %v2113, %v2112
        %v2131 = vpack.c.b16 %v2115, %v2114
        %2148 = vmatprep.subr.bf16.mxu0 0
        %2149 = vmatpush1.bf16.msra.mxu0 %v2123
        %2150 = vmatprep.subr.bf16.mxu0 0
        %2151 = vmatpush1.bf16.msra.mxu0 %v2122
        %2152 = vmatprep.subr.bf16.mxu0 0
        %2153 = vmatpush1.bf16.msra.mxu0 %v2121
        %2154 = vmatprep.subr.bf16.mxu0 0
        %2155 = vmatpush1.bf16.msra.mxu0 %v2120
        %2156 = vmatprep.subr.bf16.mxu0 0
        %2157 = vmatpush1.bf16.msra.mxu0 %v2119
        %2158 = vmatprep.subr.bf16.mxu0 0
        %2159 = vmatpush1.bf16.msra.mxu0 %v2118
        %2160 = vmatprep.subr.bf16.mxu0 0
        %2161 = vmatpush1.bf16.msra.mxu0 %v2117
        %2162 = vmatprep.subr.bf16.mxu0 0
        %2163 = vmatpush1.bf16.msra.mxu0 %v2116
        %2164 = vmatprep.subr.bf16.mxu0 0
        %2165 = vmatpush2.bf16.msra.mxu0 %v2131
        %2166 = vmatprep.subr.bf16.mxu0 0
        %2167 = vmatpush2.bf16.msra.mxu0 %v2130
        %2168 = vmatprep.subr.bf16.mxu0 0
        %2169 = vmatpush2.bf16.msra.mxu0 %v2129
        %2170 = vmatprep.subr.bf16.mxu0 0
        %2171 = vmatpush2.bf16.msra.mxu0 %v2128
        %2172 = vmatprep.subr.bf16.mxu0 0
        %2173 = vmatpush2.bf16.msra.mxu0 %v2127
        %2174 = vmatprep.subr.bf16.mxu0 0
        %2175 = vmatpush2.bf16.msra.mxu0 %v2126
        %2176 = vmatprep.subr.bf16.mxu0 0
        %2177 = vmatpush2.bf16.msra.mxu0 %v2125
        %2178 = vmatprep.subr.bf16.mxu0 0
        %2179 = vmatpush2.bf16.msra.mxu0 %v2124
        %2180 = vmatprep.mubr.bf16.mxu0 %v2004
        %2181 = vmatmul.mubr.bf16.gmra.mxu0 %v743
        %v2182 = vpop.f32.mrf.mxu0
        %v2183 = vadd.f32 0.0, %v2182
        %v2184 = vpop.f32.mrf.mxu0
        %v2185 = vpop.f32.mrf.mxu0
        %v2186 = vadd.f32 0.0, %v2185
        %v2187 = vpop.f32.mrf.mxu0
        %2188 = vmatprep.mubr.bf16.mxu0 %v2005
        %2189 = vmatmul.mubr.bf16.gmra.mxu0 %v744
        %v2190 = vpop.f32.mrf.mxu0
        %v2191 = vadd.f32 0.0, %v2190
        %v2192 = vpop.f32.mrf.mxu0
        %v2193 = vpop.f32.mrf.mxu0
        %v2194 = vadd.f32 0.0, %v2193
        %v2195 = vpop.f32.mrf.mxu0
        %2196 = vmatprep.mubr.bf16.mxu0 %v2006
        %2197 = vmatmul.mubr.bf16.gmra.mxu0 %v745
        %v2198 = vpop.f32.mrf.mxu0
        %v2199 = vadd.f32 0.0, %v2198
        %v2200 = vpop.f32.mrf.mxu0
        %v2201 = vpop.f32.mrf.mxu0
        %v2202 = vadd.f32 0.0, %v2201
        %v2203 = vpop.f32.mrf.mxu0
        %2204 = vmatprep.mubr.bf16.mxu0 %v2007
        %2205 = vmatmul.mubr.bf16.gmra.mxu0 %v746
        %v2206 = vpop.f32.mrf.mxu0
        %v2207 = vadd.f32 0.0, %v2206
        %v2208 = vpop.f32.mrf.mxu0
        %v2209 = vpop.f32.mrf.mxu0
        %v2210 = vadd.f32 0.0, %v2209
        %v2211 = vpop.f32.mrf.mxu0
        %2212 = vmatprep.mubr.bf16.mxu0 %v2008
        %2213 = vmatmul.mubr.bf16.gmra.mxu0 %v747
        %v2214 = vpop.f32.mrf.mxu0
        %v2215 = vadd.f32 0.0, %v2214
        %v2216 = vpop.f32.mrf.mxu0
        %v2217 = vpop.f32.mrf.mxu0
        %v2218 = vadd.f32 0.0, %v2217
        %v2219 = vpop.f32.mrf.mxu0
        %2220 = vmatprep.mubr.bf16.mxu0 %v2009
        %2221 = vmatmul.mubr.bf16.gmra.mxu0 %v748
        %v2222 = vpop.f32.mrf.mxu0
        %v2223 = vadd.f32 0.0, %v2222
        %v2224 = vpop.f32.mrf.mxu0
        %v2225 = vpop.f32.mrf.mxu0
        %v2226 = vadd.f32 0.0, %v2225
        %v2227 = vpop.f32.mrf.mxu0
        %2228 = vmatprep.mubr.bf16.mxu0 %v2010
        %2229 = vmatmul.mubr.bf16.gmra.mxu0 %v749
        %v2230 = vpop.f32.mrf.mxu0
        %v2231 = vadd.f32 0.0, %v2230
        %v2232 = vpop.f32.mrf.mxu0
        %v2233 = vpop.f32.mrf.mxu0
        %v2234 = vadd.f32 0.0, %v2233
        %v2235 = vpop.f32.mrf.mxu0
        %2236 = vmatprep.mubr.bf16.mxu0 %v2011
        %2237 = vmatmul.mubr.bf16.gmra.mxu0 %v750
        %v2238 = vpop.f32.mrf.mxu0
        %v2239 = vadd.f32 0.0, %v2238
        %v2240 = vpop.f32.mrf.mxu0
        %v2241 = vpop.f32.mrf.mxu0
        %v2242 = vadd.f32 0.0, %v2241
        %v2243 = vpop.f32.mrf.mxu0
        %2244 = vdwg.mxu0
        %v2245 = vadd.f32 %v1838, %v2183
        %v2246 = vadd.f32 %v1841, %v2186
        %v2247 = vadd.f32 %v1846, %v2191
        %v2248 = vadd.f32 %v1849, %v2194
        %v2249 = vadd.f32 %v1854, %v2199
        %v2250 = vadd.f32 %v1857, %v2202
        %v2251 = vadd.f32 %v1862, %v2207
        %v2252 = vadd.f32 %v1865, %v2210
        %v2253 = vadd.f32 %v1870, %v2215
        %v2254 = vadd.f32 %v1873, %v2218
        %v2255 = vadd.f32 %v1878, %v2223
        %v2256 = vadd.f32 %v1881, %v2226
        %v2257 = vadd.f32 %v1886, %v2231
        %v2258 = vadd.f32 %v1889, %v2234
        %v2259 = vadd.f32 %v1894, %v2239
        %v2260 = vadd.f32 %v1897, %v2242
        %s2261 = sadd.s32 %s296, 6
        %s2262 = smul.u32 %s2261, 3
        %s2263 = smul.addr %s2262, 4
        %s2264 = scalar_lea.vmem [#allocation2], %s2263
        %v2265 = vld [vmem:[%s2264] sm:$0xe]
        %v2266 = vld [vmem:[%s2264 + $0x4] sm:$0xf]
        %v2267 = vld [vmem:[%s2264 + $0x8] sm:$0x1]
        %v2268 = vld [vmem:[%s2264 + $0xc] sm:$0xe]
        %v2269 = vld [vmem:[%s2264 + $0x10] sm:$0xf]
        %v2270 = vld [vmem:[%s2264 + $0x14] sm:$0x1]
        %v2271 = vld [vmem:[%s2264 + $0x18] sm:$0xe]
        %v2272 = vld [vmem:[%s2264 + $0x1c] sm:$0xf]
        %v2273 = vld [vmem:[%s2264 + $0x20] sm:$0x1]
        %v2274 = vld [vmem:[%s2264 + $0x24] sm:$0xe]
        %v2275 = vld [vmem:[%s2264 + $0x28] sm:$0xf]
        %v2276 = vld [vmem:[%s2264 + $0x2c] sm:$0x1]
        %v2277 = vld [vmem:[%s2264 + $0x30] sm:$0xe]
        %v2278 = vld [vmem:[%s2264 + $0x34] sm:$0xf]
        %v2279 = vld [vmem:[%s2264 + $0x38] sm:$0x1]
        %v2280 = vld [vmem:[%s2264 + $0x3c] sm:$0xe]
        %v2281 = vld [vmem:[%s2264 + $0x40] sm:$0xf]
        %v2282 = vld [vmem:[%s2264 + $0x44] sm:$0x1]
        %v2283 = vld [vmem:[%s2264 + $0x48] sm:$0xe]
        %v2284 = vld [vmem:[%s2264 + $0x4c] sm:$0xf]
        %v2285 = vld [vmem:[%s2264 + $0x50] sm:$0x1]
        %v2286 = vld [vmem:[%s2264 + $0x54] sm:$0xe]
        %v2287 = vld [vmem:[%s2264 + $0x58] sm:$0xf]
        %v2288 = vld [vmem:[%s2264 + $0x5c] sm:$0x1]
        %v2313 = vrot.slane %v2265, 5
        %v2314 = vrot.slane %v2313, 4
        %v2315 = vrot.slane %v2266, 5
        %v2316 = vsel %vm998, %v2314, %v2315
        %v2317 = vrot.slane %v2315, 4
        %v2318 = vrot.slane %v2267, 5
        %v2319 = vsel %vm998, %v2317, %v2318
        %v2320 = vrot.slane %v2268, 5
        %v2321 = vrot.slane %v2320, 4
        %v2322 = vrot.slane %v2269, 5
        %v2323 = vsel %vm998, %v2321, %v2322
        %v2324 = vrot.slane %v2322, 4
        %v2325 = vrot.slane %v2270, 5
        %v2326 = vsel %vm998, %v2324, %v2325
        %v2327 = vrot.slane %v2271, 5
        %v2328 = vrot.slane %v2327, 4
        %v2329 = vrot.slane %v2272, 5
        %v2330 = vsel %vm998, %v2328, %v2329
        %v2331 = vrot.slane %v2329, 4
        %v2332 = vrot.slane %v2273, 5
        %v2333 = vsel %vm998, %v2331, %v2332
        %v2334 = vrot.slane %v2274, 5
        %v2335 = vrot.slane %v2334, 4
        %v2336 = vrot.slane %v2275, 5
        %v2337 = vsel %vm998, %v2335, %v2336
        %v2338 = vrot.slane %v2336, 4
        %v2339 = vrot.slane %v2276, 5
        %v2340 = vsel %vm998, %v2338, %v2339
        %v2341 = vrot.slane %v2277, 5
        %v2342 = vrot.slane %v2341, 4
        %v2343 = vrot.slane %v2278, 5
        %v2344 = vsel %vm998, %v2342, %v2343
        %v2345 = vrot.slane %v2343, 4
        %v2346 = vrot.slane %v2279, 5
        %v2347 = vsel %vm998, %v2345, %v2346
        %v2348 = vrot.slane %v2280, 5
        %v2349 = vrot.slane %v2348, 4
        %v2350 = vrot.slane %v2281, 5
        %v2351 = vsel %vm998, %v2349, %v2350
        %v2352 = vrot.slane %v2350, 4
        %v2353 = vrot.slane %v2282, 5
        %v2354 = vsel %vm998, %v2352, %v2353
        %v2355 = vrot.slane %v2283, 5
        %v2356 = vrot.slane %v2355, 4
        %v2357 = vrot.slane %v2284, 5
        %v2358 = vsel %vm998, %v2356, %v2357
        %v2359 = vrot.slane %v2357, 4
        %v2360 = vrot.slane %v2285, 5
        %v2361 = vsel %vm998, %v2359, %v2360
        %v2362 = vrot.slane %v2286, 5
        %v2363 = vrot.slane %v2362, 4
        %v2364 = vrot.slane %v2287, 5
        %v2365 = vsel %vm998, %v2363, %v2364
        %v2366 = vrot.slane %v2364, 4
        %v2367 = vrot.slane %v2288, 5
        %v2368 = vsel %vm998, %v2366, %v2367
        %v2369 = vld [vmem:[%s2264] sm:$0xc]
        %v2370 = vld [vmem:[%s2264 + $0x8] sm:$0x3]
        %v2371 = vld [vmem:[%s2264 + $0xc] sm:$0xc]
        %v2372 = vld [vmem:[%s2264 + $0x14] sm:$0x3]
        %v2373 = vld [vmem:[%s2264 + $0x18] sm:$0xc]
        %v2374 = vld [vmem:[%s2264 + $0x20] sm:$0x3]
        %v2375 = vld [vmem:[%s2264 + $0x24] sm:$0xc]
        %v2376 = vld [vmem:[%s2264 + $0x2c] sm:$0x3]
        %v2377 = vld [vmem:[%s2264 + $0x30] sm:$0xc]
        %v2378 = vld [vmem:[%s2264 + $0x38] sm:$0x3]
        %v2379 = vld [vmem:[%s2264 + $0x3c] sm:$0xc]
        %v2380 = vld [vmem:[%s2264 + $0x44] sm:$0x3]
        %v2381 = vld [vmem:[%s2264 + $0x48] sm:$0xc]
        %v2382 = vld [vmem:[%s2264 + $0x50] sm:$0x3]
        %v2383 = vld [vmem:[%s2264 + $0x54] sm:$0xc]
        %v2384 = vld [vmem:[%s2264 + $0x5c] sm:$0x3]
        %v2401 = vrot.slane %v2369, 6
        %v2402 = vrot.slane %v2401, 4
        %v2403 = vrot.slane %v2266, 6
        %v2404 = vsel %vm421, %v2402, %v2403
        %v2405 = vrot.slane %v2403, 4
        %v2406 = vrot.slane %v2370, 6
        %v2407 = vsel %vm421, %v2405, %v2406
        %v2408 = vrot.slane %v2371, 6
        %v2409 = vrot.slane %v2408, 4
        %v2410 = vrot.slane %v2269, 6
        %v2411 = vsel %vm421, %v2409, %v2410
        %v2412 = vrot.slane %v2410, 4
        %v2413 = vrot.slane %v2372, 6
        %v2414 = vsel %vm421, %v2412, %v2413
        %v2415 = vrot.slane %v2373, 6
        %v2416 = vrot.slane %v2415, 4
        %v2417 = vrot.slane %v2272, 6
        %v2418 = vsel %vm421, %v2416, %v2417
        %v2419 = vrot.slane %v2417, 4
        %v2420 = vrot.slane %v2374, 6
        %v2421 = vsel %vm421, %v2419, %v2420
        %v2422 = vrot.slane %v2375, 6
        %v2423 = vrot.slane %v2422, 4
        %v2424 = vrot.slane %v2275, 6
        %v2425 = vsel %vm421, %v2423, %v2424
        %v2426 = vrot.slane %v2424, 4
        %v2427 = vrot.slane %v2376, 6
        %v2428 = vsel %vm421, %v2426, %v2427
        %v2429 = vrot.slane %v2377, 6
        %v2430 = vrot.slane %v2429, 4
        %v2431 = vrot.slane %v2278, 6
        %v2432 = vsel %vm421, %v2430, %v2431
        %v2433 = vrot.slane %v2431, 4
        %v2434 = vrot.slane %v2378, 6
        %v2435 = vsel %vm421, %v2433, %v2434
        %v2436 = vrot.slane %v2379, 6
        %v2437 = vrot.slane %v2436, 4
        %v2438 = vrot.slane %v2281, 6
        %v2439 = vsel %vm421, %v2437, %v2438
        %v2440 = vrot.slane %v2438, 4
        %v2441 = vrot.slane %v2380, 6
        %v2442 = vsel %vm421, %v2440, %v2441
        %v2443 = vrot.slane %v2381, 6
        %v2444 = vrot.slane %v2443, 4
        %v2445 = vrot.slane %v2284, 6
        %v2446 = vsel %vm421, %v2444, %v2445
        %v2447 = vrot.slane %v2445, 4
        %v2448 = vrot.slane %v2382, 6
        %v2449 = vsel %vm421, %v2447, %v2448
        %v2450 = vrot.slane %v2383, 6
        %v2451 = vrot.slane %v2450, 4
        %v2452 = vrot.slane %v2287, 6
        %v2453 = vsel %vm421, %v2451, %v2452
        %v2454 = vrot.slane %v2452, 4
        %v2455 = vrot.slane %v2384, 6
        %v2456 = vsel %vm421, %v2454, %v2455
        %v2457 = vunpack.c.l.b16 %v2316
        %v2458 = vunpack.c.l.b16 %v2319
        %v2459 = vunpack.c.l.b16 %v2323
        %v2460 = vunpack.c.l.b16 %v2326
        %v2461 = vunpack.c.l.b16 %v2330
        %v2462 = vunpack.c.l.b16 %v2333
        %v2463 = vunpack.c.l.b16 %v2337
        %v2464 = vunpack.c.l.b16 %v2340
        %v2465 = vunpack.c.l.b16 %v2344
        %v2466 = vunpack.c.l.b16 %v2347
        %v2467 = vunpack.c.l.b16 %v2351
        %v2468 = vunpack.c.l.b16 %v2354
        %v2469 = vunpack.c.l.b16 %v2358
        %v2470 = vunpack.c.l.b16 %v2361
        %v2471 = vunpack.c.l.b16 %v2365
        %v2472 = vunpack.c.l.b16 %v2368
        %v2473 = vpack.c.b16 %v2458, %v2457
        %v2474 = vpack.c.b16 %v2460, %v2459
        %v2475 = vpack.c.b16 %v2462, %v2461
        %v2476 = vpack.c.b16 %v2464, %v2463
        %v2477 = vpack.c.b16 %v2466, %v2465
        %v2478 = vpack.c.b16 %v2468, %v2467
        %v2479 = vpack.c.b16 %v2470, %v2469
        %v2480 = vpack.c.b16 %v2472, %v2471
        %v2489 = vunpack.c.l.b16 %v2404
        %v2490 = vunpack.c.l.b16 %v2407
        %v2491 = vunpack.c.l.b16 %v2411
        %v2492 = vunpack.c.l.b16 %v2414
        %v2493 = vunpack.c.l.b16 %v2418
        %v2494 = vunpack.c.l.b16 %v2421
        %v2495 = vunpack.c.l.b16 %v2425
        %v2496 = vunpack.c.l.b16 %v2428
        %v2497 = vunpack.c.l.b16 %v2432
        %v2498 = vunpack.c.l.b16 %v2435
        %v2499 = vunpack.c.l.b16 %v2439
        %v2500 = vunpack.c.l.b16 %v2442
        %v2501 = vunpack.c.l.b16 %v2446
        %v2502 = vunpack.c.l.b16 %v2449
        %v2503 = vunpack.c.l.b16 %v2453
        %v2504 = vunpack.c.l.b16 %v2456
        %v2505 = vpack.c.b16 %v2490, %v2489
        %v2506 = vpack.c.b16 %v2492, %v2491
        %v2507 = vpack.c.b16 %v2494, %v2493
        %v2508 = vpack.c.b16 %v2496, %v2495
        %v2509 = vpack.c.b16 %v2498, %v2497
        %v2510 = vpack.c.b16 %v2500, %v2499
        %v2511 = vpack.c.b16 %v2502, %v2501
        %v2512 = vpack.c.b16 %v2504, %v2503
        %v2521 = vld [vmem:[%s2 + $0x180] sm:$0xf]
        %v2522 = vld [vmem:[%s2 + $0x184] sm:$0xf]
        %v2523 = vld [vmem:[%s2 + $0x188] sm:$0xf]
        %v2524 = vld [vmem:[%s2 + $0x18c] sm:$0xf]
        %v2525 = vld [vmem:[%s2 + $0x190] sm:$0xf]
        %v2526 = vld [vmem:[%s2 + $0x194] sm:$0xf]
        %v2527 = vld [vmem:[%s2 + $0x198] sm:$0xf]
        %v2528 = vld [vmem:[%s2 + $0x19c] sm:$0xf]
        %v2529 = vld [vmem:[%s2 + $0x1a0] sm:$0xf]
        %v2530 = vld [vmem:[%s2 + $0x1a4] sm:$0xf]
        %v2531 = vld [vmem:[%s2 + $0x1a8] sm:$0xf]
        %v2532 = vld [vmem:[%s2 + $0x1ac] sm:$0xf]
        %v2533 = vld [vmem:[%s2 + $0x1b0] sm:$0xf]
        %v2534 = vld [vmem:[%s2 + $0x1b4] sm:$0xf]
        %v2535 = vld [vmem:[%s2 + $0x1b8] sm:$0xf]
        %v2536 = vld [vmem:[%s2 + $0x1bc] sm:$0xf]
        %v2537 = vld [vmem:[%s2 + $0x1c0] sm:$0xf]
        %v2538 = vld [vmem:[%s2 + $0x1c4] sm:$0xf]
        %v2539 = vld [vmem:[%s2 + $0x1c8] sm:$0xf]
        %v2540 = vld [vmem:[%s2 + $0x1cc] sm:$0xf]
        %v2541 = vld [vmem:[%s2 + $0x1d0] sm:$0xf]
        %v2542 = vld [vmem:[%s2 + $0x1d4] sm:$0xf]
        %v2543 = vld [vmem:[%s2 + $0x1d8] sm:$0xf]
        %v2544 = vld [vmem:[%s2 + $0x1dc] sm:$0xf]
        %v2545 = vld [vmem:[%s2 + $0x1e0] sm:$0xf]
        %v2546 = vld [vmem:[%s2 + $0x1e4] sm:$0xf]
        %v2547 = vld [vmem:[%s2 + $0x1e8] sm:$0xf]
        %v2548 = vld [vmem:[%s2 + $0x1ec] sm:$0xf]
        %v2549 = vld [vmem:[%s2 + $0x1f0] sm:$0xf]
        %v2550 = vld [vmem:[%s2 + $0x1f4] sm:$0xf]
        %v2551 = vld [vmem:[%s2 + $0x1f8] sm:$0xf]
        %v2552 = vld [vmem:[%s2 + $0x1fc] sm:$0xf]
        %v2585 = vunpack.c.l.b16 %v2521
        %v2586 = vunpack.c.l.b16 %v2522
        %v2587 = vunpack.c.l.b16 %v2523
        %v2588 = vunpack.c.l.b16 %v2524
        %v2589 = vunpack.c.l.b16 %v2525
        %v2590 = vunpack.c.l.b16 %v2526
        %v2591 = vunpack.c.l.b16 %v2527
        %v2592 = vunpack.c.l.b16 %v2528
        %v2593 = vunpack.c.l.b16 %v2529
        %v2594 = vunpack.c.l.b16 %v2530
        %v2595 = vunpack.c.l.b16 %v2531
        %v2596 = vunpack.c.l.b16 %v2532
        %v2597 = vunpack.c.l.b16 %v2533
        %v2598 = vunpack.c.l.b16 %v2534
        %v2599 = vunpack.c.l.b16 %v2535
        %v2600 = vunpack.c.l.b16 %v2536
        %v2601 = vunpack.c.l.b16 %v2537
        %v2602 = vunpack.c.l.b16 %v2538
        %v2603 = vunpack.c.l.b16 %v2539
        %v2604 = vunpack.c.l.b16 %v2540
        %v2605 = vunpack.c.l.b16 %v2541
        %v2606 = vunpack.c.l.b16 %v2542
        %v2607 = vunpack.c.l.b16 %v2543
        %v2608 = vunpack.c.l.b16 %v2544
        %v2609 = vunpack.c.l.b16 %v2545
        %v2610 = vunpack.c.l.b16 %v2546
        %v2611 = vunpack.c.l.b16 %v2547
        %v2612 = vunpack.c.l.b16 %v2548
        %v2613 = vunpack.c.l.b16 %v2549
        %v2614 = vunpack.c.l.b16 %v2550
        %v2615 = vunpack.c.l.b16 %v2551
        %v2616 = vunpack.c.l.b16 %v2552
        %v2617 = vpack.c.b16 %v2586, %v2585
        %v2618 = vpack.c.b16 %v2588, %v2587
        %v2619 = vpack.c.b16 %v2590, %v2589
        %v2620 = vpack.c.b16 %v2592, %v2591
        %v2621 = vpack.c.b16 %v2594, %v2593
        %v2622 = vpack.c.b16 %v2596, %v2595
        %v2623 = vpack.c.b16 %v2598, %v2597
        %v2624 = vpack.c.b16 %v2600, %v2599
        %v2625 = vpack.c.b16 %v2602, %v2601
        %v2626 = vpack.c.b16 %v2604, %v2603
        %v2627 = vpack.c.b16 %v2606, %v2605
        %v2628 = vpack.c.b16 %v2608, %v2607
        %v2629 = vpack.c.b16 %v2610, %v2609
        %v2630 = vpack.c.b16 %v2612, %v2611
        %v2631 = vpack.c.b16 %v2614, %v2613
        %v2632 = vpack.c.b16 %v2616, %v2615
        %2649 = vmatprep.subr.bf16.mxu0 0
        %2650 = vmatpush1.bf16.msra.mxu0 %v2624
        %2651 = vmatprep.subr.bf16.mxu0 0
        %2652 = vmatpush1.bf16.msra.mxu0 %v2623
        %2653 = vmatprep.subr.bf16.mxu0 0
        %2654 = vmatpush1.bf16.msra.mxu0 %v2622
        %2655 = vmatprep.subr.bf16.mxu0 0
        %2656 = vmatpush1.bf16.msra.mxu0 %v2621
        %2657 = vmatprep.subr.bf16.mxu0 0
        %2658 = vmatpush1.bf16.msra.mxu0 %v2620
        %2659 = vmatprep.subr.bf16.mxu0 0
        %2660 = vmatpush1.bf16.msra.mxu0 %v2619
        %2661 = vmatprep.subr.bf16.mxu0 0
        %2662 = vmatpush1.bf16.msra.mxu0 %v2618
        %2663 = vmatprep.subr.bf16.mxu0 0
        %2664 = vmatpush1.bf16.msra.mxu0 %v2617
        %2665 = vmatprep.subr.bf16.mxu0 0
        %2666 = vmatpush2.bf16.msra.mxu0 %v2632
        %2667 = vmatprep.subr.bf16.mxu0 0
        %2668 = vmatpush2.bf16.msra.mxu0 %v2631
        %2669 = vmatprep.subr.bf16.mxu0 0
        %2670 = vmatpush2.bf16.msra.mxu0 %v2630
        %2671 = vmatprep.subr.bf16.mxu0 0
        %2672 = vmatpush2.bf16.msra.mxu0 %v2629
        %2673 = vmatprep.subr.bf16.mxu0 0
        %2674 = vmatpush2.bf16.msra.mxu0 %v2628
        %2675 = vmatprep.subr.bf16.mxu0 0
        %2676 = vmatpush2.bf16.msra.mxu0 %v2627
        %2677 = vmatprep.subr.bf16.mxu0 0
        %2678 = vmatpush2.bf16.msra.mxu0 %v2626
        %2679 = vmatprep.subr.bf16.mxu0 0
        %2680 = vmatpush2.bf16.msra.mxu0 %v2625
        %2681 = vmatprep.mubr.bf16.mxu0 %v2505
        %2682 = vmatmul.mubr.bf16.gmra.mxu0 %v2473
        %v2683 = vpop.f32.mrf.mxu0
        %v2684 = vadd.f32 0.0, %v2683
        %v2685 = vpop.f32.mrf.mxu0
        %v2686 = vpop.f32.mrf.mxu0
        %v2687 = vadd.f32 0.0, %v2686
        %v2688 = vpop.f32.mrf.mxu0
        %2689 = vmatprep.mubr.bf16.mxu0 %v2506
        %2690 = vmatmul.mubr.bf16.gmra.mxu0 %v2474
        %v2691 = vpop.f32.mrf.mxu0
        %v2692 = vadd.f32 0.0, %v2691
        %v2693 = vpop.f32.mrf.mxu0
        %v2694 = vpop.f32.mrf.mxu0
        %v2695 = vadd.f32 0.0, %v2694
        %v2696 = vpop.f32.mrf.mxu0
        %2697 = vmatprep.mubr.bf16.mxu0 %v2507
        %2698 = vmatmul.mubr.bf16.gmra.mxu0 %v2475
        %v2699 = vpop.f32.mrf.mxu0
        %v2700 = vadd.f32 0.0, %v2699
        %v2701 = vpop.f32.mrf.mxu0
        %v2702 = vpop.f32.mrf.mxu0
        %v2703 = vadd.f32 0.0, %v2702
        %v2704 = vpop.f32.mrf.mxu0
        %2705 = vmatprep.mubr.bf16.mxu0 %v2508
        %2706 = vmatmul.mubr.bf16.gmra.mxu0 %v2476
        %v2707 = vpop.f32.mrf.mxu0
        %v2708 = vadd.f32 0.0, %v2707
        %v2709 = vpop.f32.mrf.mxu0
        %v2710 = vpop.f32.mrf.mxu0
        %v2711 = vadd.f32 0.0, %v2710
        %v2712 = vpop.f32.mrf.mxu0
        %2713 = vmatprep.mubr.bf16.mxu0 %v2509
        %2714 = vmatmul.mubr.bf16.gmra.mxu0 %v2477
        %v2715 = vpop.f32.mrf.mxu0
        %v2716 = vadd.f32 0.0, %v2715
        %v2717 = vpop.f32.mrf.mxu0
        %v2718 = vpop.f32.mrf.mxu0
        %v2719 = vadd.f32 0.0, %v2718
        %v2720 = vpop.f32.mrf.mxu0
        %2721 = vmatprep.mubr.bf16.mxu0 %v2510
        %2722 = vmatmul.mubr.bf16.gmra.mxu0 %v2478
        %v2723 = vpop.f32.mrf.mxu0
        %v2724 = vadd.f32 0.0, %v2723
        %v2725 = vpop.f32.mrf.mxu0
        %v2726 = vpop.f32.mrf.mxu0
        %v2727 = vadd.f32 0.0, %v2726
        %v2728 = vpop.f32.mrf.mxu0
        %2729 = vmatprep.mubr.bf16.mxu0 %v2511
        %2730 = vmatmul.mubr.bf16.gmra.mxu0 %v2479
        %v2731 = vpop.f32.mrf.mxu0
        %v2732 = vadd.f32 0.0, %v2731
        %v2733 = vpop.f32.mrf.mxu0
        %v2734 = vpop.f32.mrf.mxu0
        %v2735 = vadd.f32 0.0, %v2734
        %v2736 = vpop.f32.mrf.mxu0
        %2737 = vmatprep.mubr.bf16.mxu0 %v2512
        %2738 = vmatmul.mubr.bf16.gmra.mxu0 %v2480
        %v2739 = vpop.f32.mrf.mxu0
        %v2740 = vadd.f32 0.0, %v2739
        %v2741 = vpop.f32.mrf.mxu0
        %v2742 = vpop.f32.mrf.mxu0
        %v2743 = vadd.f32 0.0, %v2742
        %v2744 = vpop.f32.mrf.mxu0
        %2745 = vdwg.mxu0
        %v2746 = vadd.f32 %v2245, %v2684
        %v2747 = vadd.f32 %v2246, %v2687
        %v2748 = vadd.f32 %v2247, %v2692
        %v2749 = vadd.f32 %v2248, %v2695
        %v2750 = vadd.f32 %v2249, %v2700
        %v2751 = vadd.f32 %v2250, %v2703
        %v2752 = vadd.f32 %v2251, %v2708
        %v2753 = vadd.f32 %v2252, %v2711
        %v2754 = vadd.f32 %v2253, %v2716
        %v2755 = vadd.f32 %v2254, %v2719
        %v2756 = vadd.f32 %v2255, %v2724
        %v2757 = vadd.f32 %v2256, %v2727
        %v2758 = vadd.f32 %v2257, %v2732
        %v2759 = vadd.f32 %v2258, %v2735
        %v2760 = vadd.f32 %v2259, %v2740
        %v2761 = vadd.f32 %v2260, %v2743
        %v2762 = vld [vmem:[%s2264] sm:$0x8]
        %v2763 = vld [vmem:[%s2264 + $0x8] sm:$0x7]
        %v2764 = vld [vmem:[%s2264 + $0xc] sm:$0x8]
        %v2765 = vld [vmem:[%s2264 + $0x14] sm:$0x7]
        %v2766 = vld [vmem:[%s2264 + $0x18] sm:$0x8]
        %v2767 = vld [vmem:[%s2264 + $0x20] sm:$0x7]
        %v2768 = vld [vmem:[%s2264 + $0x24] sm:$0x8]
        %v2769 = vld [vmem:[%s2264 + $0x2c] sm:$0x7]
        %v2770 = vld [vmem:[%s2264 + $0x30] sm:$0x8]
        %v2771 = vld [vmem:[%s2264 + $0x38] sm:$0x7]
        %v2772 = vld [vmem:[%s2264 + $0x3c] sm:$0x8]
        %v2773 = vld [vmem:[%s2264 + $0x44] sm:$0x7]
        %v2774 = vld [vmem:[%s2264 + $0x48] sm:$0x8]
        %v2775 = vld [vmem:[%s2264 + $0x50] sm:$0x7]
        %v2776 = vld [vmem:[%s2264 + $0x54] sm:$0x8]
        %v2777 = vld [vmem:[%s2264 + $0x5c] sm:$0x7]
        %v2794 = vrot.slane %v2762, 7
        %v2795 = vrot.slane %v2794, 4
        %v2796 = vrot.slane %v2266, 7
        %v2797 = vsel %vm1273, %v2795, %v2796
        %v2798 = vrot.slane %v2796, 4
        %v2799 = vrot.slane %v2763, 7
        %v2800 = vsel %vm1273, %v2798, %v2799
        %v2801 = vrot.slane %v2764, 7
        %v2802 = vrot.slane %v2801, 4
        %v2803 = vrot.slane %v2269, 7
        %v2804 = vsel %vm1273, %v2802, %v2803
        %v2805 = vrot.slane %v2803, 4
        %v2806 = vrot.slane %v2765, 7
        %v2807 = vsel %vm1273, %v2805, %v2806
        %v2808 = vrot.slane %v2766, 7
        %v2809 = vrot.slane %v2808, 4
        %v2810 = vrot.slane %v2272, 7
        %v2811 = vsel %vm1273, %v2809, %v2810
        %v2812 = vrot.slane %v2810, 4
        %v2813 = vrot.slane %v2767, 7
        %v2814 = vsel %vm1273, %v2812, %v2813
        %v2815 = vrot.slane %v2768, 7
        %v2816 = vrot.slane %v2815, 4
        %v2817 = vrot.slane %v2275, 7
        %v2818 = vsel %vm1273, %v2816, %v2817
        %v2819 = vrot.slane %v2817, 4
        %v2820 = vrot.slane %v2769, 7
        %v2821 = vsel %vm1273, %v2819, %v2820
        %v2822 = vrot.slane %v2770, 7
        %v2823 = vrot.slane %v2822, 4
        %v2824 = vrot.slane %v2278, 7
        %v2825 = vsel %vm1273, %v2823, %v2824
        %v2826 = vrot.slane %v2824, 4
        %v2827 = vrot.slane %v2771, 7
        %v2828 = vsel %vm1273, %v2826, %v2827
        %v2829 = vrot.slane %v2772, 7
        %v2830 = vrot.slane %v2829, 4
        %v2831 = vrot.slane %v2281, 7
        %v2832 = vsel %vm1273, %v2830, %v2831
        %v2833 = vrot.slane %v2831, 4
        %v2834 = vrot.slane %v2773, 7
        %v2835 = vsel %vm1273, %v2833, %v2834
        %v2836 = vrot.slane %v2774, 7
        %v2837 = vrot.slane %v2836, 4
        %v2838 = vrot.slane %v2284, 7
        %v2839 = vsel %vm1273, %v2837, %v2838
        %v2840 = vrot.slane %v2838, 4
        %v2841 = vrot.slane %v2775, 7
        %v2842 = vsel %vm1273, %v2840, %v2841
        %v2843 = vrot.slane %v2776, 7
        %v2844 = vrot.slane %v2843, 4
        %v2845 = vrot.slane %v2287, 7
        %v2846 = vsel %vm1273, %v2844, %v2845
        %v2847 = vrot.slane %v2845, 4
        %v2848 = vrot.slane %v2777, 7
        %v2849 = vsel %vm1273, %v2847, %v2848
        %v2850 = vld [vmem:[%s2 + $0x200] sm:$0xf]
        %v2851 = vld [vmem:[%s2 + $0x204] sm:$0xf]
        %v2852 = vld [vmem:[%s2 + $0x208] sm:$0xf]
        %v2853 = vld [vmem:[%s2 + $0x20c] sm:$0xf]
        %v2854 = vld [vmem:[%s2 + $0x210] sm:$0xf]
        %v2855 = vld [vmem:[%s2 + $0x214] sm:$0xf]
        %v2856 = vld [vmem:[%s2 + $0x218] sm:$0xf]
        %v2857 = vld [vmem:[%s2 + $0x21c] sm:$0xf]
        %v2858 = vld [vmem:[%s2 + $0x220] sm:$0xf]
        %v2859 = vld [vmem:[%s2 + $0x224] sm:$0xf]
        %v2860 = vld [vmem:[%s2 + $0x228] sm:$0xf]
        %v2861 = vld [vmem:[%s2 + $0x22c] sm:$0xf]
        %v2862 = vld [vmem:[%s2 + $0x230] sm:$0xf]
        %v2863 = vld [vmem:[%s2 + $0x234] sm:$0xf]
        %v2864 = vld [vmem:[%s2 + $0x238] sm:$0xf]
        %v2865 = vld [vmem:[%s2 + $0x23c] sm:$0xf]
        %v2866 = vunpack.c.l.b16 %v2797
        %v2867 = vunpack.c.l.b16 %v2800
        %v2868 = vunpack.c.l.b16 %v2804
        %v2869 = vunpack.c.l.b16 %v2807
        %v2870 = vunpack.c.l.b16 %v2811
        %v2871 = vunpack.c.l.b16 %v2814
        %v2872 = vunpack.c.l.b16 %v2818
        %v2873 = vunpack.c.l.b16 %v2821
        %v2874 = vunpack.c.l.b16 %v2825
        %v2875 = vunpack.c.l.b16 %v2828
        %v2876 = vunpack.c.l.b16 %v2832
        %v2877 = vunpack.c.l.b16 %v2835
        %v2878 = vunpack.c.l.b16 %v2839
        %v2879 = vunpack.c.l.b16 %v2842
        %v2880 = vunpack.c.l.b16 %v2846
        %v2881 = vunpack.c.l.b16 %v2849
        %v2882 = vpack.c.b16 %v2867, %v2866
        %v2883 = vpack.c.b16 %v2869, %v2868
        %v2884 = vpack.c.b16 %v2871, %v2870
        %v2885 = vpack.c.b16 %v2873, %v2872
        %v2886 = vpack.c.b16 %v2875, %v2874
        %v2887 = vpack.c.b16 %v2877, %v2876
        %v2888 = vpack.c.b16 %v2879, %v2878
        %v2889 = vpack.c.b16 %v2881, %v2880
        %v2914 = vunpack.c.l.b16 %v2850
        %v2915 = vunpack.c.l.b16 %v2851
        %v2916 = vunpack.c.l.b16 %v2852
        %v2917 = vunpack.c.l.b16 %v2853
        %v2918 = vunpack.c.l.b16 %v2854
        %v2919 = vunpack.c.l.b16 %v2855
        %v2920 = vunpack.c.l.b16 %v2856
        %v2921 = vunpack.c.l.b16 %v2857
        %v2922 = vunpack.c.l.b16 %v2858
        %v2923 = vunpack.c.l.b16 %v2859
        %v2924 = vunpack.c.l.b16 %v2860
        %v2925 = vunpack.c.l.b16 %v2861
        %v2926 = vunpack.c.l.b16 %v2862
        %v2927 = vunpack.c.l.b16 %v2863
        %v2928 = vunpack.c.l.b16 %v2864
        %v2929 = vunpack.c.l.b16 %v2865
        %v2930 = vpack.c.b16 %v2915, %v2914
        %v2931 = vpack.c.b16 %v2917, %v2916
        %v2932 = vpack.c.b16 %v2919, %v2918
        %v2933 = vpack.c.b16 %v2921, %v2920
        %v2934 = vpack.c.b16 %v2923, %v2922
        %v2935 = vpack.c.b16 %v2925, %v2924
        %v2936 = vpack.c.b16 %v2927, %v2926
        %v2937 = vpack.c.b16 %v2929, %v2928
        %2946 = vmatprep.subr.bf16.mxu0 0
        %2947 = vmatpush1.bf16.msra.mxu0 %v2937
        %2948 = vmatprep.subr.bf16.mxu0 0
        %2949 = vmatpush1.bf16.msra.mxu0 %v2936
        %2950 = vmatprep.subr.bf16.mxu0 0
        %2951 = vmatpush1.bf16.msra.mxu0 %v2935
        %2952 = vmatprep.subr.bf16.mxu0 0
        %2953 = vmatpush1.bf16.msra.mxu0 %v2934
        %2954 = vmatprep.subr.bf16.mxu0 0
        %2955 = vmatpush1.bf16.msra.mxu0 %v2933
        %2956 = vmatprep.subr.bf16.mxu0 0
        %2957 = vmatpush1.bf16.msra.mxu0 %v2932
        %2958 = vmatprep.subr.bf16.mxu0 0
        %2959 = vmatpush1.bf16.msra.mxu0 %v2931
        %2960 = vmatprep.subr.bf16.mxu0 0
        %2961 = vmatpush1.bf16.msra.mxu0 %v2930
        %2962 = vmatprep.subr.bf16.mxu0 0
        %2963 = vmatpush2.bf16.msra.mxu0 0
        %2964 = vmatprep.subr.bf16.mxu0 0
        %2965 = vmatpush2.bf16.msra.mxu0 0
        %2966 = vmatprep.subr.bf16.mxu0 0
        %2967 = vmatpush2.bf16.msra.mxu0 0
        %2968 = vmatprep.subr.bf16.mxu0 0
        %2969 = vmatpush2.bf16.msra.mxu0 0
        %2970 = vmatprep.subr.bf16.mxu0 0
        %2971 = vmatpush2.bf16.msra.mxu0 0
        %2972 = vmatprep.subr.bf16.mxu0 0
        %2973 = vmatpush2.bf16.msra.mxu0 0
        %2974 = vmatprep.subr.bf16.mxu0 0
        %2975 = vmatpush2.bf16.msra.mxu0 0
        %2976 = vmatprep.subr.bf16.mxu0 0
        %2977 = vmatpush2.bf16.msra.mxu0 0
        %2978 = vmatprep.mubr.bf16.mxu0 0
        %2979 = vmatmul.mubr.bf16.gmra.mxu0 %v2882
        %v2980 = vpop.f32.mrf.mxu0
        %v2981 = vadd.f32 0.0, %v2980
        %v2982 = vpop.f32.mrf.mxu0
        %v2983 = vpop.f32.mrf.mxu0
        %v2984 = vadd.f32 0.0, %v2983
        %v2985 = vpop.f32.mrf.mxu0
        %2986 = vmatprep.mubr.bf16.mxu0 0
        %2987 = vmatmul.mubr.bf16.gmra.mxu0 %v2883
        %v2988 = vpop.f32.mrf.mxu0
        %v2989 = vadd.f32 0.0, %v2988
        %v2990 = vpop.f32.mrf.mxu0
        %v2991 = vpop.f32.mrf.mxu0
        %v2992 = vadd.f32 0.0, %v2991
        %v2993 = vpop.f32.mrf.mxu0
        %2994 = vmatprep.mubr.bf16.mxu0 0
        %2995 = vmatmul.mubr.bf16.gmra.mxu0 %v2884
        %v2996 = vpop.f32.mrf.mxu0
        %v2997 = vadd.f32 0.0, %v2996
        %v2998 = vpop.f32.mrf.mxu0
        %v2999 = vpop.f32.mrf.mxu0
        %v3000 = vadd.f32 0.0, %v2999
        %v3001 = vpop.f32.mrf.mxu0
        %3002 = vmatprep.mubr.bf16.mxu0 0
        %3003 = vmatmul.mubr.bf16.gmra.mxu0 %v2885
        %v3004 = vpop.f32.mrf.mxu0
        %v3005 = vadd.f32 0.0, %v3004
        %v3006 = vpop.f32.mrf.mxu0
        %v3007 = vpop.f32.mrf.mxu0
        %v3008 = vadd.f32 0.0, %v3007
        %v3009 = vpop.f32.mrf.mxu0
        %3010 = vmatprep.mubr.bf16.mxu0 0
        %3011 = vmatmul.mubr.bf16.gmra.mxu0 %v2886
        %v3012 = vpop.f32.mrf.mxu0
        %v3013 = vadd.f32 0.0, %v3012
        %v3014 = vpop.f32.mrf.mxu0
        %v3015 = vpop.f32.mrf.mxu0
        %v3016 = vadd.f32 0.0, %v3015
        %v3017 = vpop.f32.mrf.mxu0
        %3018 = vmatprep.mubr.bf16.mxu0 0
        %3019 = vmatmul.mubr.bf16.gmra.mxu0 %v2887
        %v3020 = vpop.f32.mrf.mxu0
        %v3021 = vadd.f32 0.0, %v3020
        %v3022 = vpop.f32.mrf.mxu0
        %v3023 = vpop.f32.mrf.mxu0
        %v3024 = vadd.f32 0.0, %v3023
        %v3025 = vpop.f32.mrf.mxu0
        %3026 = vmatprep.mubr.bf16.mxu0 0
        %3027 = vmatmul.mubr.bf16.gmra.mxu0 %v2888
        %v3028 = vpop.f32.mrf.mxu0
        %v3029 = vadd.f32 0.0, %v3028
        %v3030 = vpop.f32.mrf.mxu0
        %v3031 = vpop.f32.mrf.mxu0
        %v3032 = vadd.f32 0.0, %v3031
        %v3033 = vpop.f32.mrf.mxu0
        %3034 = vmatprep.mubr.bf16.mxu0 0
        %3035 = vmatmul.mubr.bf16.gmra.mxu0 %v2889
        %v3036 = vpop.f32.mrf.mxu0
        %v3037 = vadd.f32 0.0, %v3036
        %v3038 = vpop.f32.mrf.mxu0
        %v3039 = vpop.f32.mrf.mxu0
        %v3040 = vadd.f32 0.0, %v3039
        %v3041 = vpop.f32.mrf.mxu0
        %3042 = vdwg.mxu0
        %v3043 = vadd.f32 %v2746, %v2981
        %v3044 = vadd.f32 %v2747, %v2984
        %v3045 = vadd.f32 %v2748, %v2989
        %v3046 = vadd.f32 %v2749, %v2992
        %v3047 = vadd.f32 %v2750, %v2997
        %v3048 = vadd.f32 %v2751, %v3000
        %v3049 = vadd.f32 %v2752, %v3005
        %v3050 = vadd.f32 %v2753, %v3008
        %v3051 = vadd.f32 %v2754, %v3013
        %v3052 = vadd.f32 %v2755, %v3016
        %v3053 = vadd.f32 %v2756, %v3021
        %v3054 = vadd.f32 %v2757, %v3024
        %v3055 = vadd.f32 %v2758, %v3029
        %v3056 = vadd.f32 %v2759, %v3032
        %v3057 = vadd.f32 %v2760, %v3037
        %v3058 = vadd.f32 %v2761, %v3040
        %v3059 = vlaneseq
        %v3060 = vshrl.u32 %v3059, 7
        %v3061 = vsub.s32 1, %v3060
        %v3062 = vrot.slane %v598, %v3061
        %v3063 = vadd.f32 %v3043, %v3062
        %v3064 = vadd.f32 %v3044, %v3062
        %v3065 = vadd.f32 %v3045, %v3062
        %v3066 = vadd.f32 %v3046, %v3062
        %v3067 = vadd.f32 %v3047, %v3062
        %v3068 = vadd.f32 %v3048, %v3062
        %v3069 = vadd.f32 %v3049, %v3062
        %v3070 = vadd.f32 %v3050, %v3062
        %v3071 = vadd.f32 %v3051, %v3062
        %v3072 = vadd.f32 %v3052, %v3062
        %v3073 = vadd.f32 %v3053, %v3062
        %v3074 = vadd.f32 %v3054, %v3062
        %v3075 = vadd.f32 %v3055, %v3062
        %v3076 = vadd.f32 %v3056, %v3062
        %v3077 = vadd.f32 %v3057, %v3062
        %v3078 = vadd.f32 %v3058, %v3062
        %v3079 = vmax.f32 %v3063, 0.0
        %v3080 = vmax.f32 %v3064, 0.0
        %v3081 = vmax.f32 %v3065, 0.0
        %v3082 = vmax.f32 %v3066, 0.0
        %v3083 = vmax.f32 %v3067, 0.0
        %v3084 = vmax.f32 %v3068, 0.0
        %v3085 = vmax.f32 %v3069, 0.0
        %v3086 = vmax.f32 %v3070, 0.0
        %v3087 = vmax.f32 %v3071, 0.0
        %v3088 = vmax.f32 %v3072, 0.0
        %v3089 = vmax.f32 %v3073, 0.0
        %v3090 = vmax.f32 %v3074, 0.0
        %v3091 = vmax.f32 %v3075, 0.0
        %v3092 = vmax.f32 %v3076, 0.0
        %v3093 = vmax.f32 %v3077, 0.0
        %v3094 = vmax.f32 %v3078, 0.0
        %v3095 = vpack.c.bf16 %v3080, %v3079
        %v3096 = vpack.c.bf16 %v3082, %v3081
        %v3097 = vpack.c.bf16 %v3084, %v3083
        %v3098 = vpack.c.bf16 %v3086, %v3085
        %v3099 = vpack.c.bf16 %v3088, %v3087
        %v3100 = vpack.c.bf16 %v3090, %v3089
        %v3101 = vpack.c.bf16 %v3092, %v3091
        %v3102 = vpack.c.bf16 %v3094, %v3093
        %v3103 = vld [vmem:[%s4 + $0x40] sm:$0xf]
        %v3104 = vld [vmem:[%s4 + $0x44] sm:$0xf]
        %v3105 = vld [vmem:[%s4 + $0x48] sm:$0xf]
        %v3106 = vld [vmem:[%s4 + $0x4c] sm:$0xf]
        %v3107 = vld [vmem:[%s4 + $0x50] sm:$0xf]
        %v3108 = vld [vmem:[%s4 + $0x54] sm:$0xf]
        %v3109 = vld [vmem:[%s4 + $0x58] sm:$0xf]
        %v3110 = vld [vmem:[%s4 + $0x5c] sm:$0xf]
        %v3111 = vld [vmem:[%s4 + $0x60] sm:$0xf]
        %v3112 = vld [vmem:[%s4 + $0x64] sm:$0xf]
        %v3113 = vld [vmem:[%s4 + $0x68] sm:$0xf]
        %v3114 = vld [vmem:[%s4 + $0x6c] sm:$0xf]
        %v3115 = vld [vmem:[%s4 + $0x70] sm:$0xf]
        %v3116 = vld [vmem:[%s4 + $0x74] sm:$0xf]
        %v3117 = vld [vmem:[%s4 + $0x78] sm:$0xf]
        %v3118 = vld [vmem:[%s4 + $0x7c] sm:$0xf]
        %v3135 = vunpack.c.l.b16 %v3103
        %v3136 = vunpack.c.l.b16 %v3104
        %v3137 = vunpack.c.l.b16 %v3105
        %v3138 = vunpack.c.l.b16 %v3106
        %v3139 = vunpack.c.l.b16 %v3107
        %v3140 = vunpack.c.l.b16 %v3108
        %v3141 = vunpack.c.l.b16 %v3109
        %v3142 = vunpack.c.l.b16 %v3110
        %v3143 = vunpack.c.l.b16 %v3111
        %v3144 = vunpack.c.l.b16 %v3112
        %v3145 = vunpack.c.l.b16 %v3113
        %v3146 = vunpack.c.l.b16 %v3114
        %v3147 = vunpack.c.l.b16 %v3115
        %v3148 = vunpack.c.l.b16 %v3116
        %v3149 = vunpack.c.l.b16 %v3117
        %v3150 = vunpack.c.l.b16 %v3118
        %v3151 = vpack.c.b16 %v3136, %v3135
        %v3152 = vpack.c.b16 %v3138, %v3137
        %v3153 = vpack.c.b16 %v3140, %v3139
        %v3154 = vpack.c.b16 %v3142, %v3141
        %v3155 = vpack.c.b16 %v3144, %v3143
        %v3156 = vpack.c.b16 %v3146, %v3145
        %v3157 = vpack.c.b16 %v3148, %v3147
        %v3158 = vpack.c.b16 %v3150, %v3149
        %3167 = vmatprep.subr.bf16.mxu0 0
        %3168 = vmatpush1.bf16.msra.mxu0 %v3158
        %3169 = vmatprep.subr.bf16.mxu0 0
        %3170 = vmatpush1.bf16.msra.mxu0 %v3157
        %3171 = vmatprep.subr.bf16.mxu0 0
        %3172 = vmatpush1.bf16.msra.mxu0 %v3156
        %3173 = vmatprep.subr.bf16.mxu0 0
        %3174 = vmatpush1.bf16.msra.mxu0 %v3155
        %3175 = vmatprep.subr.bf16.mxu0 0
        %3176 = vmatpush1.bf16.msra.mxu0 %v3154
        %3177 = vmatprep.subr.bf16.mxu0 0
        %3178 = vmatpush1.bf16.msra.mxu0 %v3153
        %3179 = vmatprep.subr.bf16.mxu0 0
        %3180 = vmatpush1.bf16.msra.mxu0 %v3152
        %3181 = vmatprep.subr.bf16.mxu0 0
        %3182 = vmatpush1.bf16.msra.mxu0 %v3151
        %3183 = vmatprep.subr.bf16.mxu0 0
        %3184 = vmatpush2.bf16.msra.mxu0 0
        %3185 = vmatprep.subr.bf16.mxu0 0
        %3186 = vmatpush2.bf16.msra.mxu0 0
        %3187 = vmatprep.subr.bf16.mxu0 0
        %3188 = vmatpush2.bf16.msra.mxu0 0
        %3189 = vmatprep.subr.bf16.mxu0 0
        %3190 = vmatpush2.bf16.msra.mxu0 0
        %3191 = vmatprep.subr.bf16.mxu0 0
        %3192 = vmatpush2.bf16.msra.mxu0 0
        %3193 = vmatprep.subr.bf16.mxu0 0
        %3194 = vmatpush2.bf16.msra.mxu0 0
        %3195 = vmatprep.subr.bf16.mxu0 0
        %3196 = vmatpush2.bf16.msra.mxu0 0
        %3197 = vmatprep.subr.bf16.mxu0 0
        %3198 = vmatpush2.bf16.msra.mxu0 0
        %3199 = vmatprep.mubr.bf16.mxu0 0
        %3200 = vmatmul.mubr.bf16.gmra.mxu0 %v3095
        %v3201 = vpop.f32.mrf.mxu0
        %v3202 = vadd.f32 0.0, %v3201
        %v3203 = vpop.f32.mrf.mxu0
        %v3204 = vpop.f32.mrf.mxu0
        %v3205 = vadd.f32 0.0, %v3204
        %v3206 = vpop.f32.mrf.mxu0
        %3207 = vmatprep.mubr.bf16.mxu0 0
        %3208 = vmatmul.mubr.bf16.gmra.mxu0 %v3096
        %v3209 = vpop.f32.mrf.mxu0
        %v3210 = vadd.f32 0.0, %v3209
        %v3211 = vpop.f32.mrf.mxu0
        %v3212 = vpop.f32.mrf.mxu0
        %v3213 = vadd.f32 0.0, %v3212
        %v3214 = vpop.f32.mrf.mxu0
        %3215 = vmatprep.mubr.bf16.mxu0 0
        %3216 = vmatmul.mubr.bf16.gmra.mxu0 %v3097
        %v3217 = vpop.f32.mrf.mxu0
        %v3218 = vadd.f32 0.0, %v3217
        %v3219 = vpop.f32.mrf.mxu0
        %v3220 = vpop.f32.mrf.mxu0
        %v3221 = vadd.f32 0.0, %v3220
        %v3222 = vpop.f32.mrf.mxu0
        %3223 = vmatprep.mubr.bf16.mxu0 0
        %3224 = vmatmul.mubr.bf16.gmra.mxu0 %v3098
        %v3225 = vpop.f32.mrf.mxu0
        %v3226 = vadd.f32 0.0, %v3225
        %v3227 = vpop.f32.mrf.mxu0
        %v3228 = vpop.f32.mrf.mxu0
        %v3229 = vadd.f32 0.0, %v3228
        %v3230 = vpop.f32.mrf.mxu0
        %3231 = vmatprep.mubr.bf16.mxu0 0
        %3232 = vmatmul.mubr.bf16.gmra.mxu0 %v3099
        %v3233 = vpop.f32.mrf.mxu0
        %v3234 = vadd.f32 0.0, %v3233
        %v3235 = vpop.f32.mrf.mxu0
        %v3236 = vpop.f32.mrf.mxu0
        %v3237 = vadd.f32 0.0, %v3236
        %v3238 = vpop.f32.mrf.mxu0
        %3239 = vmatprep.mubr.bf16.mxu0 0
        %3240 = vmatmul.mubr.bf16.gmra.mxu0 %v3100
        %v3241 = vpop.f32.mrf.mxu0
        %v3242 = vadd.f32 0.0, %v3241
        %v3243 = vpop.f32.mrf.mxu0
        %v3244 = vpop.f32.mrf.mxu0
        %v3245 = vadd.f32 0.0, %v3244
        %v3246 = vpop.f32.mrf.mxu0
        %3247 = vmatprep.mubr.bf16.mxu0 0
        %3248 = vmatmul.mubr.bf16.gmra.mxu0 %v3101
        %v3249 = vpop.f32.mrf.mxu0
        %v3250 = vadd.f32 0.0, %v3249
        %v3251 = vpop.f32.mrf.mxu0
        %v3252 = vpop.f32.mrf.mxu0
        %v3253 = vadd.f32 0.0, %v3252
        %v3254 = vpop.f32.mrf.mxu0
        %3255 = vmatprep.mubr.bf16.mxu0 0
        %3256 = vmatmul.mubr.bf16.gmra.mxu0 %v3102
        %v3257 = vpop.f32.mrf.mxu0
        %v3258 = vadd.f32 0.0, %v3257
        %v3259 = vpop.f32.mrf.mxu0
        %v3260 = vpop.f32.mrf.mxu0
        %v3261 = vadd.f32 0.0, %v3260
        %v3262 = vpop.f32.mrf.mxu0
        %3263 = vdwg.mxu0
        %v3280 = vunpack.c.l.b16 %v928
        %v3281 = vunpack.c.l.b16 %v929
        %v3282 = vunpack.c.l.b16 %v930
        %v3283 = vunpack.c.l.b16 %v931
        %v3284 = vunpack.c.l.b16 %v932
        %v3285 = vunpack.c.l.b16 %v933
        %v3286 = vunpack.c.l.b16 %v934
        %v3287 = vunpack.c.l.b16 %v935
        %v3288 = vunpack.c.l.b16 %v936
        %v3289 = vunpack.c.l.b16 %v937
        %v3290 = vunpack.c.l.b16 %v938
        %v3291 = vunpack.c.l.b16 %v939
        %v3292 = vunpack.c.l.b16 %v940
        %v3293 = vunpack.c.l.b16 %v941
        %v3294 = vunpack.c.l.b16 %v942
        %v3295 = vunpack.c.l.b16 %v943
        %v3296 = vpack.c.b16 %v3281, %v3280
        %v3297 = vpack.c.b16 %v3283, %v3282
        %v3298 = vpack.c.b16 %v3285, %v3284
        %v3299 = vpack.c.b16 %v3287, %v3286
        %v3300 = vpack.c.b16 %v3289, %v3288
        %v3301 = vpack.c.b16 %v3291, %v3290
        %v3302 = vpack.c.b16 %v3293, %v3292
        %v3303 = vpack.c.b16 %v3295, %v3294
        %3312 = vmatprep.subr.bf16.mxu0 0
        %3313 = vmatpush1.bf16.msra.mxu0 %v3303
        %3314 = vmatprep.subr.bf16.mxu0 0
        %3315 = vmatpush1.bf16.msra.mxu0 %v3302
        %3316 = vmatprep.subr.bf16.mxu0 0
        %3317 = vmatpush1.bf16.msra.mxu0 %v3301
        %3318 = vmatprep.subr.bf16.mxu0 0
        %3319 = vmatpush1.bf16.msra.mxu0 %v3300
        %3320 = vmatprep.subr.bf16.mxu0 0
        %3321 = vmatpush1.bf16.msra.mxu0 %v3299
        %3322 = vmatprep.subr.bf16.mxu0 0
        %3323 = vmatpush1.bf16.msra.mxu0 %v3298
        %3324 = vmatprep.subr.bf16.mxu0 0
        %3325 = vmatpush1.bf16.msra.mxu0 %v3297
        %3326 = vmatprep.subr.bf16.mxu0 0
        %3327 = vmatpush1.bf16.msra.mxu0 %v3296
        %3328 = vmatprep.subr.bf16.mxu0 0
        %3329 = vmatpush2.bf16.msra.mxu0 0
        %3330 = vmatprep.subr.bf16.mxu0 0
        %3331 = vmatpush2.bf16.msra.mxu0 0
        %3332 = vmatprep.subr.bf16.mxu0 0
        %3333 = vmatpush2.bf16.msra.mxu0 0
        %3334 = vmatprep.subr.bf16.mxu0 0
        %3335 = vmatpush2.bf16.msra.mxu0 0
        %3336 = vmatprep.subr.bf16.mxu0 0
        %3337 = vmatpush2.bf16.msra.mxu0 0
        %3338 = vmatprep.subr.bf16.mxu0 0
        %3339 = vmatpush2.bf16.msra.mxu0 0
        %3340 = vmatprep.subr.bf16.mxu0 0
        %3341 = vmatpush2.bf16.msra.mxu0 0
        %3342 = vmatprep.subr.bf16.mxu0 0
        %3343 = vmatpush2.bf16.msra.mxu0 0
        %3344 = vmatprep.mubr.bf16.mxu0 0
        %3345 = vmatmul.mubr.bf16.gmra.mxu0 %v920
        %v3346 = vpop.f32.mrf.mxu0
        %v3347 = vadd.f32 %v3202, %v3346
        %v3348 = vpop.f32.mrf.mxu0
        %v3349 = vpop.f32.mrf.mxu0
        %v3350 = vadd.f32 %v3205, %v3349
        %v3351 = vpop.f32.mrf.mxu0
        %3352 = vmatprep.mubr.bf16.mxu0 0
        %3353 = vmatmul.mubr.bf16.gmra.mxu0 %v921
        %v3354 = vpop.f32.mrf.mxu0
        %v3355 = vadd.f32 %v3210, %v3354
        %v3356 = vpop.f32.mrf.mxu0
        %v3357 = vpop.f32.mrf.mxu0
        %v3358 = vadd.f32 %v3213, %v3357
        %v3359 = vpop.f32.mrf.mxu0
        %3360 = vmatprep.mubr.bf16.mxu0 0
        %3361 = vmatmul.mubr.bf16.gmra.mxu0 %v922
        %v3362 = vpop.f32.mrf.mxu0
        %v3363 = vadd.f32 %v3218, %v3362
        %v3364 = vpop.f32.mrf.mxu0
        %v3365 = vpop.f32.mrf.mxu0
        %v3366 = vadd.f32 %v3221, %v3365
        %v3367 = vpop.f32.mrf.mxu0
        %3368 = vmatprep.mubr.bf16.mxu0 0
        %3369 = vmatmul.mubr.bf16.gmra.mxu0 %v923
        %v3370 = vpop.f32.mrf.mxu0
        %v3371 = vadd.f32 %v3226, %v3370
        %v3372 = vpop.f32.mrf.mxu0
        %v3373 = vpop.f32.mrf.mxu0
        %v3374 = vadd.f32 %v3229, %v3373
        %v3375 = vpop.f32.mrf.mxu0
        %3376 = vmatprep.mubr.bf16.mxu0 0
        %3377 = vmatmul.mubr.bf16.gmra.mxu0 %v924
        %v3378 = vpop.f32.mrf.mxu0
        %v3379 = vadd.f32 %v3234, %v3378
        %v3380 = vpop.f32.mrf.mxu0
        %v3381 = vpop.f32.mrf.mxu0
        %v3382 = vadd.f32 %v3237, %v3381
        %v3383 = vpop.f32.mrf.mxu0
        %3384 = vmatprep.mubr.bf16.mxu0 0
        %3385 = vmatmul.mubr.bf16.gmra.mxu0 %v925
        %v3386 = vpop.f32.mrf.mxu0
        %v3387 = vadd.f32 %v3242, %v3386
        %v3388 = vpop.f32.mrf.mxu0
        %v3389 = vpop.f32.mrf.mxu0
        %v3390 = vadd.f32 %v3245, %v3389
        %v3391 = vpop.f32.mrf.mxu0
        %3392 = vmatprep.mubr.bf16.mxu0 0
        %3393 = vmatmul.mubr.bf16.gmra.mxu0 %v926
        %v3394 = vpop.f32.mrf.mxu0
        %v3395 = vadd.f32 %v3250, %v3394
        %v3396 = vpop.f32.mrf.mxu0
        %v3397 = vpop.f32.mrf.mxu0
        %v3398 = vadd.f32 %v3253, %v3397
        %v3399 = vpop.f32.mrf.mxu0
        %3400 = vmatprep.mubr.bf16.mxu0 0
        %3401 = vmatmul.mubr.bf16.gmra.mxu0 %v927
        %v3402 = vpop.f32.mrf.mxu0
        %v3403 = vadd.f32 %v3258, %v3402
        %v3404 = vpop.f32.mrf.mxu0
        %v3405 = vpop.f32.mrf.mxu0
        %v3406 = vadd.f32 %v3261, %v3405
        %v3407 = vpop.f32.mrf.mxu0
        %3408 = vdwg.mxu0
        %s3409 = smul.u32 %s296, 3
        %s3410 = smul.addr %s3409, 4
        %s3411 = scalar_lea.vmem [#allocation2], %s3410
        %v3412 = vld [vmem:[%s3411] sm:$0xf]
        %v3413 = vld [vmem:[%s3411 + $0x4] sm:$0xf]
        %v3414 = vld [vmem:[%s3411 + $0xc] sm:$0xf]
        %v3415 = vld [vmem:[%s3411 + $0x10] sm:$0xf]
        %v3416 = vld [vmem:[%s3411 + $0x18] sm:$0xf]
        %v3417 = vld [vmem:[%s3411 + $0x1c] sm:$0xf]
        %v3418 = vld [vmem:[%s3411 + $0x24] sm:$0xf]
        %v3419 = vld [vmem:[%s3411 + $0x28] sm:$0xf]
        %v3420 = vld [vmem:[%s3411 + $0x30] sm:$0xf]
        %v3421 = vld [vmem:[%s3411 + $0x34] sm:$0xf]
        %v3422 = vld [vmem:[%s3411 + $0x3c] sm:$0xf]
        %v3423 = vld [vmem:[%s3411 + $0x40] sm:$0xf]
        %v3424 = vld [vmem:[%s3411 + $0x48] sm:$0xf]
        %v3425 = vld [vmem:[%s3411 + $0x4c] sm:$0xf]
        %v3426 = vld [vmem:[%s3411 + $0x54] sm:$0xf]
        %v3427 = vld [vmem:[%s3411 + $0x58] sm:$0xf]
        %v3428 = vld [vmem:[%s3411] sm:$0xc]
        %v3429 = vld [vmem:[%s3411 + $0x8] sm:$0x3]
        %v3430 = vld [vmem:[%s3411 + $0xc] sm:$0xc]
        %v3431 = vld [vmem:[%s3411 + $0x14] sm:$0x3]
        %v3432 = vld [vmem:[%s3411 + $0x18] sm:$0xc]
        %v3433 = vld [vmem:[%s3411 + $0x20] sm:$0x3]
        %v3434 = vld [vmem:[%s3411 + $0x24] sm:$0xc]
        %v3435 = vld [vmem:[%s3411 + $0x2c] sm:$0x3]
        %v3436 = vld [vmem:[%s3411 + $0x30] sm:$0xc]
        %v3437 = vld [vmem:[%s3411 + $0x38] sm:$0x3]
        %v3438 = vld [vmem:[%s3411 + $0x3c] sm:$0xc]
        %v3439 = vld [vmem:[%s3411 + $0x44] sm:$0x3]
        %v3440 = vld [vmem:[%s3411 + $0x48] sm:$0xc]
        %v3441 = vld [vmem:[%s3411 + $0x50] sm:$0x3]
        %v3442 = vld [vmem:[%s3411 + $0x54] sm:$0xc]
        %v3443 = vld [vmem:[%s3411 + $0x5c] sm:$0x3]
        %v3468 = vrot.slane %v3428, 6
        %v3469 = vrot.slane %v3468, 4
        %v3470 = vrot.slane %v3413, 6
        %v3471 = vsel %vm421, %v3469, %v3470
        %v3472 = vrot.slane %v3470, 4
        %v3473 = vrot.slane %v3429, 6
        %v3474 = vsel %vm421, %v3472, %v3473
        %v3475 = vrot.slane %v3430, 6
        %v3476 = vrot.slane %v3475, 4
        %v3477 = vrot.slane %v3415, 6
        %v3478 = vsel %vm421, %v3476, %v3477
        %v3479 = vrot.slane %v3477, 4
        %v3480 = vrot.slane %v3431, 6
        %v3481 = vsel %vm421, %v3479, %v3480
        %v3482 = vrot.slane %v3432, 6
        %v3483 = vrot.slane %v3482, 4
        %v3484 = vrot.slane %v3417, 6
        %v3485 = vsel %vm421, %v3483, %v3484
        %v3486 = vrot.slane %v3484, 4
        %v3487 = vrot.slane %v3433, 6
        %v3488 = vsel %vm421, %v3486, %v3487
        %v3489 = vrot.slane %v3434, 6
        %v3490 = vrot.slane %v3489, 4
        %v3491 = vrot.slane %v3419, 6
        %v3492 = vsel %vm421, %v3490, %v3491
        %v3493 = vrot.slane %v3491, 4
        %v3494 = vrot.slane %v3435, 6
        %v3495 = vsel %vm421, %v3493, %v3494
        %v3496 = vrot.slane %v3436, 6
        %v3497 = vrot.slane %v3496, 4
        %v3498 = vrot.slane %v3421, 6
        %v3499 = vsel %vm421, %v3497, %v3498
        %v3500 = vrot.slane %v3498, 4
        %v3501 = vrot.slane %v3437, 6
        %v3502 = vsel %vm421, %v3500, %v3501
        %v3503 = vrot.slane %v3438, 6
        %v3504 = vrot.slane %v3503, 4
        %v3505 = vrot.slane %v3423, 6
        %v3506 = vsel %vm421, %v3504, %v3505
        %v3507 = vrot.slane %v3505, 4
        %v3508 = vrot.slane %v3439, 6
        %v3509 = vsel %vm421, %v3507, %v3508
        %v3510 = vrot.slane %v3440, 6
        %v3511 = vrot.slane %v3510, 4
        %v3512 = vrot.slane %v3425, 6
        %v3513 = vsel %vm421, %v3511, %v3512
        %v3514 = vrot.slane %v3512, 4
        %v3515 = vrot.slane %v3441, 6
        %v3516 = vsel %vm421, %v3514, %v3515
        %v3517 = vrot.slane %v3442, 6
        %v3518 = vrot.slane %v3517, 4
        %v3519 = vrot.slane %v3427, 6
        %v3520 = vsel %vm421, %v3518, %v3519
        %v3521 = vrot.slane %v3519, 4
        %v3522 = vrot.slane %v3443, 6
        %v3523 = vsel %vm421, %v3521, %v3522
        %v3532 = vunpack.c.l.b16 %v3412
        %v3533 = vunpack.c.l.b16 %v3413
        %v3534 = vunpack.c.l.b16 %v3414
        %v3535 = vunpack.c.l.b16 %v3415
        %v3536 = vunpack.c.l.b16 %v3416
        %v3537 = vunpack.c.l.b16 %v3417
        %v3538 = vunpack.c.l.b16 %v3418
        %v3539 = vunpack.c.l.b16 %v3419
        %v3540 = vunpack.c.l.b16 %v3420
        %v3541 = vunpack.c.l.b16 %v3421
        %v3542 = vunpack.c.l.b16 %v3422
        %v3543 = vunpack.c.l.b16 %v3423
        %v3544 = vunpack.c.l.b16 %v3424
        %v3545 = vunpack.c.l.b16 %v3425
        %v3546 = vunpack.c.l.b16 %v3426
        %v3547 = vunpack.c.l.b16 %v3427
        %v3548 = vpack.c.b16 %v3533, %v3532
        %v3549 = vpack.c.b16 %v3535, %v3534
        %v3550 = vpack.c.b16 %v3537, %v3536
        %v3551 = vpack.c.b16 %v3539, %v3538
        %v3552 = vpack.c.b16 %v3541, %v3540
        %v3553 = vpack.c.b16 %v3543, %v3542
        %v3554 = vpack.c.b16 %v3545, %v3544
        %v3555 = vpack.c.b16 %v3547, %v3546
        %v3564 = vunpack.c.l.b16 %v3471
        %v3565 = vunpack.c.l.b16 %v3474
        %v3566 = vunpack.c.l.b16 %v3478
        %v3567 = vunpack.c.l.b16 %v3481
        %v3568 = vunpack.c.l.b16 %v3485
        %v3569 = vunpack.c.l.b16 %v3488
        %v3570 = vunpack.c.l.b16 %v3492
        %v3571 = vunpack.c.l.b16 %v3495
        %v3572 = vunpack.c.l.b16 %v3499
        %v3573 = vunpack.c.l.b16 %v3502
        %v3574 = vunpack.c.l.b16 %v3506
        %v3575 = vunpack.c.l.b16 %v3509
        %v3576 = vunpack.c.l.b16 %v3513
        %v3577 = vunpack.c.l.b16 %v3516
        %v3578 = vunpack.c.l.b16 %v3520
        %v3579 = vunpack.c.l.b16 %v3523
        %v3580 = vpack.c.b16 %v3565, %v3564
        %v3581 = vpack.c.b16 %v3567, %v3566
        %v3582 = vpack.c.b16 %v3569, %v3568
        %v3583 = vpack.c.b16 %v3571, %v3570
        %v3584 = vpack.c.b16 %v3573, %v3572
        %v3585 = vpack.c.b16 %v3575, %v3574
        %v3586 = vpack.c.b16 %v3577, %v3576
        %v3587 = vpack.c.b16 %v3579, %v3578
        %v3596 = vld [vmem:[#allocation6] sm:$0xf]
        %v3597 = vld [vmem:[#allocation6 + $0x4] sm:$0xf]
        %v3598 = vld [vmem:[#allocation6 + $0x8] sm:$0xf]
        %v3599 = vld [vmem:[#allocation6 + $0xc] sm:$0xf]
        %v3600 = vld [vmem:[#allocation6 + $0x10] sm:$0xf]
        %v3601 = vld [vmem:[#allocation6 + $0x14] sm:$0xf]
        %v3602 = vld [vmem:[#allocation6 + $0x18] sm:$0xf]
        %v3603 = vld [vmem:[#allocation6 + $0x1c] sm:$0xf]
        %v3604 = vld [vmem:[#allocation6 + $0x20] sm:$0xf]
        %v3605 = vld [vmem:[#allocation6 + $0x24] sm:$0xf]
        %v3606 = vld [vmem:[#allocation6 + $0x28] sm:$0xf]
        %v3607 = vld [vmem:[#allocation6 + $0x2c] sm:$0xf]
        %v3608 = vld [vmem:[#allocation6 + $0x30] sm:$0xf]
        %v3609 = vld [vmem:[#allocation6 + $0x34] sm:$0xf]
        %v3610 = vld [vmem:[#allocation6 + $0x38] sm:$0xf]
        %v3611 = vld [vmem:[#allocation6 + $0x3c] sm:$0xf]
        %v3612 = vld [vmem:[#allocation6 + $0x40] sm:$0xf]
        %v3613 = vld [vmem:[#allocation6 + $0x44] sm:$0xf]
        %v3614 = vld [vmem:[#allocation6 + $0x48] sm:$0xf]
        %v3615 = vld [vmem:[#allocation6 + $0x4c] sm:$0xf]
        %v3616 = vld [vmem:[#allocation6 + $0x50] sm:$0xf]
        %v3617 = vld [vmem:[#allocation6 + $0x54] sm:$0xf]
        %v3618 = vld [vmem:[#allocation6 + $0x58] sm:$0xf]
        %v3619 = vld [vmem:[#allocation6 + $0x5c] sm:$0xf]
        %v3620 = vld [vmem:[#allocation6 + $0x60] sm:$0xf]
        %v3621 = vld [vmem:[#allocation6 + $0x64] sm:$0xf]
        %v3622 = vld [vmem:[#allocation6 + $0x68] sm:$0xf]
        %v3623 = vld [vmem:[#allocation6 + $0x6c] sm:$0xf]
        %v3624 = vld [vmem:[#allocation6 + $0x70] sm:$0xf]
        %v3625 = vld [vmem:[#allocation6 + $0x74] sm:$0xf]
        %v3626 = vld [vmem:[#allocation6 + $0x78] sm:$0xf]
        %v3627 = vld [vmem:[#allocation6 + $0x7c] sm:$0xf]
        %v3628 = vld [vmem:[%s3411 + $0x8] sm:$0xf]
        %v3629 = vld [vmem:[%s3411 + $0x14] sm:$0xf]
        %v3630 = vld [vmem:[%s3411 + $0x20] sm:$0xf]
        %v3631 = vld [vmem:[%s3411 + $0x2c] sm:$0xf]
        %v3632 = vld [vmem:[%s3411 + $0x38] sm:$0xf]
        %v3633 = vld [vmem:[%s3411 + $0x44] sm:$0xf]
        %v3634 = vld [vmem:[%s3411 + $0x50] sm:$0xf]
        %v3635 = vld [vmem:[%s3411 + $0x5c] sm:$0xf]
        %v3636 = vld [vmem:[%s602] sm:$0xf]
        %v3637 = vld [vmem:[%s602 + $0x4] sm:$0xf]
        %v3638 = vld [vmem:[%s602 + $0xc] sm:$0xf]
        %v3639 = vld [vmem:[%s602 + $0x10] sm:$0xf]
        %v3640 = vld [vmem:[%s602 + $0x18] sm:$0xf]
        %v3641 = vld [vmem:[%s602 + $0x1c] sm:$0xf]
        %v3642 = vld [vmem:[%s602 + $0x24] sm:$0xf]
        %v3643 = vld [vmem:[%s602 + $0x28] sm:$0xf]
        %v3644 = vld [vmem:[%s602 + $0x30] sm:$0xf]
        %v3645 = vld [vmem:[%s602 + $0x34] sm:$0xf]
        %v3646 = vld [vmem:[%s602 + $0x3c] sm:$0xf]
        %v3647 = vld [vmem:[%s602 + $0x40] sm:$0xf]
        %v3648 = vld [vmem:[%s602 + $0x48] sm:$0xf]
        %v3649 = vld [vmem:[%s602 + $0x4c] sm:$0xf]
        %v3650 = vld [vmem:[%s602 + $0x54] sm:$0xf]
        %v3651 = vld [vmem:[%s602 + $0x58] sm:$0xf]
        %v3660 = vunpack.c.l.b16 %v3628
        %v3661 = vunpack.c.l.b16 %v3629
        %v3662 = vunpack.c.l.b16 %v3630
        %v3663 = vunpack.c.l.b16 %v3631
        %v3664 = vunpack.c.l.b16 %v3632
        %v3665 = vunpack.c.l.b16 %v3633
        %v3666 = vunpack.c.l.b16 %v3634
        %v3667 = vunpack.c.l.b16 %v3635
        %v3668 = vpack.c.b16 %v3660, %v3533
        %v3669 = vpack.c.b16 %v3661, %v3535
        %v3670 = vpack.c.b16 %v3662, %v3537
        %v3671 = vpack.c.b16 %v3663, %v3539
        %v3672 = vpack.c.b16 %v3664, %v3541
        %v3673 = vpack.c.b16 %v3665, %v3543
        %v3674 = vpack.c.b16 %v3666, %v3545
        %v3675 = vpack.c.b16 %v3667, %v3547
        %v3700 = vunpack.c.l.b16 %v3636
        %v3701 = vunpack.c.l.b16 %v3637
        %v3702 = vunpack.c.l.b16 %v3638
        %v3703 = vunpack.c.l.b16 %v3639
        %v3704 = vunpack.c.l.b16 %v3640
        %v3705 = vunpack.c.l.b16 %v3641
        %v3706 = vunpack.c.l.b16 %v3642
        %v3707 = vunpack.c.l.b16 %v3643
        %v3708 = vunpack.c.l.b16 %v3644
        %v3709 = vunpack.c.l.b16 %v3645
        %v3710 = vunpack.c.l.b16 %v3646
        %v3711 = vunpack.c.l.b16 %v3647
        %v3712 = vunpack.c.l.b16 %v3648
        %v3713 = vunpack.c.l.b16 %v3649
        %v3714 = vunpack.c.l.b16 %v3650
        %v3715 = vunpack.c.l.b16 %v3651
        %v3716 = vpack.c.b16 %v3701, %v3700
        %v3717 = vpack.c.b16 %v3703, %v3702
        %v3718 = vpack.c.b16 %v3705, %v3704
        %v3719 = vpack.c.b16 %v3707, %v3706
        %v3720 = vpack.c.b16 %v3709, %v3708
        %v3721 = vpack.c.b16 %v3711, %v3710
        %v3722 = vpack.c.b16 %v3713, %v3712
        %v3723 = vpack.c.b16 %v3715, %v3714
        %v3732 = vld [vmem:[#allocation6 + $0x80] sm:$0xf]
        %v3733 = vld [vmem:[#allocation6 + $0x84] sm:$0xf]
        %v3734 = vld [vmem:[#allocation6 + $0x88] sm:$0xf]
        %v3735 = vld [vmem:[#allocation6 + $0x8c] sm:$0xf]
        %v3736 = vld [vmem:[#allocation6 + $0x90] sm:$0xf]
        %v3737 = vld [vmem:[#allocation6 + $0x94] sm:$0xf]
        %v3738 = vld [vmem:[#allocation6 + $0x98] sm:$0xf]
        %v3739 = vld [vmem:[#allocation6 + $0x9c] sm:$0xf]
        %v3740 = vld [vmem:[#allocation6 + $0xa0] sm:$0xf]
        %v3741 = vld [vmem:[#allocation6 + $0xa4] sm:$0xf]
        %v3742 = vld [vmem:[#allocation6 + $0xa8] sm:$0xf]
        %v3743 = vld [vmem:[#allocation6 + $0xac] sm:$0xf]
        %v3744 = vld [vmem:[#allocation6 + $0xb0] sm:$0xf]
        %v3745 = vld [vmem:[#allocation6 + $0xb4] sm:$0xf]
        %v3746 = vld [vmem:[#allocation6 + $0xb8] sm:$0xf]
        %v3747 = vld [vmem:[#allocation6 + $0xbc] sm:$0xf]
        %v3748 = vld [vmem:[#allocation6 + $0xc0] sm:$0xf]
        %v3749 = vld [vmem:[#allocation6 + $0xc4] sm:$0xf]
        %v3750 = vld [vmem:[#allocation6 + $0xc8] sm:$0xf]
        %v3751 = vld [vmem:[#allocation6 + $0xcc] sm:$0xf]
        %v3752 = vld [vmem:[#allocation6 + $0xd0] sm:$0xf]
        %v3753 = vld [vmem:[#allocation6 + $0xd4] sm:$0xf]
        %v3754 = vld [vmem:[#allocation6 + $0xd8] sm:$0xf]
        %v3755 = vld [vmem:[#allocation6 + $0xdc] sm:$0xf]
        %v3756 = vld [vmem:[#allocation6 + $0xe0] sm:$0xf]
        %v3757 = vld [vmem:[#allocation6 + $0xe4] sm:$0xf]
        %v3758 = vld [vmem:[#allocation6 + $0xe8] sm:$0xf]
        %v3759 = vld [vmem:[#allocation6 + $0xec] sm:$0xf]
        %v3760 = vld [vmem:[#allocation6 + $0xf0] sm:$0xf]
        %v3761 = vld [vmem:[#allocation6 + $0xf4] sm:$0xf]
        %v3762 = vld [vmem:[#allocation6 + $0xf8] sm:$0xf]
        %v3763 = vld [vmem:[#allocation6 + $0xfc] sm:$0xf]
        %v3796 = vunpack.c.l.b16 %v3732
        %v3797 = vunpack.c.l.b16 %v3733
        %v3798 = vunpack.c.l.b16 %v3734
        %v3799 = vunpack.c.l.b16 %v3735
        %v3800 = vunpack.c.l.b16 %v3736
        %v3801 = vunpack.c.l.b16 %v3737
        %v3802 = vunpack.c.l.b16 %v3738
        %v3803 = vunpack.c.l.b16 %v3739
        %v3804 = vunpack.c.l.b16 %v3740
        %v3805 = vunpack.c.l.b16 %v3741
        %v3806 = vunpack.c.l.b16 %v3742
        %v3807 = vunpack.c.l.b16 %v3743
        %v3808 = vunpack.c.l.b16 %v3744
        %v3809 = vunpack.c.l.b16 %v3745
        %v3810 = vunpack.c.l.b16 %v3746
        %v3811 = vunpack.c.l.b16 %v3747
        %v3812 = vunpack.c.l.b16 %v3748
        %v3813 = vunpack.c.l.b16 %v3749
        %v3814 = vunpack.c.l.b16 %v3750
        %v3815 = vunpack.c.l.b16 %v3751
        %v3816 = vunpack.c.l.b16 %v3752
        %v3817 = vunpack.c.l.b16 %v3753
        %v3818 = vunpack.c.l.b16 %v3754
        %v3819 = vunpack.c.l.b16 %v3755
        %v3820 = vunpack.c.l.b16 %v3756
        %v3821 = vunpack.c.l.b16 %v3757
        %v3822 = vunpack.c.l.b16 %v3758
        %v3823 = vunpack.c.l.b16 %v3759
        %v3824 = vunpack.c.l.b16 %v3760
        %v3825 = vunpack.c.l.b16 %v3761
        %v3826 = vunpack.c.l.b16 %v3762
        %v3827 = vunpack.c.l.b16 %v3763
        %v3828 = vpack.c.b16 %v3797, %v3796
        %v3829 = vpack.c.b16 %v3799, %v3798
        %v3830 = vpack.c.b16 %v3801, %v3800
        %v3831 = vpack.c.b16 %v3803, %v3802
        %v3832 = vpack.c.b16 %v3805, %v3804
        %v3833 = vpack.c.b16 %v3807, %v3806
        %v3834 = vpack.c.b16 %v3809, %v3808
        %v3835 = vpack.c.b16 %v3811, %v3810
        %v3836 = vpack.c.b16 %v3813, %v3812
        %v3837 = vpack.c.b16 %v3815, %v3814
        %v3838 = vpack.c.b16 %v3817, %v3816
        %v3839 = vpack.c.b16 %v3819, %v3818
        %v3840 = vpack.c.b16 %v3821, %v3820
        %v3841 = vpack.c.b16 %v3823, %v3822
        %v3842 = vpack.c.b16 %v3825, %v3824
        %v3843 = vpack.c.b16 %v3827, %v3826
        %3860 = vmatprep.subr.bf16.mxu0 0
        %3861 = vmatpush1.bf16.msra.mxu0 %v3835
        %3862 = vmatprep.subr.bf16.mxu0 0
        %3863 = vmatpush1.bf16.msra.mxu0 %v3834
        %3864 = vmatprep.subr.bf16.mxu0 0
        %3865 = vmatpush1.bf16.msra.mxu0 %v3833
        %3866 = vmatprep.subr.bf16.mxu0 0
        %3867 = vmatpush1.bf16.msra.mxu0 %v3832
        %3868 = vmatprep.subr.bf16.mxu0 0
        %3869 = vmatpush1.bf16.msra.mxu0 %v3831
        %3870 = vmatprep.subr.bf16.mxu0 0
        %3871 = vmatpush1.bf16.msra.mxu0 %v3830
        %3872 = vmatprep.subr.bf16.mxu0 0
        %3873 = vmatpush1.bf16.msra.mxu0 %v3829
        %3874 = vmatprep.subr.bf16.mxu0 0
        %3875 = vmatpush1.bf16.msra.mxu0 %v3828
        %3876 = vmatprep.subr.bf16.mxu0 0
        %3877 = vmatpush2.bf16.msra.mxu0 %v3843
        %3878 = vmatprep.subr.bf16.mxu0 0
        %3879 = vmatpush2.bf16.msra.mxu0 %v3842
        %3880 = vmatprep.subr.bf16.mxu0 0
        %3881 = vmatpush2.bf16.msra.mxu0 %v3841
        %3882 = vmatprep.subr.bf16.mxu0 0
        %3883 = vmatpush2.bf16.msra.mxu0 %v3840
        %3884 = vmatprep.subr.bf16.mxu0 0
        %3885 = vmatpush2.bf16.msra.mxu0 %v3839
        %3886 = vmatprep.subr.bf16.mxu0 0
        %3887 = vmatpush2.bf16.msra.mxu0 %v3838
        %3888 = vmatprep.subr.bf16.mxu0 0
        %3889 = vmatpush2.bf16.msra.mxu0 %v3837
        %3890 = vmatprep.subr.bf16.mxu0 0
        %3891 = vmatpush2.bf16.msra.mxu0 %v3836
        %3892 = vmatprep.mubr.bf16.mxu0 %v3716
        %3893 = vmatmul.mubr.bf16.gmra.mxu0 %v3668
        %v3894 = vpop.f32.mrf.mxu0
        %v3895 = vadd.f32 0.0, %v3894
        %v3896 = vpop.f32.mrf.mxu0
        %v3897 = vpop.f32.mrf.mxu0
        %v3898 = vadd.f32 0.0, %v3897
        %v3899 = vpop.f32.mrf.mxu0
        %3900 = vmatprep.mubr.bf16.mxu0 %v3717
        %3901 = vmatmul.mubr.bf16.gmra.mxu0 %v3669
        %v3902 = vpop.f32.mrf.mxu0
        %v3903 = vadd.f32 0.0, %v3902
        %v3904 = vpop.f32.mrf.mxu0
        %v3905 = vpop.f32.mrf.mxu0
        %v3906 = vadd.f32 0.0, %v3905
        %v3907 = vpop.f32.mrf.mxu0
        %3908 = vmatprep.mubr.bf16.mxu0 %v3718
        %3909 = vmatmul.mubr.bf16.gmra.mxu0 %v3670
        %v3910 = vpop.f32.mrf.mxu0
        %v3911 = vadd.f32 0.0, %v3910
        %v3912 = vpop.f32.mrf.mxu0
        %v3913 = vpop.f32.mrf.mxu0
        %v3914 = vadd.f32 0.0, %v3913
        %v3915 = vpop.f32.mrf.mxu0
        %3916 = vmatprep.mubr.bf16.mxu0 %v3719
        %3917 = vmatmul.mubr.bf16.gmra.mxu0 %v3671
        %v3918 = vpop.f32.mrf.mxu0
        %v3919 = vadd.f32 0.0, %v3918
        %v3920 = vpop.f32.mrf.mxu0
        %v3921 = vpop.f32.mrf.mxu0
        %v3922 = vadd.f32 0.0, %v3921
        %v3923 = vpop.f32.mrf.mxu0
        %3924 = vmatprep.mubr.bf16.mxu0 %v3720
        %3925 = vmatmul.mubr.bf16.gmra.mxu0 %v3672
        %v3926 = vpop.f32.mrf.mxu0
        %v3927 = vadd.f32 0.0, %v3926
        %v3928 = vpop.f32.mrf.mxu0
        %v3929 = vpop.f32.mrf.mxu0
        %v3930 = vadd.f32 0.0, %v3929
        %v3931 = vpop.f32.mrf.mxu0
        %3932 = vmatprep.mubr.bf16.mxu0 %v3721
        %3933 = vmatmul.mubr.bf16.gmra.mxu0 %v3673
        %v3934 = vpop.f32.mrf.mxu0
        %v3935 = vadd.f32 0.0, %v3934
        %v3936 = vpop.f32.mrf.mxu0
        %v3937 = vpop.f32.mrf.mxu0
        %v3938 = vadd.f32 0.0, %v3937
        %v3939 = vpop.f32.mrf.mxu0
        %3940 = vmatprep.mubr.bf16.mxu0 %v3722
        %3941 = vmatmul.mubr.bf16.gmra.mxu0 %v3674
        %v3942 = vpop.f32.mrf.mxu0
        %v3943 = vadd.f32 0.0, %v3942
        %v3944 = vpop.f32.mrf.mxu0
        %v3945 = vpop.f32.mrf.mxu0
        %v3946 = vadd.f32 0.0, %v3945
        %v3947 = vpop.f32.mrf.mxu0
        %3948 = vmatprep.mubr.bf16.mxu0 %v3723
        %3949 = vmatmul.mubr.bf16.gmra.mxu0 %v3675
        %v3950 = vpop.f32.mrf.mxu0
        %v3951 = vadd.f32 0.0, %v3950
        %v3952 = vpop.f32.mrf.mxu0
        %v3953 = vpop.f32.mrf.mxu0
        %v3954 = vadd.f32 0.0, %v3953
        %v3955 = vpop.f32.mrf.mxu0
        %3956 = vdwg.mxu0
        %v3989 = vunpack.c.l.b16 %v3596
        %v3990 = vunpack.c.l.b16 %v3597
        %v3991 = vunpack.c.l.b16 %v3598
        %v3992 = vunpack.c.l.b16 %v3599
        %v3993 = vunpack.c.l.b16 %v3600
        %v3994 = vunpack.c.l.b16 %v3601
        %v3995 = vunpack.c.l.b16 %v3602
        %v3996 = vunpack.c.l.b16 %v3603
        %v3997 = vunpack.c.l.b16 %v3604
        %v3998 = vunpack.c.l.b16 %v3605
        %v3999 = vunpack.c.l.b16 %v3606
        %v4000 = vunpack.c.l.b16 %v3607
        %v4001 = vunpack.c.l.b16 %v3608
        %v4002 = vunpack.c.l.b16 %v3609
        %v4003 = vunpack.c.l.b16 %v3610
        %v4004 = vunpack.c.l.b16 %v3611
        %v4005 = vunpack.c.l.b16 %v3612
        %v4006 = vunpack.c.l.b16 %v3613
        %v4007 = vunpack.c.l.b16 %v3614
        %v4008 = vunpack.c.l.b16 %v3615
        %v4009 = vunpack.c.l.b16 %v3616
        %v4010 = vunpack.c.l.b16 %v3617
        %v4011 = vunpack.c.l.b16 %v3618
        %v4012 = vunpack.c.l.b16 %v3619
        %v4013 = vunpack.c.l.b16 %v3620
        %v4014 = vunpack.c.l.b16 %v3621
        %v4015 = vunpack.c.l.b16 %v3622
        %v4016 = vunpack.c.l.b16 %v3623
        %v4017 = vunpack.c.l.b16 %v3624
        %v4018 = vunpack.c.l.b16 %v3625
        %v4019 = vunpack.c.l.b16 %v3626
        %v4020 = vunpack.c.l.b16 %v3627
        %v4021 = vpack.c.b16 %v3990, %v3989
        %v4022 = vpack.c.b16 %v3992, %v3991
        %v4023 = vpack.c.b16 %v3994, %v3993
        %v4024 = vpack.c.b16 %v3996, %v3995
        %v4025 = vpack.c.b16 %v3998, %v3997
        %v4026 = vpack.c.b16 %v4000, %v3999
        %v4027 = vpack.c.b16 %v4002, %v4001
        %v4028 = vpack.c.b16 %v4004, %v4003
        %v4029 = vpack.c.b16 %v4006, %v4005
        %v4030 = vpack.c.b16 %v4008, %v4007
        %v4031 = vpack.c.b16 %v4010, %v4009
        %v4032 = vpack.c.b16 %v4012, %v4011
        %v4033 = vpack.c.b16 %v4014, %v4013
        %v4034 = vpack.c.b16 %v4016, %v4015
        %v4035 = vpack.c.b16 %v4018, %v4017
        %v4036 = vpack.c.b16 %v4020, %v4019
        %4053 = vmatprep.subr.bf16.mxu0 0
        %4054 = vmatpush1.bf16.msra.mxu0 %v4028
        %4055 = vmatprep.subr.bf16.mxu0 0
        %4056 = vmatpush1.bf16.msra.mxu0 %v4027
        %4057 = vmatprep.subr.bf16.mxu0 0
        %4058 = vmatpush1.bf16.msra.mxu0 %v4026
        %4059 = vmatprep.subr.bf16.mxu0 0
        %4060 = vmatpush1.bf16.msra.mxu0 %v4025
        %4061 = vmatprep.subr.bf16.mxu0 0
        %4062 = vmatpush1.bf16.msra.mxu0 %v4024
        %4063 = vmatprep.subr.bf16.mxu0 0
        %4064 = vmatpush1.bf16.msra.mxu0 %v4023
        %4065 = vmatprep.subr.bf16.mxu0 0
        %4066 = vmatpush1.bf16.msra.mxu0 %v4022
        %4067 = vmatprep.subr.bf16.mxu0 0
        %4068 = vmatpush1.bf16.msra.mxu0 %v4021
        %4069 = vmatprep.subr.bf16.mxu0 0
        %4070 = vmatpush2.bf16.msra.mxu0 %v4036
        %4071 = vmatprep.subr.bf16.mxu0 0
        %4072 = vmatpush2.bf16.msra.mxu0 %v4035
        %4073 = vmatprep.subr.bf16.mxu0 0
        %4074 = vmatpush2.bf16.msra.mxu0 %v4034
        %4075 = vmatprep.subr.bf16.mxu0 0
        %4076 = vmatpush2.bf16.msra.mxu0 %v4033
        %4077 = vmatprep.subr.bf16.mxu0 0
        %4078 = vmatpush2.bf16.msra.mxu0 %v4032
        %4079 = vmatprep.subr.bf16.mxu0 0
        %4080 = vmatpush2.bf16.msra.mxu0 %v4031
        %4081 = vmatprep.subr.bf16.mxu0 0
        %4082 = vmatpush2.bf16.msra.mxu0 %v4030
        %4083 = vmatprep.subr.bf16.mxu0 0
        %4084 = vmatpush2.bf16.msra.mxu0 %v4029
        %4085 = vmatprep.mubr.bf16.mxu0 %v3580
        %4086 = vmatmul.mubr.bf16.gmra.mxu0 %v3548
        %v4087 = vpop.f32.mrf.mxu0
        %v4088 = vadd.f32 %v3895, %v4087
        %v4089 = vpop.f32.mrf.mxu0
        %v4090 = vpop.f32.mrf.mxu0
        %v4091 = vadd.f32 %v3898, %v4090
        %v4092 = vpop.f32.mrf.mxu0
        %4093 = vmatprep.mubr.bf16.mxu0 %v3581
        %4094 = vmatmul.mubr.bf16.gmra.mxu0 %v3549
        %v4095 = vpop.f32.mrf.mxu0
        %v4096 = vadd.f32 %v3903, %v4095
        %v4097 = vpop.f32.mrf.mxu0
        %v4098 = vpop.f32.mrf.mxu0
        %v4099 = vadd.f32 %v3906, %v4098
        %v4100 = vpop.f32.mrf.mxu0
        %4101 = vmatprep.mubr.bf16.mxu0 %v3582
        %4102 = vmatmul.mubr.bf16.gmra.mxu0 %v3550
        %v4103 = vpop.f32.mrf.mxu0
        %v4104 = vadd.f32 %v3911, %v4103
        %v4105 = vpop.f32.mrf.mxu0
        %v4106 = vpop.f32.mrf.mxu0
        %v4107 = vadd.f32 %v3914, %v4106
        %v4108 = vpop.f32.mrf.mxu0
        %4109 = vmatprep.mubr.bf16.mxu0 %v3583
        %4110 = vmatmul.mubr.bf16.gmra.mxu0 %v3551
        %v4111 = vpop.f32.mrf.mxu0
        %v4112 = vadd.f32 %v3919, %v4111
        %v4113 = vpop.f32.mrf.mxu0
        %v4114 = vpop.f32.mrf.mxu0
        %v4115 = vadd.f32 %v3922, %v4114
        %v4116 = vpop.f32.mrf.mxu0
        %4117 = vmatprep.mubr.bf16.mxu0 %v3584
        %4118 = vmatmul.mubr.bf16.gmra.mxu0 %v3552
        %v4119 = vpop.f32.mrf.mxu0
        %v4120 = vadd.f32 %v3927, %v4119
        %v4121 = vpop.f32.mrf.mxu0
        %v4122 = vpop.f32.mrf.mxu0
        %v4123 = vadd.f32 %v3930, %v4122
        %v4124 = vpop.f32.mrf.mxu0
        %4125 = vmatprep.mubr.bf16.mxu0 %v3585
        %4126 = vmatmul.mubr.bf16.gmra.mxu0 %v3553
        %v4127 = vpop.f32.mrf.mxu0
        %v4128 = vadd.f32 %v3935, %v4127
        %v4129 = vpop.f32.mrf.mxu0
        %v4130 = vpop.f32.mrf.mxu0
        %v4131 = vadd.f32 %v3938, %v4130
        %v4132 = vpop.f32.mrf.mxu0
        %4133 = vmatprep.mubr.bf16.mxu0 %v3586
        %4134 = vmatmul.mubr.bf16.gmra.mxu0 %v3554
        %v4135 = vpop.f32.mrf.mxu0
        %v4136 = vadd.f32 %v3943, %v4135
        %v4137 = vpop.f32.mrf.mxu0
        %v4138 = vpop.f32.mrf.mxu0
        %v4139 = vadd.f32 %v3946, %v4138
        %v4140 = vpop.f32.mrf.mxu0
        %4141 = vmatprep.mubr.bf16.mxu0 %v3587
        %4142 = vmatmul.mubr.bf16.gmra.mxu0 %v3555
        %v4143 = vpop.f32.mrf.mxu0
        %v4144 = vadd.f32 %v3951, %v4143
        %v4145 = vpop.f32.mrf.mxu0
        %v4146 = vpop.f32.mrf.mxu0
        %v4147 = vadd.f32 %v3954, %v4146
        %v4148 = vpop.f32.mrf.mxu0
        %4149 = vdwg.mxu0
        %v4150 = vld [vmem:[%s602 + $0x8] sm:$0xf]
        %v4151 = vld [vmem:[%s602 + $0x14] sm:$0xf]
        %v4152 = vld [vmem:[%s602 + $0x20] sm:$0xf]
        %v4153 = vld [vmem:[%s602 + $0x2c] sm:$0xf]
        %v4154 = vld [vmem:[%s602 + $0x38] sm:$0xf]
        %v4155 = vld [vmem:[%s602 + $0x44] sm:$0xf]
        %v4156 = vld [vmem:[%s602 + $0x50] sm:$0xf]
        %v4157 = vld [vmem:[%s602 + $0x5c] sm:$0xf]
        %v4166 = vunpack.c.l.b16 %v604
        %v4167 = vunpack.c.l.b16 %v4150
        %v4168 = vunpack.c.l.b16 %v607
        %v4169 = vunpack.c.l.b16 %v4151
        %v4170 = vunpack.c.l.b16 %v610
        %v4171 = vunpack.c.l.b16 %v4152
        %v4172 = vunpack.c.l.b16 %v613
        %v4173 = vunpack.c.l.b16 %v4153
        %v4174 = vunpack.c.l.b16 %v616
        %v4175 = vunpack.c.l.b16 %v4154
        %v4176 = vunpack.c.l.b16 %v619
        %v4177 = vunpack.c.l.b16 %v4155
        %v4178 = vunpack.c.l.b16 %v622
        %v4179 = vunpack.c.l.b16 %v4156
        %v4180 = vunpack.c.l.b16 %v625
        %v4181 = vunpack.c.l.b16 %v4157
        %v4182 = vpack.c.b16 %v4167, %v4166
        %v4183 = vpack.c.b16 %v4169, %v4168
        %v4184 = vpack.c.b16 %v4171, %v4170
        %v4185 = vpack.c.b16 %v4173, %v4172
        %v4186 = vpack.c.b16 %v4175, %v4174
        %v4187 = vpack.c.b16 %v4177, %v4176
        %v4188 = vpack.c.b16 %v4179, %v4178
        %v4189 = vpack.c.b16 %v4181, %v4180
        %v4198 = vld [vmem:[#allocation6 + $0x100] sm:$0xf]
        %v4199 = vld [vmem:[#allocation6 + $0x104] sm:$0xf]
        %v4200 = vld [vmem:[#allocation6 + $0x108] sm:$0xf]
        %v4201 = vld [vmem:[#allocation6 + $0x10c] sm:$0xf]
        %v4202 = vld [vmem:[#allocation6 + $0x110] sm:$0xf]
        %v4203 = vld [vmem:[#allocation6 + $0x114] sm:$0xf]
        %v4204 = vld [vmem:[#allocation6 + $0x118] sm:$0xf]
        %v4205 = vld [vmem:[#allocation6 + $0x11c] sm:$0xf]
        %v4206 = vld [vmem:[#allocation6 + $0x120] sm:$0xf]
        %v4207 = vld [vmem:[#allocation6 + $0x124] sm:$0xf]
        %v4208 = vld [vmem:[#allocation6 + $0x128] sm:$0xf]
        %v4209 = vld [vmem:[#allocation6 + $0x12c] sm:$0xf]
        %v4210 = vld [vmem:[#allocation6 + $0x130] sm:$0xf]
        %v4211 = vld [vmem:[#allocation6 + $0x134] sm:$0xf]
        %v4212 = vld [vmem:[#allocation6 + $0x138] sm:$0xf]
        %v4213 = vld [vmem:[#allocation6 + $0x13c] sm:$0xf]
        %v4214 = vld [vmem:[#allocation6 + $0x140] sm:$0xf]
        %v4215 = vld [vmem:[#allocation6 + $0x144] sm:$0xf]
        %v4216 = vld [vmem:[#allocation6 + $0x148] sm:$0xf]
        %v4217 = vld [vmem:[#allocation6 + $0x14c] sm:$0xf]
        %v4218 = vld [vmem:[#allocation6 + $0x150] sm:$0xf]
        %v4219 = vld [vmem:[#allocation6 + $0x154] sm:$0xf]
        %v4220 = vld [vmem:[#allocation6 + $0x158] sm:$0xf]
        %v4221 = vld [vmem:[#allocation6 + $0x15c] sm:$0xf]
        %v4222 = vld [vmem:[#allocation6 + $0x160] sm:$0xf]
        %v4223 = vld [vmem:[#allocation6 + $0x164] sm:$0xf]
        %v4224 = vld [vmem:[#allocation6 + $0x168] sm:$0xf]
        %v4225 = vld [vmem:[#allocation6 + $0x16c] sm:$0xf]
        %v4226 = vld [vmem:[#allocation6 + $0x170] sm:$0xf]
        %v4227 = vld [vmem:[#allocation6 + $0x174] sm:$0xf]
        %v4228 = vld [vmem:[#allocation6 + $0x178] sm:$0xf]
        %v4229 = vld [vmem:[#allocation6 + $0x17c] sm:$0xf]
        %v4262 = vunpack.c.l.b16 %v4198
        %v4263 = vunpack.c.l.b16 %v4199
        %v4264 = vunpack.c.l.b16 %v4200
        %v4265 = vunpack.c.l.b16 %v4201
        %v4266 = vunpack.c.l.b16 %v4202
        %v4267 = vunpack.c.l.b16 %v4203
        %v4268 = vunpack.c.l.b16 %v4204
        %v4269 = vunpack.c.l.b16 %v4205
        %v4270 = vunpack.c.l.b16 %v4206
        %v4271 = vunpack.c.l.b16 %v4207
        %v4272 = vunpack.c.l.b16 %v4208
        %v4273 = vunpack.c.l.b16 %v4209
        %v4274 = vunpack.c.l.b16 %v4210
        %v4275 = vunpack.c.l.b16 %v4211
        %v4276 = vunpack.c.l.b16 %v4212
        %v4277 = vunpack.c.l.b16 %v4213
        %v4278 = vunpack.c.l.b16 %v4214
        %v4279 = vunpack.c.l.b16 %v4215
        %v4280 = vunpack.c.l.b16 %v4216
        %v4281 = vunpack.c.l.b16 %v4217
        %v4282 = vunpack.c.l.b16 %v4218
        %v4283 = vunpack.c.l.b16 %v4219
        %v4284 = vunpack.c.l.b16 %v4220
        %v4285 = vunpack.c.l.b16 %v4221
        %v4286 = vunpack.c.l.b16 %v4222
        %v4287 = vunpack.c.l.b16 %v4223
        %v4288 = vunpack.c.l.b16 %v4224
        %v4289 = vunpack.c.l.b16 %v4225
        %v4290 = vunpack.c.l.b16 %v4226
        %v4291 = vunpack.c.l.b16 %v4227
        %v4292 = vunpack.c.l.b16 %v4228
        %v4293 = vunpack.c.l.b16 %v4229
        %v4294 = vpack.c.b16 %v4263, %v4262
        %v4295 = vpack.c.b16 %v4265, %v4264
        %v4296 = vpack.c.b16 %v4267, %v4266
        %v4297 = vpack.c.b16 %v4269, %v4268
        %v4298 = vpack.c.b16 %v4271, %v4270
        %v4299 = vpack.c.b16 %v4273, %v4272
        %v4300 = vpack.c.b16 %v4275, %v4274
        %v4301 = vpack.c.b16 %v4277, %v4276
        %v4302 = vpack.c.b16 %v4279, %v4278
        %v4303 = vpack.c.b16 %v4281, %v4280
        %v4304 = vpack.c.b16 %v4283, %v4282
        %v4305 = vpack.c.b16 %v4285, %v4284
        %v4306 = vpack.c.b16 %v4287, %v4286
        %v4307 = vpack.c.b16 %v4289, %v4288
        %v4308 = vpack.c.b16 %v4291, %v4290
        %v4309 = vpack.c.b16 %v4293, %v4292
        %4326 = vmatprep.subr.bf16.mxu0 0
        %4327 = vmatpush1.bf16.msra.mxu0 %v4301
        %4328 = vmatprep.subr.bf16.mxu0 0
        %4329 = vmatpush1.bf16.msra.mxu0 %v4300
        %4330 = vmatprep.subr.bf16.mxu0 0
        %4331 = vmatpush1.bf16.msra.mxu0 %v4299
        %4332 = vmatprep.subr.bf16.mxu0 0
        %4333 = vmatpush1.bf16.msra.mxu0 %v4298
        %4334 = vmatprep.subr.bf16.mxu0 0
        %4335 = vmatpush1.bf16.msra.mxu0 %v4297
        %4336 = vmatprep.subr.bf16.mxu0 0
        %4337 = vmatpush1.bf16.msra.mxu0 %v4296
        %4338 = vmatprep.subr.bf16.mxu0 0
        %4339 = vmatpush1.bf16.msra.mxu0 %v4295
        %4340 = vmatprep.subr.bf16.mxu0 0
        %4341 = vmatpush1.bf16.msra.mxu0 %v4294
        %4342 = vmatprep.subr.bf16.mxu0 0
        %4343 = vmatpush2.bf16.msra.mxu0 %v4309
        %4344 = vmatprep.subr.bf16.mxu0 0
        %4345 = vmatpush2.bf16.msra.mxu0 %v4308
        %4346 = vmatprep.subr.bf16.mxu0 0
        %4347 = vmatpush2.bf16.msra.mxu0 %v4307
        %4348 = vmatprep.subr.bf16.mxu0 0
        %4349 = vmatpush2.bf16.msra.mxu0 %v4306
        %4350 = vmatprep.subr.bf16.mxu0 0
        %4351 = vmatpush2.bf16.msra.mxu0 %v4305
        %4352 = vmatprep.subr.bf16.mxu0 0
        %4353 = vmatpush2.bf16.msra.mxu0 %v4304
        %4354 = vmatprep.subr.bf16.mxu0 0
        %4355 = vmatpush2.bf16.msra.mxu0 %v4303
        %4356 = vmatprep.subr.bf16.mxu0 0
        %4357 = vmatpush2.bf16.msra.mxu0 %v4302
        %4358 = vmatprep.mubr.bf16.mxu0 %v4182
        %4359 = vmatmul.mubr.bf16.gmra.mxu0 %v743
        %v4360 = vpop.f32.mrf.mxu0
        %v4361 = vadd.f32 0.0, %v4360
        %v4362 = vpop.f32.mrf.mxu0
        %v4363 = vpop.f32.mrf.mxu0
        %v4364 = vadd.f32 0.0, %v4363
        %v4365 = vpop.f32.mrf.mxu0
        %4366 = vmatprep.mubr.bf16.mxu0 %v4183
        %4367 = vmatmul.mubr.bf16.gmra.mxu0 %v744
        %v4368 = vpop.f32.mrf.mxu0
        %v4369 = vadd.f32 0.0, %v4368
        %v4370 = vpop.f32.mrf.mxu0
        %v4371 = vpop.f32.mrf.mxu0
        %v4372 = vadd.f32 0.0, %v4371
        %v4373 = vpop.f32.mrf.mxu0
        %4374 = vmatprep.mubr.bf16.mxu0 %v4184
        %4375 = vmatmul.mubr.bf16.gmra.mxu0 %v745
        %v4376 = vpop.f32.mrf.mxu0
        %v4377 = vadd.f32 0.0, %v4376
        %v4378 = vpop.f32.mrf.mxu0
        %v4379 = vpop.f32.mrf.mxu0
        %v4380 = vadd.f32 0.0, %v4379
        %v4381 = vpop.f32.mrf.mxu0
        %4382 = vmatprep.mubr.bf16.mxu0 %v4185
        %4383 = vmatmul.mubr.bf16.gmra.mxu0 %v746
        %v4384 = vpop.f32.mrf.mxu0
        %v4385 = vadd.f32 0.0, %v4384
        %v4386 = vpop.f32.mrf.mxu0
        %v4387 = vpop.f32.mrf.mxu0
        %v4388 = vadd.f32 0.0, %v4387
        %v4389 = vpop.f32.mrf.mxu0
        %4390 = vmatprep.mubr.bf16.mxu0 %v4186
        %4391 = vmatmul.mubr.bf16.gmra.mxu0 %v747
        %v4392 = vpop.f32.mrf.mxu0
        %v4393 = vadd.f32 0.0, %v4392
        %v4394 = vpop.f32.mrf.mxu0
        %v4395 = vpop.f32.mrf.mxu0
        %v4396 = vadd.f32 0.0, %v4395
        %v4397 = vpop.f32.mrf.mxu0
        %4398 = vmatprep.mubr.bf16.mxu0 %v4187
        %4399 = vmatmul.mubr.bf16.gmra.mxu0 %v748
        %v4400 = vpop.f32.mrf.mxu0
        %v4401 = vadd.f32 0.0, %v4400
        %v4402 = vpop.f32.mrf.mxu0
        %v4403 = vpop.f32.mrf.mxu0
        %v4404 = vadd.f32 0.0, %v4403
        %v4405 = vpop.f32.mrf.mxu0
        %4406 = vmatprep.mubr.bf16.mxu0 %v4188
        %4407 = vmatmul.mubr.bf16.gmra.mxu0 %v749
        %v4408 = vpop.f32.mrf.mxu0
        %v4409 = vadd.f32 0.0, %v4408
        %v4410 = vpop.f32.mrf.mxu0
        %v4411 = vpop.f32.mrf.mxu0
        %v4412 = vadd.f32 0.0, %v4411
        %v4413 = vpop.f32.mrf.mxu0
        %4414 = vmatprep.mubr.bf16.mxu0 %v4189
        %4415 = vmatmul.mubr.bf16.gmra.mxu0 %v750
        %v4416 = vpop.f32.mrf.mxu0
        %v4417 = vadd.f32 0.0, %v4416
        %v4418 = vpop.f32.mrf.mxu0
        %v4419 = vpop.f32.mrf.mxu0
        %v4420 = vadd.f32 0.0, %v4419
        %v4421 = vpop.f32.mrf.mxu0
        %4422 = vdwg.mxu0
        %v4423 = vadd.f32 %v4088, %v4361
        %v4424 = vadd.f32 %v4091, %v4364
        %v4425 = vadd.f32 %v4096, %v4369
        %v4426 = vadd.f32 %v4099, %v4372
        %v4427 = vadd.f32 %v4104, %v4377
        %v4428 = vadd.f32 %v4107, %v4380
        %v4429 = vadd.f32 %v4112, %v4385
        %v4430 = vadd.f32 %v4115, %v4388
        %v4431 = vadd.f32 %v4120, %v4393
        %v4432 = vadd.f32 %v4123, %v4396
        %v4433 = vadd.f32 %v4128, %v4401
        %v4434 = vadd.f32 %v4131, %v4404
        %v4435 = vadd.f32 %v4136, %v4409
        %v4436 = vadd.f32 %v4139, %v4412
        %v4437 = vadd.f32 %v4144, %v4417
        %v4438 = vadd.f32 %v4147, %v4420
        %s4439 = sadd.s32 %s296, 8
        %s4440 = smul.u32 %s4439, 3
        %s4441 = smul.addr %s4440, 4
        %s4442 = scalar_lea.vmem [#allocation2], %s4441
        %v4443 = vld [vmem:[%s4442] sm:$0xf]
        %v4444 = vld [vmem:[%s4442 + $0x4] sm:$0xf]
        %v4445 = vld [vmem:[%s4442 + $0xc] sm:$0xf]
        %v4446 = vld [vmem:[%s4442 + $0x10] sm:$0xf]
        %v4447 = vld [vmem:[%s4442 + $0x18] sm:$0xf]
        %v4448 = vld [vmem:[%s4442 + $0x1c] sm:$0xf]
        %v4449 = vld [vmem:[%s4442 + $0x24] sm:$0xf]
        %v4450 = vld [vmem:[%s4442 + $0x28] sm:$0xf]
        %v4451 = vld [vmem:[%s4442 + $0x30] sm:$0xf]
        %v4452 = vld [vmem:[%s4442 + $0x34] sm:$0xf]
        %v4453 = vld [vmem:[%s4442 + $0x3c] sm:$0xf]
        %v4454 = vld [vmem:[%s4442 + $0x40] sm:$0xf]
        %v4455 = vld [vmem:[%s4442 + $0x48] sm:$0xf]
        %v4456 = vld [vmem:[%s4442 + $0x4c] sm:$0xf]
        %v4457 = vld [vmem:[%s4442 + $0x54] sm:$0xf]
        %v4458 = vld [vmem:[%s4442 + $0x58] sm:$0xf]
        %v4459 = vld [vmem:[%s4442] sm:$0xc]
        %v4460 = vld [vmem:[%s4442 + $0x8] sm:$0x3]
        %v4461 = vld [vmem:[%s4442 + $0xc] sm:$0xc]
        %v4462 = vld [vmem:[%s4442 + $0x14] sm:$0x3]
        %v4463 = vld [vmem:[%s4442 + $0x18] sm:$0xc]
        %v4464 = vld [vmem:[%s4442 + $0x20] sm:$0x3]
        %v4465 = vld [vmem:[%s4442 + $0x24] sm:$0xc]
        %v4466 = vld [vmem:[%s4442 + $0x2c] sm:$0x3]
        %v4467 = vld [vmem:[%s4442 + $0x30] sm:$0xc]
        %v4468 = vld [vmem:[%s4442 + $0x38] sm:$0x3]
        %v4469 = vld [vmem:[%s4442 + $0x3c] sm:$0xc]
        %v4470 = vld [vmem:[%s4442 + $0x44] sm:$0x3]
        %v4471 = vld [vmem:[%s4442 + $0x48] sm:$0xc]
        %v4472 = vld [vmem:[%s4442 + $0x50] sm:$0x3]
        %v4473 = vld [vmem:[%s4442 + $0x54] sm:$0xc]
        %v4474 = vld [vmem:[%s4442 + $0x5c] sm:$0x3]
        %v4499 = vrot.slane %v4459, 6
        %v4500 = vrot.slane %v4499, 4
        %v4501 = vrot.slane %v4444, 6
        %v4502 = vsel %vm421, %v4500, %v4501
        %v4503 = vrot.slane %v4501, 4
        %v4504 = vrot.slane %v4460, 6
        %v4505 = vsel %vm421, %v4503, %v4504
        %v4506 = vrot.slane %v4461, 6
        %v4507 = vrot.slane %v4506, 4
        %v4508 = vrot.slane %v4446, 6
        %v4509 = vsel %vm421, %v4507, %v4508
        %v4510 = vrot.slane %v4508, 4
        %v4511 = vrot.slane %v4462, 6
        %v4512 = vsel %vm421, %v4510, %v4511
        %v4513 = vrot.slane %v4463, 6
        %v4514 = vrot.slane %v4513, 4
        %v4515 = vrot.slane %v4448, 6
        %v4516 = vsel %vm421, %v4514, %v4515
        %v4517 = vrot.slane %v4515, 4
        %v4518 = vrot.slane %v4464, 6
        %v4519 = vsel %vm421, %v4517, %v4518
        %v4520 = vrot.slane %v4465, 6
        %v4521 = vrot.slane %v4520, 4
        %v4522 = vrot.slane %v4450, 6
        %v4523 = vsel %vm421, %v4521, %v4522
        %v4524 = vrot.slane %v4522, 4
        %v4525 = vrot.slane %v4466, 6
        %v4526 = vsel %vm421, %v4524, %v4525
        %v4527 = vrot.slane %v4467, 6
        %v4528 = vrot.slane %v4527, 4
        %v4529 = vrot.slane %v4452, 6
        %v4530 = vsel %vm421, %v4528, %v4529
        %v4531 = vrot.slane %v4529, 4
        %v4532 = vrot.slane %v4468, 6
        %v4533 = vsel %vm421, %v4531, %v4532
        %v4534 = vrot.slane %v4469, 6
        %v4535 = vrot.slane %v4534, 4
        %v4536 = vrot.slane %v4454, 6
        %v4537 = vsel %vm421, %v4535, %v4536
        %v4538 = vrot.slane %v4536, 4
        %v4539 = vrot.slane %v4470, 6
        %v4540 = vsel %vm421, %v4538, %v4539
        %v4541 = vrot.slane %v4471, 6
        %v4542 = vrot.slane %v4541, 4
        %v4543 = vrot.slane %v4456, 6
        %v4544 = vsel %vm421, %v4542, %v4543
        %v4545 = vrot.slane %v4543, 4
        %v4546 = vrot.slane %v4472, 6
        %v4547 = vsel %vm421, %v4545, %v4546
        %v4548 = vrot.slane %v4473, 6
        %v4549 = vrot.slane %v4548, 4
        %v4550 = vrot.slane %v4458, 6
        %v4551 = vsel %vm421, %v4549, %v4550
        %v4552 = vrot.slane %v4550, 4
        %v4553 = vrot.slane %v4474, 6
        %v4554 = vsel %vm421, %v4552, %v4553
        %v4563 = vunpack.c.l.b16 %v4443
        %v4564 = vunpack.c.l.b16 %v4444
        %v4565 = vunpack.c.l.b16 %v4445
        %v4566 = vunpack.c.l.b16 %v4446
        %v4567 = vunpack.c.l.b16 %v4447
        %v4568 = vunpack.c.l.b16 %v4448
        %v4569 = vunpack.c.l.b16 %v4449
        %v4570 = vunpack.c.l.b16 %v4450
        %v4571 = vunpack.c.l.b16 %v4451
        %v4572 = vunpack.c.l.b16 %v4452
        %v4573 = vunpack.c.l.b16 %v4453
        %v4574 = vunpack.c.l.b16 %v4454
        %v4575 = vunpack.c.l.b16 %v4455
        %v4576 = vunpack.c.l.b16 %v4456
        %v4577 = vunpack.c.l.b16 %v4457
        %v4578 = vunpack.c.l.b16 %v4458
        %v4579 = vpack.c.b16 %v4564, %v4563
        %v4580 = vpack.c.b16 %v4566, %v4565
        %v4581 = vpack.c.b16 %v4568, %v4567
        %v4582 = vpack.c.b16 %v4570, %v4569
        %v4583 = vpack.c.b16 %v4572, %v4571
        %v4584 = vpack.c.b16 %v4574, %v4573
        %v4585 = vpack.c.b16 %v4576, %v4575
        %v4586 = vpack.c.b16 %v4578, %v4577
        %v4595 = vunpack.c.l.b16 %v4502
        %v4596 = vunpack.c.l.b16 %v4505
        %v4597 = vunpack.c.l.b16 %v4509
        %v4598 = vunpack.c.l.b16 %v4512
        %v4599 = vunpack.c.l.b16 %v4516
        %v4600 = vunpack.c.l.b16 %v4519
        %v4601 = vunpack.c.l.b16 %v4523
        %v4602 = vunpack.c.l.b16 %v4526
        %v4603 = vunpack.c.l.b16 %v4530
        %v4604 = vunpack.c.l.b16 %v4533
        %v4605 = vunpack.c.l.b16 %v4537
        %v4606 = vunpack.c.l.b16 %v4540
        %v4607 = vunpack.c.l.b16 %v4544
        %v4608 = vunpack.c.l.b16 %v4547
        %v4609 = vunpack.c.l.b16 %v4551
        %v4610 = vunpack.c.l.b16 %v4554
        %v4611 = vpack.c.b16 %v4596, %v4595
        %v4612 = vpack.c.b16 %v4598, %v4597
        %v4613 = vpack.c.b16 %v4600, %v4599
        %v4614 = vpack.c.b16 %v4602, %v4601
        %v4615 = vpack.c.b16 %v4604, %v4603
        %v4616 = vpack.c.b16 %v4606, %v4605
        %v4617 = vpack.c.b16 %v4608, %v4607
        %v4618 = vpack.c.b16 %v4610, %v4609
        %v4627 = vld [vmem:[#allocation6 + $0x180] sm:$0xf]
        %v4628 = vld [vmem:[#allocation6 + $0x184] sm:$0xf]
        %v4629 = vld [vmem:[#allocation6 + $0x188] sm:$0xf]
        %v4630 = vld [vmem:[#allocation6 + $0x18c] sm:$0xf]
        %v4631 = vld [vmem:[#allocation6 + $0x190] sm:$0xf]
        %v4632 = vld [vmem:[#allocation6 + $0x194] sm:$0xf]
        %v4633 = vld [vmem:[#allocation6 + $0x198] sm:$0xf]
        %v4634 = vld [vmem:[#allocation6 + $0x19c] sm:$0xf]
        %v4635 = vld [vmem:[#allocation6 + $0x1a0] sm:$0xf]
        %v4636 = vld [vmem:[#allocation6 + $0x1a4] sm:$0xf]
        %v4637 = vld [vmem:[#allocation6 + $0x1a8] sm:$0xf]
        %v4638 = vld [vmem:[#allocation6 + $0x1ac] sm:$0xf]
        %v4639 = vld [vmem:[#allocation6 + $0x1b0] sm:$0xf]
        %v4640 = vld [vmem:[#allocation6 + $0x1b4] sm:$0xf]
        %v4641 = vld [vmem:[#allocation6 + $0x1b8] sm:$0xf]
        %v4642 = vld [vmem:[#allocation6 + $0x1bc] sm:$0xf]
        %v4643 = vld [vmem:[#allocation6 + $0x1c0] sm:$0xf]
        %v4644 = vld [vmem:[#allocation6 + $0x1c4] sm:$0xf]
        %v4645 = vld [vmem:[#allocation6 + $0x1c8] sm:$0xf]
        %v4646 = vld [vmem:[#allocation6 + $0x1cc] sm:$0xf]
        %v4647 = vld [vmem:[#allocation6 + $0x1d0] sm:$0xf]
        %v4648 = vld [vmem:[#allocation6 + $0x1d4] sm:$0xf]
        %v4649 = vld [vmem:[#allocation6 + $0x1d8] sm:$0xf]
        %v4650 = vld [vmem:[#allocation6 + $0x1dc] sm:$0xf]
        %v4651 = vld [vmem:[#allocation6 + $0x1e0] sm:$0xf]
        %v4652 = vld [vmem:[#allocation6 + $0x1e4] sm:$0xf]
        %v4653 = vld [vmem:[#allocation6 + $0x1e8] sm:$0xf]
        %v4654 = vld [vmem:[#allocation6 + $0x1ec] sm:$0xf]
        %v4655 = vld [vmem:[#allocation6 + $0x1f0] sm:$0xf]
        %v4656 = vld [vmem:[#allocation6 + $0x1f4] sm:$0xf]
        %v4657 = vld [vmem:[#allocation6 + $0x1f8] sm:$0xf]
        %v4658 = vld [vmem:[#allocation6 + $0x1fc] sm:$0xf]
        %v4691 = vunpack.c.l.b16 %v4627
        %v4692 = vunpack.c.l.b16 %v4628
        %v4693 = vunpack.c.l.b16 %v4629
        %v4694 = vunpack.c.l.b16 %v4630
        %v4695 = vunpack.c.l.b16 %v4631
        %v4696 = vunpack.c.l.b16 %v4632
        %v4697 = vunpack.c.l.b16 %v4633
        %v4698 = vunpack.c.l.b16 %v4634
        %v4699 = vunpack.c.l.b16 %v4635
        %v4700 = vunpack.c.l.b16 %v4636
        %v4701 = vunpack.c.l.b16 %v4637
        %v4702 = vunpack.c.l.b16 %v4638
        %v4703 = vunpack.c.l.b16 %v4639
        %v4704 = vunpack.c.l.b16 %v4640
        %v4705 = vunpack.c.l.b16 %v4641
        %v4706 = vunpack.c.l.b16 %v4642
        %v4707 = vunpack.c.l.b16 %v4643
        %v4708 = vunpack.c.l.b16 %v4644
        %v4709 = vunpack.c.l.b16 %v4645
        %v4710 = vunpack.c.l.b16 %v4646
        %v4711 = vunpack.c.l.b16 %v4647
        %v4712 = vunpack.c.l.b16 %v4648
        %v4713 = vunpack.c.l.b16 %v4649
        %v4714 = vunpack.c.l.b16 %v4650
        %v4715 = vunpack.c.l.b16 %v4651
        %v4716 = vunpack.c.l.b16 %v4652
        %v4717 = vunpack.c.l.b16 %v4653
        %v4718 = vunpack.c.l.b16 %v4654
        %v4719 = vunpack.c.l.b16 %v4655
        %v4720 = vunpack.c.l.b16 %v4656
        %v4721 = vunpack.c.l.b16 %v4657
        %v4722 = vunpack.c.l.b16 %v4658
        %v4723 = vpack.c.b16 %v4692, %v4691
        %v4724 = vpack.c.b16 %v4694, %v4693
        %v4725 = vpack.c.b16 %v4696, %v4695
        %v4726 = vpack.c.b16 %v4698, %v4697
        %v4727 = vpack.c.b16 %v4700, %v4699
        %v4728 = vpack.c.b16 %v4702, %v4701
        %v4729 = vpack.c.b16 %v4704, %v4703
        %v4730 = vpack.c.b16 %v4706, %v4705
        %v4731 = vpack.c.b16 %v4708, %v4707
        %v4732 = vpack.c.b16 %v4710, %v4709
        %v4733 = vpack.c.b16 %v4712, %v4711
        %v4734 = vpack.c.b16 %v4714, %v4713
        %v4735 = vpack.c.b16 %v4716, %v4715
        %v4736 = vpack.c.b16 %v4718, %v4717
        %v4737 = vpack.c.b16 %v4720, %v4719
        %v4738 = vpack.c.b16 %v4722, %v4721
        %4755 = vmatprep.subr.bf16.mxu0 0
        %4756 = vmatpush1.bf16.msra.mxu0 %v4730
        %4757 = vmatprep.subr.bf16.mxu0 0
        %4758 = vmatpush1.bf16.msra.mxu0 %v4729
        %4759 = vmatprep.subr.bf16.mxu0 0
        %4760 = vmatpush1.bf16.msra.mxu0 %v4728
        %4761 = vmatprep.subr.bf16.mxu0 0
        %4762 = vmatpush1.bf16.msra.mxu0 %v4727
        %4763 = vmatprep.subr.bf16.mxu0 0
        %4764 = vmatpush1.bf16.msra.mxu0 %v4726
        %4765 = vmatprep.subr.bf16.mxu0 0
        %4766 = vmatpush1.bf16.msra.mxu0 %v4725
        %4767 = vmatprep.subr.bf16.mxu0 0
        %4768 = vmatpush1.bf16.msra.mxu0 %v4724
        %4769 = vmatprep.subr.bf16.mxu0 0
        %4770 = vmatpush1.bf16.msra.mxu0 %v4723
        %4771 = vmatprep.subr.bf16.mxu0 0
        %4772 = vmatpush2.bf16.msra.mxu0 %v4738
        %4773 = vmatprep.subr.bf16.mxu0 0
        %4774 = vmatpush2.bf16.msra.mxu0 %v4737
        %4775 = vmatprep.subr.bf16.mxu0 0
        %4776 = vmatpush2.bf16.msra.mxu0 %v4736
        %4777 = vmatprep.subr.bf16.mxu0 0
        %4778 = vmatpush2.bf16.msra.mxu0 %v4735
        %4779 = vmatprep.subr.bf16.mxu0 0
        %4780 = vmatpush2.bf16.msra.mxu0 %v4734
        %4781 = vmatprep.subr.bf16.mxu0 0
        %4782 = vmatpush2.bf16.msra.mxu0 %v4733
        %4783 = vmatprep.subr.bf16.mxu0 0
        %4784 = vmatpush2.bf16.msra.mxu0 %v4732
        %4785 = vmatprep.subr.bf16.mxu0 0
        %4786 = vmatpush2.bf16.msra.mxu0 %v4731
        %4787 = vmatprep.mubr.bf16.mxu0 %v4611
        %4788 = vmatmul.mubr.bf16.gmra.mxu0 %v4579
        %v4789 = vpop.f32.mrf.mxu0
        %v4790 = vadd.f32 0.0, %v4789
        %v4791 = vpop.f32.mrf.mxu0
        %v4792 = vpop.f32.mrf.mxu0
        %v4793 = vadd.f32 0.0, %v4792
        %v4794 = vpop.f32.mrf.mxu0
        %4795 = vmatprep.mubr.bf16.mxu0 %v4612
        %4796 = vmatmul.mubr.bf16.gmra.mxu0 %v4580
        %v4797 = vpop.f32.mrf.mxu0
        %v4798 = vadd.f32 0.0, %v4797
        %v4799 = vpop.f32.mrf.mxu0
        %v4800 = vpop.f32.mrf.mxu0
        %v4801 = vadd.f32 0.0, %v4800
        %v4802 = vpop.f32.mrf.mxu0
        %4803 = vmatprep.mubr.bf16.mxu0 %v4613
        %4804 = vmatmul.mubr.bf16.gmra.mxu0 %v4581
        %v4805 = vpop.f32.mrf.mxu0
        %v4806 = vadd.f32 0.0, %v4805
        %v4807 = vpop.f32.mrf.mxu0
        %v4808 = vpop.f32.mrf.mxu0
        %v4809 = vadd.f32 0.0, %v4808
        %v4810 = vpop.f32.mrf.mxu0
        %4811 = vmatprep.mubr.bf16.mxu0 %v4614
        %4812 = vmatmul.mubr.bf16.gmra.mxu0 %v4582
        %v4813 = vpop.f32.mrf.mxu0
        %v4814 = vadd.f32 0.0, %v4813
        %v4815 = vpop.f32.mrf.mxu0
        %v4816 = vpop.f32.mrf.mxu0
        %v4817 = vadd.f32 0.0, %v4816
        %v4818 = vpop.f32.mrf.mxu0
        %4819 = vmatprep.mubr.bf16.mxu0 %v4615
        %4820 = vmatmul.mubr.bf16.gmra.mxu0 %v4583
        %v4821 = vpop.f32.mrf.mxu0
        %v4822 = vadd.f32 0.0, %v4821
        %v4823 = vpop.f32.mrf.mxu0
        %v4824 = vpop.f32.mrf.mxu0
        %v4825 = vadd.f32 0.0, %v4824
        %v4826 = vpop.f32.mrf.mxu0
        %4827 = vmatprep.mubr.bf16.mxu0 %v4616
        %4828 = vmatmul.mubr.bf16.gmra.mxu0 %v4584
        %v4829 = vpop.f32.mrf.mxu0
        %v4830 = vadd.f32 0.0, %v4829
        %v4831 = vpop.f32.mrf.mxu0
        %v4832 = vpop.f32.mrf.mxu0
        %v4833 = vadd.f32 0.0, %v4832
        %v4834 = vpop.f32.mrf.mxu0
        %4835 = vmatprep.mubr.bf16.mxu0 %v4617
        %4836 = vmatmul.mubr.bf16.gmra.mxu0 %v4585
        %v4837 = vpop.f32.mrf.mxu0
        %v4838 = vadd.f32 0.0, %v4837
        %v4839 = vpop.f32.mrf.mxu0
        %v4840 = vpop.f32.mrf.mxu0
        %v4841 = vadd.f32 0.0, %v4840
        %v4842 = vpop.f32.mrf.mxu0
        %4843 = vmatprep.mubr.bf16.mxu0 %v4618
        %4844 = vmatmul.mubr.bf16.gmra.mxu0 %v4586
        %v4845 = vpop.f32.mrf.mxu0
        %v4846 = vadd.f32 0.0, %v4845
        %v4847 = vpop.f32.mrf.mxu0
        %v4848 = vpop.f32.mrf.mxu0
        %v4849 = vadd.f32 0.0, %v4848
        %v4850 = vpop.f32.mrf.mxu0
        %4851 = vdwg.mxu0
        %v4852 = vadd.f32 %v4423, %v4790
        %v4853 = vadd.f32 %v4424, %v4793
        %v4854 = vadd.f32 %v4425, %v4798
        %v4855 = vadd.f32 %v4426, %v4801
        %v4856 = vadd.f32 %v4427, %v4806
        %v4857 = vadd.f32 %v4428, %v4809
        %v4858 = vadd.f32 %v4429, %v4814
        %v4859 = vadd.f32 %v4430, %v4817
        %v4860 = vadd.f32 %v4431, %v4822
        %v4861 = vadd.f32 %v4432, %v4825
        %v4862 = vadd.f32 %v4433, %v4830
        %v4863 = vadd.f32 %v4434, %v4833
        %v4864 = vadd.f32 %v4435, %v4838
        %v4865 = vadd.f32 %v4436, %v4841
        %v4866 = vadd.f32 %v4437, %v4846
        %v4867 = vadd.f32 %v4438, %v4849
        %v4868 = vld [vmem:[%s4442 + $0x8] sm:$0xf]
        %v4869 = vld [vmem:[%s4442 + $0x14] sm:$0xf]
        %v4870 = vld [vmem:[%s4442 + $0x20] sm:$0xf]
        %v4871 = vld [vmem:[%s4442 + $0x2c] sm:$0xf]
        %v4872 = vld [vmem:[%s4442 + $0x38] sm:$0xf]
        %v4873 = vld [vmem:[%s4442 + $0x44] sm:$0xf]
        %v4874 = vld [vmem:[%s4442 + $0x50] sm:$0xf]
        %v4875 = vld [vmem:[%s4442 + $0x5c] sm:$0xf]
        %v4876 = vld [vmem:[#allocation6 + $0x200] sm:$0xf]
        %v4877 = vld [vmem:[#allocation6 + $0x204] sm:$0xf]
        %v4878 = vld [vmem:[#allocation6 + $0x208] sm:$0xf]
        %v4879 = vld [vmem:[#allocation6 + $0x20c] sm:$0xf]
        %v4880 = vld [vmem:[#allocation6 + $0x210] sm:$0xf]
        %v4881 = vld [vmem:[#allocation6 + $0x214] sm:$0xf]
        %v4882 = vld [vmem:[#allocation6 + $0x218] sm:$0xf]
        %v4883 = vld [vmem:[#allocation6 + $0x21c] sm:$0xf]
        %v4884 = vld [vmem:[#allocation6 + $0x220] sm:$0xf]
        %v4885 = vld [vmem:[#allocation6 + $0x224] sm:$0xf]
        %v4886 = vld [vmem:[#allocation6 + $0x228] sm:$0xf]
        %v4887 = vld [vmem:[#allocation6 + $0x22c] sm:$0xf]
        %v4888 = vld [vmem:[#allocation6 + $0x230] sm:$0xf]
        %v4889 = vld [vmem:[#allocation6 + $0x234] sm:$0xf]
        %v4890 = vld [vmem:[#allocation6 + $0x238] sm:$0xf]
        %v4891 = vld [vmem:[#allocation6 + $0x23c] sm:$0xf]
        %v4900 = vunpack.c.l.b16 %v4868
        %v4901 = vunpack.c.l.b16 %v4869
        %v4902 = vunpack.c.l.b16 %v4870
        %v4903 = vunpack.c.l.b16 %v4871
        %v4904 = vunpack.c.l.b16 %v4872
        %v4905 = vunpack.c.l.b16 %v4873
        %v4906 = vunpack.c.l.b16 %v4874
        %v4907 = vunpack.c.l.b16 %v4875
        %v4908 = vpack.c.b16 %v4900, %v4564
        %v4909 = vpack.c.b16 %v4901, %v4566
        %v4910 = vpack.c.b16 %v4902, %v4568
        %v4911 = vpack.c.b16 %v4903, %v4570
        %v4912 = vpack.c.b16 %v4904, %v4572
        %v4913 = vpack.c.b16 %v4905, %v4574
        %v4914 = vpack.c.b16 %v4906, %v4576
        %v4915 = vpack.c.b16 %v4907, %v4578
        %v4940 = vunpack.c.l.b16 %v4876
        %v4941 = vunpack.c.l.b16 %v4877
        %v4942 = vunpack.c.l.b16 %v4878
        %v4943 = vunpack.c.l.b16 %v4879
        %v4944 = vunpack.c.l.b16 %v4880
        %v4945 = vunpack.c.l.b16 %v4881
        %v4946 = vunpack.c.l.b16 %v4882
        %v4947 = vunpack.c.l.b16 %v4883
        %v4948 = vunpack.c.l.b16 %v4884
        %v4949 = vunpack.c.l.b16 %v4885
        %v4950 = vunpack.c.l.b16 %v4886
        %v4951 = vunpack.c.l.b16 %v4887
        %v4952 = vunpack.c.l.b16 %v4888
        %v4953 = vunpack.c.l.b16 %v4889
        %v4954 = vunpack.c.l.b16 %v4890
        %v4955 = vunpack.c.l.b16 %v4891
        %v4956 = vpack.c.b16 %v4941, %v4940
        %v4957 = vpack.c.b16 %v4943, %v4942
        %v4958 = vpack.c.b16 %v4945, %v4944
        %v4959 = vpack.c.b16 %v4947, %v4946
        %v4960 = vpack.c.b16 %v4949, %v4948
        %v4961 = vpack.c.b16 %v4951, %v4950
        %v4962 = vpack.c.b16 %v4953, %v4952
        %v4963 = vpack.c.b16 %v4955, %v4954
        %4972 = vmatprep.subr.bf16.mxu0 0
        %4973 = vmatpush1.bf16.msra.mxu0 %v4963
        %4974 = vmatprep.subr.bf16.mxu0 0
        %4975 = vmatpush1.bf16.msra.mxu0 %v4962
        %4976 = vmatprep.subr.bf16.mxu0 0
        %4977 = vmatpush1.bf16.msra.mxu0 %v4961
        %4978 = vmatprep.subr.bf16.mxu0 0
        %4979 = vmatpush1.bf16.msra.mxu0 %v4960
        %4980 = vmatprep.subr.bf16.mxu0 0
        %4981 = vmatpush1.bf16.msra.mxu0 %v4959
        %4982 = vmatprep.subr.bf16.mxu0 0
        %4983 = vmatpush1.bf16.msra.mxu0 %v4958
        %4984 = vmatprep.subr.bf16.mxu0 0
        %4985 = vmatpush1.bf16.msra.mxu0 %v4957
        %4986 = vmatprep.subr.bf16.mxu0 0
        %4987 = vmatpush1.bf16.msra.mxu0 %v4956
        %4988 = vmatprep.subr.bf16.mxu0 0
        %4989 = vmatpush2.bf16.msra.mxu0 0
        %4990 = vmatprep.subr.bf16.mxu0 0
        %4991 = vmatpush2.bf16.msra.mxu0 0
        %4992 = vmatprep.subr.bf16.mxu0 0
        %4993 = vmatpush2.bf16.msra.mxu0 0
        %4994 = vmatprep.subr.bf16.mxu0 0
        %4995 = vmatpush2.bf16.msra.mxu0 0
        %4996 = vmatprep.subr.bf16.mxu0 0
        %4997 = vmatpush2.bf16.msra.mxu0 0
        %4998 = vmatprep.subr.bf16.mxu0 0
        %4999 = vmatpush2.bf16.msra.mxu0 0
        %5000 = vmatprep.subr.bf16.mxu0 0
        %5001 = vmatpush2.bf16.msra.mxu0 0
        %5002 = vmatprep.subr.bf16.mxu0 0
        %5003 = vmatpush2.bf16.msra.mxu0 0
        %5004 = vmatprep.mubr.bf16.mxu0 0
        %5005 = vmatmul.mubr.bf16.gmra.mxu0 %v4908
        %v5006 = vpop.f32.mrf.mxu0
        %v5007 = vadd.f32 0.0, %v5006
        %v5008 = vpop.f32.mrf.mxu0
        %v5009 = vpop.f32.mrf.mxu0
        %v5010 = vadd.f32 0.0, %v5009
        %v5011 = vpop.f32.mrf.mxu0
        %5012 = vmatprep.mubr.bf16.mxu0 0
        %5013 = vmatmul.mubr.bf16.gmra.mxu0 %v4909
        %v5014 = vpop.f32.mrf.mxu0
        %v5015 = vadd.f32 0.0, %v5014
        %v5016 = vpop.f32.mrf.mxu0
        %v5017 = vpop.f32.mrf.mxu0
        %v5018 = vadd.f32 0.0, %v5017
        %v5019 = vpop.f32.mrf.mxu0
        %5020 = vmatprep.mubr.bf16.mxu0 0
        %5021 = vmatmul.mubr.bf16.gmra.mxu0 %v4910
        %v5022 = vpop.f32.mrf.mxu0
        %v5023 = vadd.f32 0.0, %v5022
        %v5024 = vpop.f32.mrf.mxu0
        %v5025 = vpop.f32.mrf.mxu0
        %v5026 = vadd.f32 0.0, %v5025
        %v5027 = vpop.f32.mrf.mxu0
        %5028 = vmatprep.mubr.bf16.mxu0 0
        %5029 = vmatmul.mubr.bf16.gmra.mxu0 %v4911
        %v5030 = vpop.f32.mrf.mxu0
        %v5031 = vadd.f32 0.0, %v5030
        %v5032 = vpop.f32.mrf.mxu0
        %v5033 = vpop.f32.mrf.mxu0
        %v5034 = vadd.f32 0.0, %v5033
        %v5035 = vpop.f32.mrf.mxu0
        %5036 = vmatprep.mubr.bf16.mxu0 0
        %5037 = vmatmul.mubr.bf16.gmra.mxu0 %v4912
        %v5038 = vpop.f32.mrf.mxu0
        %v5039 = vadd.f32 0.0, %v5038
        %v5040 = vpop.f32.mrf.mxu0
        %v5041 = vpop.f32.mrf.mxu0
        %v5042 = vadd.f32 0.0, %v5041
        %v5043 = vpop.f32.mrf.mxu0
        %5044 = vmatprep.mubr.bf16.mxu0 0
        %5045 = vmatmul.mubr.bf16.gmra.mxu0 %v4913
        %v5046 = vpop.f32.mrf.mxu0
        %v5047 = vadd.f32 0.0, %v5046
        %v5048 = vpop.f32.mrf.mxu0
        %v5049 = vpop.f32.mrf.mxu0
        %v5050 = vadd.f32 0.0, %v5049
        %v5051 = vpop.f32.mrf.mxu0
        %5052 = vmatprep.mubr.bf16.mxu0 0
        %5053 = vmatmul.mubr.bf16.gmra.mxu0 %v4914
        %v5054 = vpop.f32.mrf.mxu0
        %v5055 = vadd.f32 0.0, %v5054
        %v5056 = vpop.f32.mrf.mxu0
        %v5057 = vpop.f32.mrf.mxu0
        %v5058 = vadd.f32 0.0, %v5057
        %v5059 = vpop.f32.mrf.mxu0
        %5060 = vmatprep.mubr.bf16.mxu0 0
        %5061 = vmatmul.mubr.bf16.gmra.mxu0 %v4915
        %v5062 = vpop.f32.mrf.mxu0
        %v5063 = vadd.f32 0.0, %v5062
        %v5064 = vpop.f32.mrf.mxu0
        %v5065 = vpop.f32.mrf.mxu0
        %v5066 = vadd.f32 0.0, %v5065
        %v5067 = vpop.f32.mrf.mxu0
        %5068 = vdwg.mxu0
        %v5069 = vadd.f32 %v4852, %v5007
        %v5070 = vadd.f32 %v4853, %v5010
        %v5071 = vadd.f32 %v4854, %v5015
        %v5072 = vadd.f32 %v4855, %v5018
        %v5073 = vadd.f32 %v4856, %v5023
        %v5074 = vadd.f32 %v4857, %v5026
        %v5075 = vadd.f32 %v4858, %v5031
        %v5076 = vadd.f32 %v4859, %v5034
        %v5077 = vadd.f32 %v4860, %v5039
        %v5078 = vadd.f32 %v4861, %v5042
        %v5079 = vadd.f32 %v4862, %v5047
        %v5080 = vadd.f32 %v4863, %v5050
        %v5081 = vadd.f32 %v4864, %v5055
        %v5082 = vadd.f32 %v4865, %v5058
        %v5083 = vadd.f32 %v4866, %v5063
        %v5084 = vadd.f32 %v4867, %v5066
        %v5085 = vlaneseq
        %v5086 = vshrl.u32 %v5085, 7
        %v5087 = vsub.s32 2, %v5086
        %v5088 = vrot.slane %v598, %v5087
        %v5089 = vadd.f32 %v5069, %v5088
        %v5090 = vadd.f32 %v5070, %v5088
        %v5091 = vadd.f32 %v5071, %v5088
        %v5092 = vadd.f32 %v5072, %v5088
        %v5093 = vadd.f32 %v5073, %v5088
        %v5094 = vadd.f32 %v5074, %v5088
        %v5095 = vadd.f32 %v5075, %v5088
        %v5096 = vadd.f32 %v5076, %v5088
        %v5097 = vadd.f32 %v5077, %v5088
        %v5098 = vadd.f32 %v5078, %v5088
        %v5099 = vadd.f32 %v5079, %v5088
        %v5100 = vadd.f32 %v5080, %v5088
        %v5101 = vadd.f32 %v5081, %v5088
        %v5102 = vadd.f32 %v5082, %v5088
        %v5103 = vadd.f32 %v5083, %v5088
        %v5104 = vadd.f32 %v5084, %v5088
        %v5105 = vmax.f32 %v5089, 0.0
        %v5106 = vmax.f32 %v5090, 0.0
        %v5107 = vmax.f32 %v5091, 0.0
        %v5108 = vmax.f32 %v5092, 0.0
        %v5109 = vmax.f32 %v5093, 0.0
        %v5110 = vmax.f32 %v5094, 0.0
        %v5111 = vmax.f32 %v5095, 0.0
        %v5112 = vmax.f32 %v5096, 0.0
        %v5113 = vmax.f32 %v5097, 0.0
        %v5114 = vmax.f32 %v5098, 0.0
        %v5115 = vmax.f32 %v5099, 0.0
        %v5116 = vmax.f32 %v5100, 0.0
        %v5117 = vmax.f32 %v5101, 0.0
        %v5118 = vmax.f32 %v5102, 0.0
        %v5119 = vmax.f32 %v5103, 0.0
        %v5120 = vmax.f32 %v5104, 0.0
        %v5121 = vpack.c.bf16 %v5106, %v5105
        %v5122 = vpack.c.bf16 %v5108, %v5107
        %v5123 = vpack.c.bf16 %v5110, %v5109
        %v5124 = vpack.c.bf16 %v5112, %v5111
        %v5125 = vpack.c.bf16 %v5114, %v5113
        %v5126 = vpack.c.bf16 %v5116, %v5115
        %v5127 = vpack.c.bf16 %v5118, %v5117
        %v5128 = vpack.c.bf16 %v5120, %v5119
        %v5129 = vld [vmem:[%s4 + $0x80] sm:$0xf]
        %v5130 = vld [vmem:[%s4 + $0x84] sm:$0xf]
        %v5131 = vld [vmem:[%s4 + $0x88] sm:$0xf]
        %v5132 = vld [vmem:[%s4 + $0x8c] sm:$0xf]
        %v5133 = vld [vmem:[%s4 + $0x90] sm:$0xf]
        %v5134 = vld [vmem:[%s4 + $0x94] sm:$0xf]
        %v5135 = vld [vmem:[%s4 + $0x98] sm:$0xf]
        %v5136 = vld [vmem:[%s4 + $0x9c] sm:$0xf]
        %v5137 = vld [vmem:[%s4 + $0xa0] sm:$0xf]
        %v5138 = vld [vmem:[%s4 + $0xa4] sm:$0xf]
        %v5139 = vld [vmem:[%s4 + $0xa8] sm:$0xf]
        %v5140 = vld [vmem:[%s4 + $0xac] sm:$0xf]
        %v5141 = vld [vmem:[%s4 + $0xb0] sm:$0xf]
        %v5142 = vld [vmem:[%s4 + $0xb4] sm:$0xf]
        %v5143 = vld [vmem:[%s4 + $0xb8] sm:$0xf]
        %v5144 = vld [vmem:[%s4 + $0xbc] sm:$0xf]
        %v5161 = vunpack.c.l.b16 %v5129
        %v5162 = vunpack.c.l.b16 %v5130
        %v5163 = vunpack.c.l.b16 %v5131
        %v5164 = vunpack.c.l.b16 %v5132
        %v5165 = vunpack.c.l.b16 %v5133
        %v5166 = vunpack.c.l.b16 %v5134
        %v5167 = vunpack.c.l.b16 %v5135
        %v5168 = vunpack.c.l.b16 %v5136
        %v5169 = vunpack.c.l.b16 %v5137
        %v5170 = vunpack.c.l.b16 %v5138
        %v5171 = vunpack.c.l.b16 %v5139
        %v5172 = vunpack.c.l.b16 %v5140
        %v5173 = vunpack.c.l.b16 %v5141
        %v5174 = vunpack.c.l.b16 %v5142
        %v5175 = vunpack.c.l.b16 %v5143
        %v5176 = vunpack.c.l.b16 %v5144
        %v5177 = vpack.c.b16 %v5162, %v5161
        %v5178 = vpack.c.b16 %v5164, %v5163
        %v5179 = vpack.c.b16 %v5166, %v5165
        %v5180 = vpack.c.b16 %v5168, %v5167
        %v5181 = vpack.c.b16 %v5170, %v5169
        %v5182 = vpack.c.b16 %v5172, %v5171
        %v5183 = vpack.c.b16 %v5174, %v5173
        %v5184 = vpack.c.b16 %v5176, %v5175
        %5193 = vmatprep.subr.bf16.mxu0 0
        %5194 = vmatpush1.bf16.msra.mxu0 %v5184
        %5195 = vmatprep.subr.bf16.mxu0 0
        %5196 = vmatpush1.bf16.msra.mxu0 %v5183
        %5197 = vmatprep.subr.bf16.mxu0 0
        %5198 = vmatpush1.bf16.msra.mxu0 %v5182
        %5199 = vmatprep.subr.bf16.mxu0 0
        %5200 = vmatpush1.bf16.msra.mxu0 %v5181
        %5201 = vmatprep.subr.bf16.mxu0 0
        %5202 = vmatpush1.bf16.msra.mxu0 %v5180
        %5203 = vmatprep.subr.bf16.mxu0 0
        %5204 = vmatpush1.bf16.msra.mxu0 %v5179
        %5205 = vmatprep.subr.bf16.mxu0 0
        %5206 = vmatpush1.bf16.msra.mxu0 %v5178
        %5207 = vmatprep.subr.bf16.mxu0 0
        %5208 = vmatpush1.bf16.msra.mxu0 %v5177
        %5209 = vmatprep.subr.bf16.mxu0 0
        %5210 = vmatpush2.bf16.msra.mxu0 0
        %5211 = vmatprep.subr.bf16.mxu0 0
        %5212 = vmatpush2.bf16.msra.mxu0 0
        %5213 = vmatprep.subr.bf16.mxu0 0
        %5214 = vmatpush2.bf16.msra.mxu0 0
        %5215 = vmatprep.subr.bf16.mxu0 0
        %5216 = vmatpush2.bf16.msra.mxu0 0
        %5217 = vmatprep.subr.bf16.mxu0 0
        %5218 = vmatpush2.bf16.msra.mxu0 0
        %5219 = vmatprep.subr.bf16.mxu0 0
        %5220 = vmatpush2.bf16.msra.mxu0 0
        %5221 = vmatprep.subr.bf16.mxu0 0
        %5222 = vmatpush2.bf16.msra.mxu0 0
        %5223 = vmatprep.subr.bf16.mxu0 0
        %5224 = vmatpush2.bf16.msra.mxu0 0
        %5225 = vmatprep.mubr.bf16.mxu0 0
        %5226 = vmatmul.mubr.bf16.gmra.mxu0 %v5121
        %v5227 = vpop.f32.mrf.mxu0
        %v5228 = vadd.f32 0.0, %v5227
        %v5229 = vpop.f32.mrf.mxu0
        %v5230 = vpop.f32.mrf.mxu0
        %v5231 = vadd.f32 0.0, %v5230
        %v5232 = vpop.f32.mrf.mxu0
        %5233 = vmatprep.mubr.bf16.mxu0 0
        %5234 = vmatmul.mubr.bf16.gmra.mxu0 %v5122
        %v5235 = vpop.f32.mrf.mxu0
        %v5236 = vadd.f32 0.0, %v5235
        %v5237 = vpop.f32.mrf.mxu0
        %v5238 = vpop.f32.mrf.mxu0
        %v5239 = vadd.f32 0.0, %v5238
        %v5240 = vpop.f32.mrf.mxu0
        %5241 = vmatprep.mubr.bf16.mxu0 0
        %5242 = vmatmul.mubr.bf16.gmra.mxu0 %v5123
        %v5243 = vpop.f32.mrf.mxu0
        %v5244 = vadd.f32 0.0, %v5243
        %v5245 = vpop.f32.mrf.mxu0
        %v5246 = vpop.f32.mrf.mxu0
        %v5247 = vadd.f32 0.0, %v5246
        %v5248 = vpop.f32.mrf.mxu0
        %5249 = vmatprep.mubr.bf16.mxu0 0
        %5250 = vmatmul.mubr.bf16.gmra.mxu0 %v5124
        %v5251 = vpop.f32.mrf.mxu0
        %v5252 = vadd.f32 0.0, %v5251
        %v5253 = vpop.f32.mrf.mxu0
        %v5254 = vpop.f32.mrf.mxu0
        %v5255 = vadd.f32 0.0, %v5254
        %v5256 = vpop.f32.mrf.mxu0
        %5257 = vmatprep.mubr.bf16.mxu0 0
        %5258 = vmatmul.mubr.bf16.gmra.mxu0 %v5125
        %v5259 = vpop.f32.mrf.mxu0
        %v5260 = vadd.f32 0.0, %v5259
        %v5261 = vpop.f32.mrf.mxu0
        %v5262 = vpop.f32.mrf.mxu0
        %v5263 = vadd.f32 0.0, %v5262
        %v5264 = vpop.f32.mrf.mxu0
        %5265 = vmatprep.mubr.bf16.mxu0 0
        %5266 = vmatmul.mubr.bf16.gmra.mxu0 %v5126
        %v5267 = vpop.f32.mrf.mxu0
        %v5268 = vadd.f32 0.0, %v5267
        %v5269 = vpop.f32.mrf.mxu0
        %v5270 = vpop.f32.mrf.mxu0
        %v5271 = vadd.f32 0.0, %v5270
        %v5272 = vpop.f32.mrf.mxu0
        %5273 = vmatprep.mubr.bf16.mxu0 0
        %5274 = vmatmul.mubr.bf16.gmra.mxu0 %v5127
        %v5275 = vpop.f32.mrf.mxu0
        %v5276 = vadd.f32 0.0, %v5275
        %v5277 = vpop.f32.mrf.mxu0
        %v5278 = vpop.f32.mrf.mxu0
        %v5279 = vadd.f32 0.0, %v5278
        %v5280 = vpop.f32.mrf.mxu0
        %5281 = vmatprep.mubr.bf16.mxu0 0
        %5282 = vmatmul.mubr.bf16.gmra.mxu0 %v5128
        %v5283 = vpop.f32.mrf.mxu0
        %v5284 = vadd.f32 0.0, %v5283
        %v5285 = vpop.f32.mrf.mxu0
        %v5286 = vpop.f32.mrf.mxu0
        %v5287 = vadd.f32 0.0, %v5286
        %v5288 = vpop.f32.mrf.mxu0
        %5289 = vdwg.mxu0
        %v5290 = vadd.f32 %v3347, %v5228
        %v5291 = vadd.f32 %v3350, %v5231
        %v5292 = vadd.f32 %v3355, %v5236
        %v5293 = vadd.f32 %v3358, %v5239
        %v5294 = vadd.f32 %v3363, %v5244
        %v5295 = vadd.f32 %v3366, %v5247
        %v5296 = vadd.f32 %v3371, %v5252
        %v5297 = vadd.f32 %v3374, %v5255
        %v5298 = vadd.f32 %v3379, %v5260
        %v5299 = vadd.f32 %v3382, %v5263
        %v5300 = vadd.f32 %v3387, %v5268
        %v5301 = vadd.f32 %v3390, %v5271
        %v5302 = vadd.f32 %v3395, %v5276
        %v5303 = vadd.f32 %v3398, %v5279
        %v5304 = vadd.f32 %v3403, %v5284
        %v5305 = vadd.f32 %v3406, %v5287
        %v5306 = vlaneseq
        %v5307 = vshrl.u32 %v5306, 7
        %v5308 = vsub.s32 3, %v5307
        %v5309 = vrot.slane %v598, %v5308
        %v5310 = vadd.f32 %v5290, %v5309
        %v5311 = vadd.f32 %v5291, %v5309
        %v5312 = vadd.f32 %v5292, %v5309
        %v5313 = vadd.f32 %v5293, %v5309
        %v5314 = vadd.f32 %v5294, %v5309
        %v5315 = vadd.f32 %v5295, %v5309
        %v5316 = vadd.f32 %v5296, %v5309
        %v5317 = vadd.f32 %v5297, %v5309
        %v5318 = vadd.f32 %v5298, %v5309
        %v5319 = vadd.f32 %v5299, %v5309
        %v5320 = vadd.f32 %v5300, %v5309
        %v5321 = vadd.f32 %v5301, %v5309
        %v5322 = vadd.f32 %v5302, %v5309
        %v5323 = vadd.f32 %v5303, %v5309
        %v5324 = vadd.f32 %v5304, %v5309
        %v5325 = vadd.f32 %v5305, %v5309
        %v5326 = vmax.f32 %v5310, 0.0
        %v5327 = vmax.f32 %v5311, 0.0
        %v5328 = vmax.f32 %v5312, 0.0
        %v5329 = vmax.f32 %v5313, 0.0
        %v5330 = vmax.f32 %v5314, 0.0
        %v5331 = vmax.f32 %v5315, 0.0
        %v5332 = vmax.f32 %v5316, 0.0
        %v5333 = vmax.f32 %v5317, 0.0
        %v5334 = vmax.f32 %v5318, 0.0
        %v5335 = vmax.f32 %v5319, 0.0
        %v5336 = vmax.f32 %v5320, 0.0
        %v5337 = vmax.f32 %v5321, 0.0
        %v5338 = vmax.f32 %v5322, 0.0
        %v5339 = vmax.f32 %v5323, 0.0
        %v5340 = vmax.f32 %v5324, 0.0
        %v5341 = vmax.f32 %v5325, 0.0
        %5342 = vst [vmem:[%s288] sm:$0xff] %v5326
        %5343 = vst [vmem:[%s288 + $0x8] sm:$0xff] %v5327
        %5344 = vst [vmem:[%s288 + $0x10] sm:$0xff] %v5328
        %5345 = vst [vmem:[%s288 + $0x18] sm:$0xff] %v5329
        %5346 = vst [vmem:[%s288 + $0x20] sm:$0xff] %v5330
        %5347 = vst [vmem:[%s288 + $0x28] sm:$0xff] %v5331
        %5348 = vst [vmem:[%s288 + $0x30] sm:$0xff] %v5332
        %5349 = vst [vmem:[%s288 + $0x38] sm:$0xff] %v5333
        %5350 = vst [vmem:[%s288 + $0x40] sm:$0xff] %v5334
        %5351 = vst [vmem:[%s288 + $0x48] sm:$0xff] %v5335
        %5352 = vst [vmem:[%s288 + $0x50] sm:$0xff] %v5336
        %5353 = vst [vmem:[%s288 + $0x58] sm:$0xff] %v5337
        %5354 = vst [vmem:[%s288 + $0x60] sm:$0xff] %v5338
        %5355 = vst [vmem:[%s288 + $0x68] sm:$0xff] %v5339
        %5356 = vst [vmem:[%s288 + $0x70] sm:$0xff] %v5340
        %5357 = vst [vmem:[%s288 + $0x78] sm:$0xff] %v5341
        %s5358 = sand.u32 %s175, 1
        %s5359 = scalar_lea.sflag [#allocation5], %s5358
        %s5360 = sand.u32 %s175, 1
        %s5361 = smul.addr %s5360, 128
        %s5362 = scalar_lea.vmem [#allocation8], %s5361
        // Predicated region
        $region53: #{aspp_forward.1} parent=43 // pred_check
          %p5363 = pneg %p185
        $region54: #{aspp_forward.1} parent=43 // pred_check_branch
          %5365 = sbr.rel (%p5363) target = $region56
        $region55: #{aspp_forward.1} parent=43 // pred_region
          %s5366 = smul.u32 8, %s27
          %s5368 = ssub.s32 2048, 2048
          %5369 = vsyncadd %s5359, %s5368
          %s5370 = smul.addr %s5366, 2
          %s5371 = smul.addr %s26, 32
          %s5372 = sadd.s32 %s5370, %s5371
          %s5373 = smul.addr %s5372, 128
          %s5374 = scalar_lea.hbm %s6, %s5373
          %s5375 = sshll.u32 %s5362, 4
          %s5376 = int_to_ptr.vmem [resolvable:$true] %s5375
          %5381 = dma.vmem_to_hbm [thread:$0]  %s5376, 2048, %s5374, %s5359, 128, 128, 8
        $region56: #{aspp_forward.1} parent=43 // pred_fallthru
          _
      $region44: #{aspp_forward.1} parent=5 // pred_fallthru
        _
      %p5382 = scmp.le.s32.totalorder 2, %s17
      // Predicated region
      $region57: #{aspp_forward.1} parent=5 // pred_check
        %p5383 = pneg %p5382
      $region58: #{aspp_forward.1} parent=5 // pred_check_branch
        %5385 = sbr.rel (%p5383) target = $region60
      $region59: #{aspp_forward.1} parent=5 // pred_region
        %s5386 = ssub.s32 %s17, 2
        // Predicated region
        $region61: #{aspp_forward.1} parent=59 // pred_check
          %p5387 = pneg %p191
        $region62: #{aspp_forward.1} parent=59 // pred_check_branch
          %5389 = sbr.rel (%p5387) target = $region64
        $region63: #{aspp_forward.1} parent=59 // pred_region
          %s5390 = sand.u32 %s176, 1
          %s5391 = scalar_lea.sflag [#allocation5], %s5390
          %s5392 = sand.u32 %s176, 1
          %s5393 = smul.addr %s5392, 128
          %s5394 = scalar_lea.vmem [#allocation8], %s5393
          %5395 = dma.done %s5391, 2048
        $region64: #{aspp_forward.1} parent=59 // pred_fallthru
          _
      $region60: #{aspp_forward.1} parent=5 // pred_fallthru
        _
    $region6: #{aspp_forward.1} parent=1 // loop_footer
      %s21 = sadd.s32 1, %s17
    $region7: #{aspp_forward.1} parent=1 // loop_footer_branch
      %16 = sbr.rel target = $region3
    $region8: #{aspp_forward.1} parent=1 // loop_exit
      _
    %5396 = vsyncpa [#allocation4], 1
    %s5397 = scalar_lea.sflag [#allocation4], 1
    %5398 = vsyncpa %s5397, 1
    %5399 = vsyncpa [#allocation7], 1
    %5400 = vsyncpa [#allocation5], 1
    %s5401 = scalar_lea.sflag [#allocation5], 1
    %5402 = vsyncpa %s5401, 1

</llo_original>
